<compile_context>
chip_gen: v5e
topology: v5e:2x2
jax: 0.10.0
libtpu: 0.0.40
codegen_flags: <defaults>
</compile_context>

<pallas_src>
import jax
import jax.numpy as jnp
from jax.experimental import pallas as pl
from jax.experimental.pallas import tpu as pltpu

KH, KW = 3, 3


def dwconv3x3_kernel(x_ref, w_ref, o_ref, xp_ref):
    # x_ref:  (H,  W,  C)   full (unpadded) input for this batch element
    # w_ref:  (9,  C)        per-channel taps, row k = (kh*3 + kw)
    # o_ref:  (hb, W,  C)   output rows [h*hb, h*hb + hb)
    # xp_ref: (hb+2, Wp, C) scratch: H-halo rows + zero W-pad columns
    hb, W, C = o_ref.shape
    Wp = xp_ref.shape[1]

    h = pl.program_id(1)
    GH = pl.num_programs(1)
    r0 = h * hb

    # ---- Build the locally padded tile in VMEM --------------------------
    # Zero-fill once (gives: top/bottom pad rows when at a global boundary,
    # and zero columns W..Wp-1 used by the roll-based W padding below).
    xp_ref[...] = jnp.zeros(xp_ref.shape, xp_ref.dtype)

    # Interior rows (offset-0 store along W -> no relayout).
    xp_ref[1:hb + 1, 0:W, :] = x_ref[pl.ds(r0, hb), :, :]

    # Halo rows from neighbouring output blocks (only when they exist).
    @pl.when(h > 0)
    def _():
        xp_ref[0, 0:W, :] = x_ref[r0 - 1, :, :]

    @pl.when(h < GH - 1)
    def _():
        xp_ref[hb + 1, 0:W, :] = x_ref[r0 + hb, :, :]

    # ---- 9 shifted multiply-accumulates (VPU) with XLU rolls for W shift --
    w_all = w_ref[...].astype(jnp.float32)  # (9, C)

    acc = None
    for kh in range(KH):
        # Leading-dim static slice of a ref: cheap addressing, no relayout.
        slab = xp_ref[kh:kh + hb, :, :].astype(jnp.float32)  # (hb, Wp, C)
        for kw in range(KW):
            if kw == 1:
                tap = slab
            elif kw == 0:
                # tap[w] = x_pad[w-1]; wrapped column Wp-1 is zero => left pad.
                tap = pltpu.roll(slab, 1, axis=1)
            else:
                # tap[w] = x_pad[w+1]; column W is zero => right pad.
                tap = pltpu.roll(slab, Wp - 1, axis=1)
            term = tap * w_all[kh * KW + kw]
            acc = term if acc is None else acc + term

    o_ref[...] = acc[:, :W, :].astype(o_ref.dtype)


def depthwise_conv3x3(x_nchw, w_oihw):
    """x_nchw: (N, C, H, W); w_oihw: (C, 1, 3, 3); stride 1, pad 1, no bias."""
    N, C, H, W = x_nchw.shape

    # Interface transposes only (module is NCHW); channels go onto lanes.
    x_nhwc = jnp.transpose(x_nchw, (0, 2, 3, 1))                  # (N, H, W, C)
    w_rows = jnp.transpose(w_oihw[:, 0, :, :].reshape(C, KH * KW), (1, 0))  # (9, C)

    # Split output rows across two grid steps so both v7x TensorCores work.
    GH = 2 if (H % 2 == 0 and H >= 2) else 1
    hb = H // GH
    # Scratch width: >= W + 2 and a multiple of 8 sublanes (zero pad columns
    # double as the left/right conv padding via the rolls above).
    Wp = ((W + 2 + 7) // 8) * 8

    out_nhwc = pl.pallas_call(
        dwconv3x3_kernel,
        out_shape=jax.ShapeDtypeStruct((N, H, W, C), x_nchw.dtype),
        grid_spec=pltpu.PrefetchScalarGridSpec(
            num_scalar_prefetch=0,
            grid=(N, GH),
            in_specs=[
                pl.BlockSpec((pl.Squeezed(), H, W, C),
                             lambda n, h: (n, 0, 0, 0)),
                pl.BlockSpec((KH * KW, C), lambda n, h: (0, 0)),
            ],
            out_specs=pl.BlockSpec((pl.Squeezed(), hb, W, C),
                                   lambda n, h: (n, h, 0, 0)),
            scratch_shapes=[pltpu.VMEM((hb + 2, Wp, C), x_nchw.dtype)],
        ),
        compiler_params=pltpu.CompilerParams(
            dimension_semantics=("parallel", "parallel")),
    )(x_nhwc, w_rows)

    return jnp.transpose(out_nhwc, (0, 3, 1, 2))                  # back to NCHW


if __name__ == "__main__":
    key = jax.random.PRNGKey(0)
    kx, kw = jax.random.split(key)

    N, C, H, W = 1, 960, 14, 14          # shapes implied by the module
    x = jax.random.normal(kx, (N, C, H, W), dtype=jnp.float32)
    # Synthetic weights for Conv2d(960, 960, 3, groups=960, bias=False)
    w = 0.1 * jax.random.normal(kw, (C, 1, KH, KW), dtype=jnp.float32)

    out = depthwise_conv3x3(x, w)
    out = jax.block_until_ready(out)

    # Reference (plain XLA) for correctness.
    ref = jax.lax.conv_general_dilated(
        x, w, window_strides=(1, 1), padding=((1, 1), (1, 1)),
        dimension_numbers=("NCHW", "OIHW", "NCHW"),
        feature_group_count=C)

    assert out.shape == (N, C, H, W)
    assert jnp.allclose(out, ref, atol=1e-4, rtol=1e-4)
    print("KERNEL_OK")
</pallas_src>

<mosaic_0001>
module attributes {stable_mosaic.version = 11 : i64} {
  func.func @dwconv3x3_kernel(%arg0: i32, %arg1: i32, %arg2: memref<1x14x14x960xf32, #tpu.memory_space<vmem>>, %arg3: memref<9x960xf32, #tpu.memory_space<vmem>>, %arg4: memref<1x7x14x960xf32, #tpu.memory_space<vmem>>, %arg5: memref<9x16x960xf32, #tpu.memory_space<vmem>>) attributes {dimension_semantics = [#tpu.dimension_semantics<parallel>, #tpu.dimension_semantics<parallel>], iteration_bounds = array<i64: 1, 2>, scalar_prefetch = 0 : i64, scratch_operands = 1 : i64, tpu.core_type = #tpu.core_type<tc>, window_params = [{transform_indices = @transform_0, window_bounds = array<i64: 1, 14, 14, 960>}, {pipeline_mode = #tpu.pipeline_mode<synchronous>, transform_indices = @transform_1, window_bounds = array<i64: 9, 960>}, {transform_indices = @transform_2, window_bounds = array<i64: 1, 7, 14, 960>}]} {
    %c7_i32 = arith.constant 7 : i32
    %0 = arith.muli %arg1, %c7_i32 : i32
    %cst = arith.constant 0.000000e+00 : f32
    %1 = vector.broadcast %cst : f32 to vector<9x16x960xf32>
    %c0 = arith.constant 0 : index
    %c0_0 = arith.constant 0 : index
    %c0_1 = arith.constant 0 : index
    %2 = vector.load %arg5[%c0, %c0_0, %c0_1] : memref<9x16x960xf32, #tpu.memory_space<vmem>>, vector<9x16x960xf32>
    tpu.vector_store %arg5[%c0, %c0_0, %c0_1], %1 {strides = array<i32>} : memref<9x16x960xf32, #tpu.memory_space<vmem>>, vector<9x16x960xf32>,
    %c0_2 = arith.constant 0 : index
    %3 = arith.index_cast %0 : i32 to index
    %c0_3 = arith.constant 0 : index
    %c0_4 = arith.constant 0 : index
    %4 = vector.load %arg2[%c0_2, %3, %c0_3, %c0_4] : memref<1x14x14x960xf32, #tpu.memory_space<vmem>>, vector<1x7x14x960xf32>
    %5 = vector.shape_cast %4 : vector<1x7x14x960xf32> to vector<7x14x960xf32>
    %c1 = arith.constant 1 : index
    %c0_5 = arith.constant 0 : index
    %c0_6 = arith.constant 0 : index
    %6 = vector.load %arg5[%c1, %c0_5, %c0_6] : memref<9x16x960xf32, #tpu.memory_space<vmem>>, vector<7x14x960xf32>
    tpu.vector_store %arg5[%c1, %c0_5, %c0_6], %5 {strides = array<i32>} : memref<9x16x960xf32, #tpu.memory_space<vmem>>, vector<7x14x960xf32>,
    %c0_i32 = arith.constant 0 : i32
    %7 = arith.cmpi sgt, %arg1, %c0_i32 : i32
    %8 = arith.extui %7 : i1 to i32
    %c0_i32_7 = arith.constant 0 : i32
    %9 = arith.cmpi ne, %8, %c0_i32_7 : i32
    scf.if %9 {
      %c1_i32_28 = arith.constant 1 : i32
      %80 = arith.subi %0, %c1_i32_28 : i32
      %c0_29 = arith.constant 0 : index
      %81 = arith.index_cast %80 : i32 to index
      %c0_30 = arith.constant 0 : index
      %c0_31 = arith.constant 0 : index
      %82 = vector.load %arg2[%c0_29, %81, %c0_30, %c0_31] : memref<1x14x14x960xf32, #tpu.memory_space<vmem>>, vector<1x1x14x960xf32>
      %83 = vector.shape_cast %82 : vector<1x1x14x960xf32> to vector<14x960xf32>
      %c0_32 = arith.constant 0 : index
      %c0_33 = arith.constant 0 : index
      %c0_34 = arith.constant 0 : index
      %84 = vector.load %arg5[%c0_32, %c0_33, %c0_34] : memref<9x16x960xf32, #tpu.memory_space<vmem>>, vector<1x14x960xf32>
      %85 = vector.shape_cast %84 : vector<1x14x960xf32> to vector<14x960xf32>
      %86 = vector.shape_cast %83 : vector<14x960xf32> to vector<1x14x960xf32>
      tpu.vector_store %arg5[%c0_32, %c0_33, %c0_34], %86 {strides = array<i32>} : memref<9x16x960xf32, #tpu.memory_space<vmem>>, vector<1x14x960xf32>,
    } else {
    }
    %c1_i32 = arith.constant 1 : i32
    %10 = arith.cmpi slt, %arg1, %c1_i32 : i32
    %11 = arith.extui %10 : i1 to i32
    %c0_i32_8 = arith.constant 0 : i32
    %12 = arith.cmpi ne, %11, %c0_i32_8 : i32
    scf.if %12 {
      %c7_i32_28 = arith.constant 7 : i32
      %80 = arith.addi %0, %c7_i32_28 : i32
      %c0_29 = arith.constant 0 : index
      %81 = arith.index_cast %80 : i32 to index
      %c0_30 = arith.constant 0 : index
      %c0_31 = arith.constant 0 : index
      %82 = vector.load %arg2[%c0_29, %81, %c0_30, %c0_31] : memref<1x14x14x960xf32, #tpu.memory_space<vmem>>, vector<1x1x14x960xf32>
      %83 = vector.shape_cast %82 : vector<1x1x14x960xf32> to vector<14x960xf32>
      %c8 = arith.constant 8 : index
      %c0_32 = arith.constant 0 : index
      %c0_33 = arith.constant 0 : index
      %84 = vector.load %arg5[%c8, %c0_32, %c0_33] : memref<9x16x960xf32, #tpu.memory_space<vmem>>, vector<1x14x960xf32>
      %85 = vector.shape_cast %84 : vector<1x14x960xf32> to vector<14x960xf32>
      %86 = vector.shape_cast %83 : vector<14x960xf32> to vector<1x14x960xf32>
      tpu.vector_store %arg5[%c8, %c0_32, %c0_33], %86 {strides = array<i32>} : memref<9x16x960xf32, #tpu.memory_space<vmem>>, vector<1x14x960xf32>,
    } else {
    }
    %c0_9 = arith.constant 0 : index
    %c0_10 = arith.constant 0 : index
    %13 = vector.load %arg3[%c0_9, %c0_10] : memref<9x960xf32, #tpu.memory_space<vmem>>, vector<9x960xf32>
    %c0_11 = arith.constant 0 : index
    %c0_12 = arith.constant 0 : index
    %c0_13 = arith.constant 0 : index
    %14 = vector.load %arg5[%c0_11, %c0_12, %c0_13] : memref<9x16x960xf32, #tpu.memory_space<vmem>>, vector<7x16x960xf32>
    %c1_i32_14 = arith.constant 1 : i32
    %15 = tpu.dynamic_rotate %14 by %c1_i32_14 dim 1 : vector<7x16x960xf32>, i32 -> vector<7x16x960xf32>
    %16 = vector.extract_strided_slice %13 {offsets = [0, 0], sizes = [1, 960], strides = [1, 1]} : vector<9x960xf32> to vector<1x960xf32>
    %17 = vector.shape_cast %16 : vector<1x960xf32> to vector<960xf32>
    %18 = vector.shape_cast %17 : vector<960xf32> to vector<1x1x960xf32>
    %19 = vector.broadcast %18 : vector<1x1x960xf32> to vector<7x16x960xf32>
    %20 = arith.mulf %15, %19 : vector<7x16x960xf32>
    %21 = vector.extract_strided_slice %13 {offsets = [1, 0], sizes = [1, 960], strides = [1, 1]} : vector<9x960xf32> to vector<1x960xf32>
    %22 = vector.shape_cast %21 : vector<1x960xf32> to vector<960xf32>
    %23 = vector.shape_cast %22 : vector<960xf32> to vector<1x1x960xf32>
    %24 = vector.broadcast %23 : vector<1x1x960xf32> to vector<7x16x960xf32>
    %25 = arith.mulf %14, %24 : vector<7x16x960xf32>
    %26 = arith.addf %20, %25 : vector<7x16x960xf32>
    %c15_i32 = arith.constant 15 : i32
    %27 = tpu.dynamic_rotate %14 by %c15_i32 dim 1 : vector<7x16x960xf32>, i32 -> vector<7x16x960xf32>
    %28 = vector.extract_strided_slice %13 {offsets = [2, 0], sizes = [1, 960], strides = [1, 1]} : vector<9x960xf32> to vector<1x960xf32>
    %29 = vector.shape_cast %28 : vector<1x960xf32> to vector<960xf32>
    %30 = vector.shape_cast %29 : vector<960xf32> to vector<1x1x960xf32>
    %31 = vector.broadcast %30 : vector<1x1x960xf32> to vector<7x16x960xf32>
    %32 = arith.mulf %27, %31 : vector<7x16x960xf32>
    %33 = arith.addf %26, %32 : vector<7x16x960xf32>
    %c1_15 = arith.constant 1 : index
    %c0_16 = arith.constant 0 : index
    %c0_17 = arith.constant 0 : index
    %34 = vector.load %arg5[%c1_15, %c0_16, %c0_17] : memref<9x16x960xf32, #tpu.memory_space<vmem>>, vector<7x16x960xf32>
    %c1_i32_18 = arith.constant 1 : i32
    %35 = tpu.dynamic_rotate %34 by %c1_i32_18 dim 1 : vector<7x16x960xf32>, i32 -> vector<7x16x960xf32>
    %36 = vector.extract_strided_slice %13 {offsets = [3, 0], sizes = [1, 960], strides = [1, 1]} : vector<9x960xf32> to vector<1x960xf32>
    %37 = vector.shape_cast %36 : vector<1x960xf32> to vector<960xf32>
    %38 = vector.shape_cast %37 : vector<960xf32> to vector<1x1x960xf32>
    %39 = vector.broadcast %38 : vector<1x1x960xf32> to vector<7x16x960xf32>
    %40 = arith.mulf %35, %39 : vector<7x16x960xf32>
    %41 = arith.addf %33, %40 : vector<7x16x960xf32>
    %42 = vector.extract_strided_slice %13 {offsets = [4, 0], sizes = [1, 960], strides = [1, 1]} : vector<9x960xf32> to vector<1x960xf32>
    %43 = vector.shape_cast %42 : vector<1x960xf32> to vector<960xf32>
    %44 = vector.shape_cast %43 : vector<960xf32> to vector<1x1x960xf32>
    %45 = vector.broadcast %44 : vector<1x1x960xf32> to vector<7x16x960xf32>
    %46 = arith.mulf %34, %45 : vector<7x16x960xf32>
    %47 = arith.addf %41, %46 : vector<7x16x960xf32>
    %c15_i32_19 = arith.constant 15 : i32
    %48 = tpu.dynamic_rotate %34 by %c15_i32_19 dim 1 : vector<7x16x960xf32>, i32 -> vector<7x16x960xf32>
    %49 = vector.extract_strided_slice %13 {offsets = [5, 0], sizes = [1, 960], strides = [1, 1]} : vector<9x960xf32> to vector<1x960xf32>
    %50 = vector.shape_cast %49 : vector<1x960xf32> to vector<960xf32>
    %51 = vector.shape_cast %50 : vector<960xf32> to vector<1x1x960xf32>
    %52 = vector.broadcast %51 : vector<1x1x960xf32> to vector<7x16x960xf32>
    %53 = arith.mulf %48, %52 : vector<7x16x960xf32>
    %54 = arith.addf %47, %53 : vector<7x16x960xf32>
    %c2 = arith.constant 2 : index
    %c0_20 = arith.constant 0 : index
    %c0_21 = arith.constant 0 : index
    %55 = vector.load %arg5[%c2, %c0_20, %c0_21] : memref<9x16x960xf32, #tpu.memory_space<vmem>>, vector<7x16x960xf32>
    %c1_i32_22 = arith.constant 1 : i32
    %56 = tpu.dynamic_rotate %55 by %c1_i32_22 dim 1 : vector<7x16x960xf32>, i32 -> vector<7x16x960xf32>
    %57 = vector.extract_strided_slice %13 {offsets = [6, 0], sizes = [1, 960], strides = [1, 1]} : vector<9x960xf32> to vector<1x960xf32>
    %58 = vector.shape_cast %57 : vector<1x960xf32> to vector<960xf32>
    %59 = vector.shape_cast %58 : vector<960xf32> to vector<1x1x960xf32>
    %60 = vector.broadcast %59 : vector<1x1x960xf32> to vector<7x16x960xf32>
    %61 = arith.mulf %56, %60 : vector<7x16x960xf32>
    %62 = arith.addf %54, %61 : vector<7x16x960xf32>
    %63 = vector.extract_strided_slice %13 {offsets = [7, 0], sizes = [1, 960], strides = [1, 1]} : vector<9x960xf32> to vector<1x960xf32>
    %64 = vector.shape_cast %63 : vector<1x960xf32> to vector<960xf32>
    %65 = vector.shape_cast %64 : vector<960xf32> to vector<1x1x960xf32>
    %66 = vector.broadcast %65 : vector<1x1x960xf32> to vector<7x16x960xf32>
    %67 = arith.mulf %55, %66 : vector<7x16x960xf32>
    %68 = arith.addf %62, %67 : vector<7x16x960xf32>
    %c15_i32_23 = arith.constant 15 : i32
    %69 = tpu.dynamic_rotate %55 by %c15_i32_23 dim 1 : vector<7x16x960xf32>, i32 -> vector<7x16x960xf32>
    %70 = vector.extract_strided_slice %13 {offsets = [8, 0], sizes = [1, 960], strides = [1, 1]} : vector<9x960xf32> to vector<1x960xf32>
    %71 = vector.shape_cast %70 : vector<1x960xf32> to vector<960xf32>
    %72 = vector.shape_cast %71 : vector<960xf32> to vector<1x1x960xf32>
    %73 = vector.broadcast %72 : vector<1x1x960xf32> to vector<7x16x960xf32>
    %74 = arith.mulf %69, %73 : vector<7x16x960xf32>
    %75 = arith.addf %68, %74 : vector<7x16x960xf32>
    %76 = vector.extract_strided_slice %75 {offsets = [0, 0, 0], sizes = [7, 14, 960], strides = [1, 1, 1]} : vector<7x16x960xf32> to vector<7x14x960xf32>
    %c0_24 = arith.constant 0 : index
    %c0_25 = arith.constant 0 : index
    %c0_26 = arith.constant 0 : index
    %c0_27 = arith.constant 0 : index
    %77 = vector.load %arg4[%c0_24, %c0_25, %c0_26, %c0_27] : memref<1x7x14x960xf32, #tpu.memory_space<vmem>>, vector<1x7x14x960xf32>
    %78 = vector.shape_cast %77 : vector<1x7x14x960xf32> to vector<7x14x960xf32>
    %79 = vector.shape_cast %76 : vector<7x14x960xf32> to vector<1x7x14x960xf32>
    tpu.vector_store %arg4[%c0_24, %c0_25, %c0_26, %c0_27], %79 {strides = array<i32>} : memref<1x7x14x960xf32, #tpu.memory_space<vmem>>, vector<1x7x14x960xf32>,
    return
  }
  func.func @transform_0(%arg0: i32, %arg1: i32) -> (i32, i32, i32, i32) {
    %c0_i32 = arith.constant 0 : i32
    %c0_i32_0 = arith.constant 0 : i32
    %c0_i32_1 = arith.constant 0 : i32
    %c0_i32_2 = arith.constant 0 : i32
    return %arg0, %c0_i32, %c0_i32_0, %c0_i32_1 : i32, i32, i32, i32
  }
  func.func @transform_1(%arg0: i32, %arg1: i32) -> (i32, i32) {
    %c0_i32 = arith.constant 0 : i32
    %c0_i32_0 = arith.constant 0 : i32
    %c0_i32_1 = arith.constant 0 : i32
    return %c0_i32, %c0_i32_0 : i32, i32
  }
  func.func @transform_2(%arg0: i32, %arg1: i32) -> (i32, i32, i32, i32) {
    %c0_i32 = arith.constant 0 : i32
    %c0_i32_0 = arith.constant 0 : i32
    %c0_i32_1 = arith.constant 0 : i32
    return %arg0, %arg1, %c0_i32, %c0_i32_0 : i32, i32, i32, i32
  }
}

</mosaic_0001>

<llo_original>
// kernel: tpu_custom_call.1
$region0: #{tpu_custom_call.1}
  #allocation0 [shape = 'u32[]', space=smem, size = 0x4, offset = 0x4, fixed_abs, tag = 'smem constant byte address 0x4 - core index']
  #allocation1 [shape = 'u32[72,128]{1,0:T(1,128)}', space=vmem, size = 0x9000, scoped, tag = 'internal scratch']
  #allocation2 [shape = 'f32[9,16,960]{2,1,0:T(8,128)}', space=vmem, size = 0x90000, scoped, tag = 'scratch operand']
  %s0 = inlined_call_operand.vmem [shape: f32[1,14,14,960], index: 0, kind: input, shape index: {}]
  %s1 = inlined_call_operand.vmem [shape: f32[9,960], index: 1, kind: input, shape index: {}]
  %s2 = inlined_call_operand.vmem [shape: f32[1,14,14,960], index: 2, kind: output, shape index: {}]
  %s3 = sld [smem:[#allocation0]]
  $region49: #{tpu_custom_call.1} parent=0
    _
  %s5 = ssub.s32 1, %s3
  %s6 = scalar_select 0, %s5, %s3
  loop: start=0, step=1, limit=4
  $region2: #{tpu_custom_call.1} parent=0 // loop_pre_header
    _
  $region3: #{tpu_custom_call.1} parent=0 // loop_header
    %s8 = sphi 0, %s12
    %p9 = scmp.ge.s32.totalorder %s8, 4
    %s15 = sphi 0, %s27
    %s16 = sphi 0, %s23
    %s17 = sphi 0, %s15
    %s18 = sphi 0, %s16
    %s19 = sphi 0, %s17
    %s20 = sphi 0, %s18
    %s30 = sphi 0, %s32
    %s33 = sphi 0, %s30
    %s34 = sphi 0, %s33
    %s50 = sphi 0, %s34
    %s54 = sphi 0, %s54
    %s56 = sphi 0, %s54
    %s57 = sphi 0, %s56
    %s71 = sphi 0, %s57
    %s79 = sphi 0, %s81
    %s82 = sphi 0, %s79
    %s83 = sphi 0, %s82
    %s99 = sphi 0, %s83
  $region4: #{tpu_custom_call.1} parent=0 // loop_header_branch
    %11 = sbr.rel (%p9) target = $region8
  $region5: #{tpu_custom_call.1} parent=0 // loop_body
    %s13 = ssub.s32 %s8, 1
    %s14 = ssub.s32 %s8, 2
    %s21 = sadd.s32 1, %s16
    %p22 = scmp.ge.s32.totalorder %s21, 2
    %s23 = scalar_select %p22, 0, %s21
    %s24 = sadd.s32 1, %s15
    %s25 = scalar_select %p22, %s24, %s15
    %p26 = scmp.ge.s32.totalorder %s25, 1
    %s27 = scalar_select %p26, 0, %s25
    %s28 = ssub.s32 %s15, %s27
    %p29 = scmp.eq.s32.totalorder %s28, 0
    %s31 = sadd.s32 %s30, 1
    %s32 = scalar_select %p29, %s30, %s31
    %p35 = pneg %p29
    %p36 = scmp.eq.s32.totalorder %s8, 1
    %p37 = por %p35, %p36
    %p38 = scmp.ne.s32.totalorder %s30, %s33
    %p39 = scmp.eq.s32.totalorder %s8, 0
    %p40 = por %p38, %p39
    %p41 = scmp.ne.s32.totalorder %s30, %s33
    %p42 = scmp.eq.s32.totalorder %s13, 1
    %p43 = por %p41, %p42
    %p44 = scmp.ne.s32.totalorder %s33, %s34
    %p45 = scmp.eq.s32.totalorder %s13, 0
    %p46 = por %p44, %p45
    %p47 = scmp.ne.s32.totalorder %s33, %s34
    %p48 = scmp.eq.s32.totalorder %s14, 1
    %p49 = por %p47, %p48
    %p51 = scmp.ne.s32.totalorder %s34, %s50
    %p52 = scmp.eq.s32.totalorder %s14, 0
    %p53 = por %p51, %p52
    %s55 = sadd.s32 %s54, 1
    %p58 = scmp.eq.s32.totalorder %s8, 1
    %p59 = scmp.ne.s32.totalorder %s54, %s56
    %p60 = scmp.eq.s32.totalorder %s8, 0
    %p61 = por %p59, %p60
    %p62 = scmp.ne.s32.totalorder %s54, %s56
    %p63 = scmp.eq.s32.totalorder %s13, 1
    %p64 = por %p62, %p63
    %p65 = scmp.ne.s32.totalorder %s56, %s57
    %p66 = scmp.eq.s32.totalorder %s13, 0
    %p67 = por %p65, %p66
    %p68 = scmp.ne.s32.totalorder %s56, %s57
    %p69 = scmp.eq.s32.totalorder %s14, 1
    %p70 = por %p68, %p69
    %p72 = scmp.ne.s32.totalorder %s57, %s71
    %p73 = scmp.eq.s32.totalorder %s14, 0
    %p74 = por %p72, %p73
    %s75 = ssub.s32 %s15, %s27
    %s76 = ssub.s32 %s16, %s23
    %s77 = sor.u32 %s75, %s76
    %p78 = scmp.eq.s32.totalorder %s77, 0
    %s80 = sadd.s32 %s79, 1
    %s81 = scalar_select %p78, %s79, %s80
    %p84 = pneg %p78
    %p85 = scmp.eq.s32.totalorder %s8, 1
    %p86 = por %p84, %p85
    %p87 = scmp.ne.s32.totalorder %s79, %s82
    %p88 = scmp.eq.s32.totalorder %s8, 0
    %p89 = por %p87, %p88
    %p90 = scmp.ne.s32.totalorder %s79, %s82
    %p91 = scmp.eq.s32.totalorder %s13, 1
    %p92 = por %p90, %p91
    %p93 = scmp.ne.s32.totalorder %s82, %s83
    %p94 = scmp.eq.s32.totalorder %s13, 0
    %p95 = por %p93, %p94
    %p96 = scmp.ne.s32.totalorder %s82, %s83
    %p97 = scmp.eq.s32.totalorder %s14, 1
    %p98 = por %p96, %p97
    %p100 = scmp.ne.s32.totalorder %s83, %s99
    %p101 = scmp.eq.s32.totalorder %s14, 0
    %p102 = por %p100, %p101
    %p103 = scmp.le.s32.totalorder 1, %s8
    %p104 = scmp.lt.s32.totalorder %s8, 3
    %p105 = pnand %p103, %p104
    %p106 = pneg %p105
    // Predicated region
    $region9: #{tpu_custom_call.1} parent=5 // pred_check
      _
    $region10: #{tpu_custom_call.1} parent=5 // pred_check_branch
      %108 = sbr.rel (%p105) target = $region12
    $region11: #{tpu_custom_call.1} parent=5 // pred_region
      %s109 = ssub.s32 %s8, 1
      // Predicated region
      $region13: #{tpu_custom_call.1} parent=11 // pred_check
        %p110 = pneg %p46
      $region14: #{tpu_custom_call.1} parent=11 // pred_check_branch
        %112 = sbr.rel (%p110) target = $region16
      $region15: #{tpu_custom_call.1} parent=11 // pred_region
        %p113 = scmp.lt.s32.totalorder %s17, 0
        %s114 = scalar_select %p113, %s17, 0
        %s115 = smul.addr %s114, 224
        %s116 = smul.addr %s115, 8
        %s117 = scalar_lea.vmem %s0, %s116
      $region16: #{tpu_custom_call.1} parent=11 // pred_fallthru
        _
      // Predicated region
      $region17: #{tpu_custom_call.1} parent=11 // pred_check
        %p118 = pneg %p67
      $region18: #{tpu_custom_call.1} parent=11 // pred_check_branch
        %120 = sbr.rel (%p118) target = $region20
      $region19: #{tpu_custom_call.1} parent=11 // pred_region
        _
      $region20: #{tpu_custom_call.1} parent=11 // pred_fallthru
        _
    $region12: #{tpu_custom_call.1} parent=5 // pred_fallthru
      _
    %p121 = scmp.lt.s32.totalorder %s8, 2
    // Predicated region
    $region21: #{tpu_custom_call.1} parent=5 // pred_check
      %p122 = pneg %p121
    $region22: #{tpu_custom_call.1} parent=5 // pred_check_branch
      %124 = sbr.rel (%p122) target = $region24
    $region23: #{tpu_custom_call.1} parent=5 // pred_region
      _
    $region24: #{tpu_custom_call.1} parent=5 // pred_fallthru
      _
    %p125 = scmp.le.s32.totalorder 1, %s8
    %p126 = scmp.lt.s32.totalorder %s8, 3
    %p127 = pnand %p125, %p126
    %p128 = pneg %p127
    // Predicated region
    $region25: #{tpu_custom_call.1} parent=5 // pred_check
      _
    $region26: #{tpu_custom_call.1} parent=5 // pred_check_branch
      %130 = sbr.rel (%p127) target = $region28
    $region27: #{tpu_custom_call.1} parent=5 // pred_region
      %s131 = ssub.s32 %s8, 1
      %p132 = scmp.lt.s32.totalorder %s17, 0
      %s133 = scalar_select %p132, %s17, 0
      %s134 = smul.addr %s133, 224
      %s135 = smul.addr %s134, 8
      %s136 = scalar_lea.vmem %s0, %s135
      %p137 = pneg %p46
      %p138 = pneg %p43
      %p139 = pneg %p67
      %p140 = pneg %p64
      %p141 = pneg %p95
      %p142 = pneg %p92
      %s143 = smul.u32 7, %s18
      %p144 = scmp.lt.s32.totalorder %s17, 0
      %s145 = scalar_select %p144, %s17, 0
      %p146 = scmp.lt.s32.totalorder %s143, 13
      %s147 = scalar_select %p146, %s143, 13
      %s148 = smul.addr %s147, 16
      %s149 = smul.addr %s145, 224
      %s150 = sadd.s32 %s148, %s149
      %s151 = smul.addr %s150, 8
      %s152 = scalar_lea.vmem %s2, %s151
      %p153 = scmp.lt.s32.totalorder %s17, 0
      %s154 = scalar_select %p153, %s17, 0
      %s155 = smul.addr %s154, 224
      %s156 = smul.addr %s155, 8
      %s157 = scalar_lea.vmem %s0, %s156
      %s158 = smul.u32 7, %s18
      %p159 = scmp.lt.s32.totalorder %s17, 0
      %s160 = scalar_select %p159, %s17, 0
      %p161 = scmp.lt.s32.totalorder %s158, 13
      %s162 = scalar_select %p161, %s158, 13
      %s163 = smul.addr %s162, 16
      %s164 = smul.addr %s160, 224
      %s165 = sadd.s32 %s163, %s164
      %s166 = smul.addr %s165, 8
      %s167 = scalar_lea.vmem %s2, %s166
      %s168 = smul.u32 7, %s18
      %s169 = smul.u32 %s18, 7
      %170 = vst [vmem:[#allocation2] sm:$0xff] 0.0
      %171 = vst [vmem:[#allocation2 + $0x8] sm:$0xff] 0.0
      %172 = vst [vmem:[#allocation2 + $0x10] sm:$0xff] 0.0
      %173 = vst [vmem:[#allocation2 + $0x18] sm:$0xff] 0.0
      %174 = vst [vmem:[#allocation2 + $0x20] sm:$0xff] 0.0
      %175 = vst [vmem:[#allocation2 + $0x28] sm:$0xff] 0.0
      %176 = vst [vmem:[#allocation2 + $0x30] sm:$0xff] 0.0
      %vm177 = vcmask 523264
      %178 = vst.msk [vmem:[#allocation2 + $0x38] sm:$0xff] %vm177, 0.0
      %179 = vst [vmem:[#allocation2 + $0x40] sm:$0xff] 0.0
      %180 = vst [vmem:[#allocation2 + $0x48] sm:$0xff] 0.0
      %181 = vst [vmem:[#allocation2 + $0x50] sm:$0xff] 0.0
      %182 = vst [vmem:[#allocation2 + $0x58] sm:$0xff] 0.0
      %183 = vst [vmem:[#allocation2 + $0x60] sm:$0xff] 0.0
      %184 = vst [vmem:[#allocation2 + $0x68] sm:$0xff] 0.0
      %185 = vst [vmem:[#allocation2 + $0x70] sm:$0xff] 0.0
      %186 = vst.msk [vmem:[#allocation2 + $0x78] sm:$0xff] %vm177, 0.0
      %187 = vst [vmem:[#allocation2 + $0x80] sm:$0xff] 0.0
      %188 = vst [vmem:[#allocation2 + $0x88] sm:$0xff] 0.0
      %189 = vst [vmem:[#allocation2 + $0x90] sm:$0xff] 0.0
      %190 = vst [vmem:[#allocation2 + $0x98] sm:$0xff] 0.0
      %191 = vst [vmem:[#allocation2 + $0xa0] sm:$0xff] 0.0
      %192 = vst [vmem:[#allocation2 + $0xa8] sm:$0xff] 0.0
      %193 = vst [vmem:[#allocation2 + $0xb0] sm:$0xff] 0.0
      %194 = vst.msk [vmem:[#allocation2 + $0xb8] sm:$0xff] %vm177, 0.0
      %195 = vst [vmem:[#allocation2 + $0xc0] sm:$0xff] 0.0
      %196 = vst [vmem:[#allocation2 + $0xc8] sm:$0xff] 0.0
      %197 = vst [vmem:[#allocation2 + $0xd0] sm:$0xff] 0.0
      %198 = vst [vmem:[#allocation2 + $0xd8] sm:$0xff] 0.0
      %199 = vst [vmem:[#allocation2 + $0xe0] sm:$0xff] 0.0
      %200 = vst [vmem:[#allocation2 + $0xe8] sm:$0xff] 0.0
      %201 = vst [vmem:[#allocation2 + $0xf0] sm:$0xff] 0.0
      %202 = vst.msk [vmem:[#allocation2 + $0xf8] sm:$0xff] %vm177, 0.0
      %203 = vst [vmem:[#allocation2 + $0x100] sm:$0xff] 0.0
      %204 = vst [vmem:[#allocation2 + $0x108] sm:$0xff] 0.0
      %205 = vst [vmem:[#allocation2 + $0x110] sm:$0xff] 0.0
      %206 = vst [vmem:[#allocation2 + $0x118] sm:$0xff] 0.0
      %207 = vst [vmem:[#allocation2 + $0x120] sm:$0xff] 0.0
      %208 = vst [vmem:[#allocation2 + $0x128] sm:$0xff] 0.0
      %209 = vst [vmem:[#allocation2 + $0x130] sm:$0xff] 0.0
      %210 = vst.msk [vmem:[#allocation2 + $0x138] sm:$0xff] %vm177, 0.0
      %211 = vst [vmem:[#allocation2 + $0x140] sm:$0xff] 0.0
      %212 = vst [vmem:[#allocation2 + $0x148] sm:$0xff] 0.0
      %213 = vst [vmem:[#allocation2 + $0x150] sm:$0xff] 0.0
      %214 = vst [vmem:[#allocation2 + $0x158] sm:$0xff] 0.0
      %215 = vst [vmem:[#allocation2 + $0x160] sm:$0xff] 0.0
      %216 = vst [vmem:[#allocation2 + $0x168] sm:$0xff] 0.0
      %217 = vst [vmem:[#allocation2 + $0x170] sm:$0xff] 0.0
      %218 = vst.msk [vmem:[#allocation2 + $0x178] sm:$0xff] %vm177, 0.0
      %219 = vst [vmem:[#allocation2 + $0x180] sm:$0xff] 0.0
      %220 = vst [vmem:[#allocation2 + $0x188] sm:$0xff] 0.0
      %221 = vst [vmem:[#allocation2 + $0x190] sm:$0xff] 0.0
      %222 = vst [vmem:[#allocation2 + $0x198] sm:$0xff] 0.0
      %223 = vst [vmem:[#allocation2 + $0x1a0] sm:$0xff] 0.0
      %224 = vst [vmem:[#allocation2 + $0x1a8] sm:$0xff] 0.0
      %225 = vst [vmem:[#allocation2 + $0x1b0] sm:$0xff] 0.0
      %226 = vst.msk [vmem:[#allocation2 + $0x1b8] sm:$0xff] %vm177, 0.0
      %227 = vst [vmem:[#allocation2 + $0x1c0] sm:$0xff] 0.0
      %228 = vst [vmem:[#allocation2 + $0x1c8] sm:$0xff] 0.0
      %229 = vst [vmem:[#allocation2 + $0x1d0] sm:$0xff] 0.0
      %230 = vst [vmem:[#allocation2 + $0x1d8] sm:$0xff] 0.0
      %231 = vst [vmem:[#allocation2 + $0x1e0] sm:$0xff] 0.0
      %232 = vst [vmem:[#allocation2 + $0x1e8] sm:$0xff] 0.0
      %233 = vst [vmem:[#allocation2 + $0x1f0] sm:$0xff] 0.0
      %234 = vst.msk [vmem:[#allocation2 + $0x1f8] sm:$0xff] %vm177, 0.0
      %235 = vst [vmem:[#allocation2 + $0x200] sm:$0xff] 0.0
      %236 = vst [vmem:[#allocation2 + $0x208] sm:$0xff] 0.0
      %237 = vst [vmem:[#allocation2 + $0x210] sm:$0xff] 0.0
      %238 = vst [vmem:[#allocation2 + $0x218] sm:$0xff] 0.0
      %239 = vst [vmem:[#allocation2 + $0x220] sm:$0xff] 0.0
      %240 = vst [vmem:[#allocation2 + $0x228] sm:$0xff] 0.0
      %241 = vst [vmem:[#allocation2 + $0x230] sm:$0xff] 0.0
      %242 = vst.msk [vmem:[#allocation2 + $0x238] sm:$0xff] %vm177, 0.0
      %243 = vst [vmem:[#allocation2 + $0x240] sm:$0xff] 0.0
      %244 = vst [vmem:[#allocation2 + $0x248] sm:$0xff] 0.0
      %245 = vst [vmem:[#allocation2 + $0x250] sm:$0xff] 0.0
      %246 = vst [vmem:[#allocation2 + $0x258] sm:$0xff] 0.0
      %247 = vst [vmem:[#allocation2 + $0x260] sm:$0xff] 0.0
      %248 = vst [vmem:[#allocation2 + $0x268] sm:$0xff] 0.0
      %249 = vst [vmem:[#allocation2 + $0x270] sm:$0xff] 0.0
      %250 = vst.msk [vmem:[#allocation2 + $0x278] sm:$0xff] %vm177, 0.0
      %251 = vst [vmem:[#allocation2 + $0x280] sm:$0xff] 0.0
      %252 = vst [vmem:[#allocation2 + $0x288] sm:$0xff] 0.0
      %253 = vst [vmem:[#allocation2 + $0x290] sm:$0xff] 0.0
      %254 = vst [vmem:[#allocation2 + $0x298] sm:$0xff] 0.0
      %255 = vst [vmem:[#allocation2 + $0x2a0] sm:$0xff] 0.0
      %256 = vst [vmem:[#allocation2 + $0x2a8] sm:$0xff] 0.0
      %257 = vst [vmem:[#allocation2 + $0x2b0] sm:$0xff] 0.0
      %258 = vst.msk [vmem:[#allocation2 + $0x2b8] sm:$0xff] %vm177, 0.0
      %259 = vst [vmem:[#allocation2 + $0x2c0] sm:$0xff] 0.0
      %260 = vst [vmem:[#allocation2 + $0x2c8] sm:$0xff] 0.0
      %261 = vst [vmem:[#allocation2 + $0x2d0] sm:$0xff] 0.0
      %262 = vst [vmem:[#allocation2 + $0x2d8] sm:$0xff] 0.0
      %263 = vst [vmem:[#allocation2 + $0x2e0] sm:$0xff] 0.0
      %264 = vst [vmem:[#allocation2 + $0x2e8] sm:$0xff] 0.0
      %265 = vst [vmem:[#allocation2 + $0x2f0] sm:$0xff] 0.0
      %266 = vst.msk [vmem:[#allocation2 + $0x2f8] sm:$0xff] %vm177, 0.0
      %267 = vst [vmem:[#allocation2 + $0x300] sm:$0xff] 0.0
      %268 = vst [vmem:[#allocation2 + $0x308] sm:$0xff] 0.0
      %269 = vst [vmem:[#allocation2 + $0x310] sm:$0xff] 0.0
      %270 = vst [vmem:[#allocation2 + $0x318] sm:$0xff] 0.0
      %271 = vst [vmem:[#allocation2 + $0x320] sm:$0xff] 0.0
      %272 = vst [vmem:[#allocation2 + $0x328] sm:$0xff] 0.0
      %273 = vst [vmem:[#allocation2 + $0x330] sm:$0xff] 0.0
      %274 = vst.msk [vmem:[#allocation2 + $0x338] sm:$0xff] %vm177, 0.0
      %275 = vst [vmem:[#allocation2 + $0x340] sm:$0xff] 0.0
      %276 = vst [vmem:[#allocation2 + $0x348] sm:$0xff] 0.0
      %277 = vst [vmem:[#allocation2 + $0x350] sm:$0xff] 0.0
      %278 = vst [vmem:[#allocation2 + $0x358] sm:$0xff] 0.0
      %279 = vst [vmem:[#allocation2 + $0x360] sm:$0xff] 0.0
      %280 = vst [vmem:[#allocation2 + $0x368] sm:$0xff] 0.0
      %281 = vst [vmem:[#allocation2 + $0x370] sm:$0xff] 0.0
      %282 = vst.msk [vmem:[#allocation2 + $0x378] sm:$0xff] %vm177, 0.0
      %283 = vst [vmem:[#allocation2 + $0x380] sm:$0xff] 0.0
      %284 = vst [vmem:[#allocation2 + $0x388] sm:$0xff] 0.0
      %285 = vst [vmem:[#allocation2 + $0x390] sm:$0xff] 0.0
      %286 = vst [vmem:[#allocation2 + $0x398] sm:$0xff] 0.0
      %287 = vst [vmem:[#allocation2 + $0x3a0] sm:$0xff] 0.0
      %288 = vst [vmem:[#allocation2 + $0x3a8] sm:$0xff] 0.0
      %289 = vst [vmem:[#allocation2 + $0x3b0] sm:$0xff] 0.0
      %290 = vst.msk [vmem:[#allocation2 + $0x3b8] sm:$0xff] %vm177, 0.0
      %291 = vst [vmem:[#allocation2 + $0x3c0] sm:$0xff] 0.0
      %292 = vst [vmem:[#allocation2 + $0x3c8] sm:$0xff] 0.0
      %293 = vst [vmem:[#allocation2 + $0x3d0] sm:$0xff] 0.0
      %294 = vst [vmem:[#allocation2 + $0x3d8] sm:$0xff] 0.0
      %295 = vst [vmem:[#allocation2 + $0x3e0] sm:$0xff] 0.0
      %296 = vst [vmem:[#allocation2 + $0x3e8] sm:$0xff] 0.0
      %297 = vst [vmem:[#allocation2 + $0x3f0] sm:$0xff] 0.0
      %298 = vst.msk [vmem:[#allocation2 + $0x3f8] sm:$0xff] %vm177, 0.0
      %299 = vst [vmem:[#allocation2 + $0x400] sm:$0xff] 0.0
      %300 = vst [vmem:[#allocation2 + $0x408] sm:$0xff] 0.0
      %301 = vst [vmem:[#allocation2 + $0x410] sm:$0xff] 0.0
      %302 = vst [vmem:[#allocation2 + $0x418] sm:$0xff] 0.0
      %303 = vst [vmem:[#allocation2 + $0x420] sm:$0xff] 0.0
      %304 = vst [vmem:[#allocation2 + $0x428] sm:$0xff] 0.0
      %305 = vst [vmem:[#allocation2 + $0x430] sm:$0xff] 0.0
      %306 = vst.msk [vmem:[#allocation2 + $0x438] sm:$0xff] %vm177, 0.0
      %307 = vst [vmem:[#allocation2 + $0x440] sm:$0xff] 0.0
      %308 = vst [vmem:[#allocation2 + $0x448] sm:$0xff] 0.0
      %309 = vst [vmem:[#allocation2 + $0x450] sm:$0xff] 0.0
      %310 = vst [vmem:[#allocation2 + $0x458] sm:$0xff] 0.0
      %311 = vst [vmem:[#allocation2 + $0x460] sm:$0xff] 0.0
      %312 = vst [vmem:[#allocation2 + $0x468] sm:$0xff] 0.0
      %313 = vst [vmem:[#allocation2 + $0x470] sm:$0xff] 0.0
      %314 = vst.msk [vmem:[#allocation2 + $0x478] sm:$0xff] %vm177, 0.0
      %s315 = smul.u32 %s169, 16
      %s316 = smul.addr %s315, 8
      %s317 = scalar_lea.vmem %s157, %s316
      %v318 = vld [vmem:[%s317] sm:$0xff]
      %v319 = vld [vmem:[%s317 + $0x8] sm:$0xff]
      %v320 = vld [vmem:[%s317 + $0x10] sm:$0xff]
      %v321 = vld [vmem:[%s317 + $0x18] sm:$0xff]
      %v322 = vld [vmem:[%s317 + $0x20] sm:$0xff]
      %v323 = vld [vmem:[%s317 + $0x28] sm:$0xff]
      %v324 = vld [vmem:[%s317 + $0x30] sm:$0xff]
      %v325 = vld [vmem:[%s317 + $0x38] sm:$0xff]
      %v326 = vld [vmem:[%s317 + $0x40] sm:$0x3f]
      %v327 = vld [vmem:[%s317 + $0x48] sm:$0x3f]
      %v328 = vld [vmem:[%s317 + $0x50] sm:$0x3f]
      %v329 = vld [vmem:[%s317 + $0x58] sm:$0x3f]
      %v330 = vld [vmem:[%s317 + $0x60] sm:$0x3f]
      %v331 = vld [vmem:[%s317 + $0x68] sm:$0x3f]
      %v332 = vld [vmem:[%s317 + $0x70] sm:$0x3f]
      %v333 = vld [vmem:[%s317 + $0x78] sm:$0x3f]
      %v334 = vld [vmem:[%s317 + $0x80] sm:$0xff]
      %v335 = vld [vmem:[%s317 + $0x88] sm:$0xff]
      %v336 = vld [vmem:[%s317 + $0x90] sm:$0xff]
      %v337 = vld [vmem:[%s317 + $0x98] sm:$0xff]
      %v338 = vld [vmem:[%s317 + $0xa0] sm:$0xff]
      %v339 = vld [vmem:[%s317 + $0xa8] sm:$0xff]
      %v340 = vld [vmem:[%s317 + $0xb0] sm:$0xff]
      %v341 = vld [vmem:[%s317 + $0xb8] sm:$0xff]
      %v342 = vld [vmem:[%s317 + $0xc0] sm:$0x3f]
      %v343 = vld [vmem:[%s317 + $0xc8] sm:$0x3f]
      %v344 = vld [vmem:[%s317 + $0xd0] sm:$0x3f]
      %v345 = vld [vmem:[%s317 + $0xd8] sm:$0x3f]
      %v346 = vld [vmem:[%s317 + $0xe0] sm:$0x3f]
      %v347 = vld [vmem:[%s317 + $0xe8] sm:$0x3f]
      %v348 = vld [vmem:[%s317 + $0xf0] sm:$0x3f]
      %v349 = vld [vmem:[%s317 + $0xf8] sm:$0x3f]
      %v350 = vld [vmem:[%s317 + $0x100] sm:$0xff]
      %v351 = vld [vmem:[%s317 + $0x108] sm:$0xff]
      %v352 = vld [vmem:[%s317 + $0x110] sm:$0xff]
      %v353 = vld [vmem:[%s317 + $0x118] sm:$0xff]
      %v354 = vld [vmem:[%s317 + $0x120] sm:$0xff]
      %v355 = vld [vmem:[%s317 + $0x128] sm:$0xff]
      %v356 = vld [vmem:[%s317 + $0x130] sm:$0xff]
      %v357 = vld [vmem:[%s317 + $0x138] sm:$0xff]
      %v358 = vld [vmem:[%s317 + $0x140] sm:$0x3f]
      %v359 = vld [vmem:[%s317 + $0x148] sm:$0x3f]
      %v360 = vld [vmem:[%s317 + $0x150] sm:$0x3f]
      %v361 = vld [vmem:[%s317 + $0x158] sm:$0x3f]
      %v362 = vld [vmem:[%s317 + $0x160] sm:$0x3f]
      %v363 = vld [vmem:[%s317 + $0x168] sm:$0x3f]
      %v364 = vld [vmem:[%s317 + $0x170] sm:$0x3f]
      %v365 = vld [vmem:[%s317 + $0x178] sm:$0x3f]
      %v366 = vld [vmem:[%s317 + $0x180] sm:$0xff]
      %v367 = vld [vmem:[%s317 + $0x188] sm:$0xff]
      %v368 = vld [vmem:[%s317 + $0x190] sm:$0xff]
      %v369 = vld [vmem:[%s317 + $0x198] sm:$0xff]
      %v370 = vld [vmem:[%s317 + $0x1a0] sm:$0xff]
      %v371 = vld [vmem:[%s317 + $0x1a8] sm:$0xff]
      %v372 = vld [vmem:[%s317 + $0x1b0] sm:$0xff]
      %v373 = vld [vmem:[%s317 + $0x1b8] sm:$0xff]
      %v374 = vld [vmem:[%s317 + $0x1c0] sm:$0x3f]
      %v375 = vld [vmem:[%s317 + $0x1c8] sm:$0x3f]
      %v376 = vld [vmem:[%s317 + $0x1d0] sm:$0x3f]
      %v377 = vld [vmem:[%s317 + $0x1d8] sm:$0x3f]
      %v378 = vld [vmem:[%s317 + $0x1e0] sm:$0x3f]
      %v379 = vld [vmem:[%s317 + $0x1e8] sm:$0x3f]
      %v380 = vld [vmem:[%s317 + $0x1f0] sm:$0x3f]
      %v381 = vld [vmem:[%s317 + $0x1f8] sm:$0x3f]
      %v382 = vld [vmem:[%s317 + $0x200] sm:$0xff]
      %v383 = vld [vmem:[%s317 + $0x208] sm:$0xff]
      %v384 = vld [vmem:[%s317 + $0x210] sm:$0xff]
      %v385 = vld [vmem:[%s317 + $0x218] sm:$0xff]
      %v386 = vld [vmem:[%s317 + $0x220] sm:$0xff]
      %v387 = vld [vmem:[%s317 + $0x228] sm:$0xff]
      %v388 = vld [vmem:[%s317 + $0x230] sm:$0xff]
      %v389 = vld [vmem:[%s317 + $0x238] sm:$0xff]
      %v390 = vld [vmem:[%s317 + $0x240] sm:$0x3f]
      %v391 = vld [vmem:[%s317 + $0x248] sm:$0x3f]
      %v392 = vld [vmem:[%s317 + $0x250] sm:$0x3f]
      %v393 = vld [vmem:[%s317 + $0x258] sm:$0x3f]
      %v394 = vld [vmem:[%s317 + $0x260] sm:$0x3f]
      %v395 = vld [vmem:[%s317 + $0x268] sm:$0x3f]
      %v396 = vld [vmem:[%s317 + $0x270] sm:$0x3f]
      %v397 = vld [vmem:[%s317 + $0x278] sm:$0x3f]
      %v398 = vld [vmem:[%s317 + $0x280] sm:$0xff]
      %v399 = vld [vmem:[%s317 + $0x288] sm:$0xff]
      %v400 = vld [vmem:[%s317 + $0x290] sm:$0xff]
      %v401 = vld [vmem:[%s317 + $0x298] sm:$0xff]
      %v402 = vld [vmem:[%s317 + $0x2a0] sm:$0xff]
      %v403 = vld [vmem:[%s317 + $0x2a8] sm:$0xff]
      %v404 = vld [vmem:[%s317 + $0x2b0] sm:$0xff]
      %v405 = vld [vmem:[%s317 + $0x2b8] sm:$0xff]
      %v406 = vld [vmem:[%s317 + $0x2c0] sm:$0x3f]
      %v407 = vld [vmem:[%s317 + $0x2c8] sm:$0x3f]
      %v408 = vld [vmem:[%s317 + $0x2d0] sm:$0x3f]
      %v409 = vld [vmem:[%s317 + $0x2d8] sm:$0x3f]
      %v410 = vld [vmem:[%s317 + $0x2e0] sm:$0x3f]
      %v411 = vld [vmem:[%s317 + $0x2e8] sm:$0x3f]
      %v412 = vld [vmem:[%s317 + $0x2f0] sm:$0x3f]
      %v413 = vld [vmem:[%s317 + $0x2f8] sm:$0x3f]
      %v414 = vld [vmem:[%s317 + $0x300] sm:$0xff]
      %v415 = vld [vmem:[%s317 + $0x308] sm:$0xff]
      %v416 = vld [vmem:[%s317 + $0x310] sm:$0xff]
      %v417 = vld [vmem:[%s317 + $0x318] sm:$0xff]
      %v418 = vld [vmem:[%s317 + $0x320] sm:$0xff]
      %v419 = vld [vmem:[%s317 + $0x328] sm:$0xff]
      %v420 = vld [vmem:[%s317 + $0x330] sm:$0xff]
      %v421 = vld [vmem:[%s317 + $0x338] sm:$0xff]
      %v422 = vld [vmem:[%s317 + $0x340] sm:$0x3f]
      %v423 = vld [vmem:[%s317 + $0x348] sm:$0x3f]
      %v424 = vld [vmem:[%s317 + $0x350] sm:$0x3f]
      %v425 = vld [vmem:[%s317 + $0x358] sm:$0x3f]
      %v426 = vld [vmem:[%s317 + $0x360] sm:$0x3f]
      %v427 = vld [vmem:[%s317 + $0x368] sm:$0x3f]
      %v428 = vld [vmem:[%s317 + $0x370] sm:$0x3f]
      %v429 = vld [vmem:[%s317 + $0x378] sm:$0x3f]
      %s430 = scalar_lea.vmem [#allocation2], 128
      %431 = vst [vmem:[%s430] sm:$0xff] %v318
      %432 = vst [vmem:[%s430 + $0x8] sm:$0xff] %v319
      %433 = vst [vmem:[%s430 + $0x10] sm:$0xff] %v320
      %434 = vst [vmem:[%s430 + $0x18] sm:$0xff] %v321
      %435 = vst [vmem:[%s430 + $0x20] sm:$0xff] %v322
      %436 = vst [vmem:[%s430 + $0x28] sm:$0xff] %v323
      %437 = vst [vmem:[%s430 + $0x30] sm:$0xff] %v324
      %438 = vst.msk [vmem:[%s430 + $0x38] sm:$0xff] %vm177, %v325
      %439 = vst [vmem:[%s430 + $0x40] sm:$0x3f] %v326
      %440 = vst [vmem:[%s430 + $0x48] sm:$0x3f] %v327
      %441 = vst [vmem:[%s430 + $0x50] sm:$0x3f] %v328
      %442 = vst [vmem:[%s430 + $0x58] sm:$0x3f] %v329
      %443 = vst [vmem:[%s430 + $0x60] sm:$0x3f] %v330
      %444 = vst [vmem:[%s430 + $0x68] sm:$0x3f] %v331
      %445 = vst [vmem:[%s430 + $0x70] sm:$0x3f] %v332
      %vm446 = vcmask 521216
      %447 = vst.msk [vmem:[%s430 + $0x78] sm:$0x3f] %vm446, %v333
      %448 = vst [vmem:[%s430 + $0x80] sm:$0xff] %v334
      %449 = vst [vmem:[%s430 + $0x88] sm:$0xff] %v335
      %450 = vst [vmem:[%s430 + $0x90] sm:$0xff] %v336
      %451 = vst [vmem:[%s430 + $0x98] sm:$0xff] %v337
      %452 = vst [vmem:[%s430 + $0xa0] sm:$0xff] %v338
      %453 = vst [vmem:[%s430 + $0xa8] sm:$0xff] %v339
      %454 = vst [vmem:[%s430 + $0xb0] sm:$0xff] %v340
      %455 = vst.msk [vmem:[%s430 + $0xb8] sm:$0xff] %vm177, %v341
      %456 = vst [vmem:[%s430 + $0xc0] sm:$0x3f] %v342
      %457 = vst [vmem:[%s430 + $0xc8] sm:$0x3f] %v343
      %458 = vst [vmem:[%s430 + $0xd0] sm:$0x3f] %v344
      %459 = vst [vmem:[%s430 + $0xd8] sm:$0x3f] %v345
      %460 = vst [vmem:[%s430 + $0xe0] sm:$0x3f] %v346
      %461 = vst [vmem:[%s430 + $0xe8] sm:$0x3f] %v347
      %462 = vst [vmem:[%s430 + $0xf0] sm:$0x3f] %v348
      %463 = vst.msk [vmem:[%s430 + $0xf8] sm:$0x3f] %vm446, %v349
      %464 = vst [vmem:[%s430 + $0x100] sm:$0xff] %v350
      %465 = vst [vmem:[%s430 + $0x108] sm:$0xff] %v351
      %466 = vst [vmem:[%s430 + $0x110] sm:$0xff] %v352
      %467 = vst [vmem:[%s430 + $0x118] sm:$0xff] %v353
      %468 = vst [vmem:[%s430 + $0x120] sm:$0xff] %v354
      %469 = vst [vmem:[%s430 + $0x128] sm:$0xff] %v355
      %470 = vst [vmem:[%s430 + $0x130] sm:$0xff] %v356
      %471 = vst.msk [vmem:[%s430 + $0x138] sm:$0xff] %vm177, %v357
      %472 = vst [vmem:[%s430 + $0x140] sm:$0x3f] %v358
      %473 = vst [vmem:[%s430 + $0x148] sm:$0x3f] %v359
      %474 = vst [vmem:[%s430 + $0x150] sm:$0x3f] %v360
      %475 = vst [vmem:[%s430 + $0x158] sm:$0x3f] %v361
      %476 = vst [vmem:[%s430 + $0x160] sm:$0x3f] %v362
      %477 = vst [vmem:[%s430 + $0x168] sm:$0x3f] %v363
      %478 = vst [vmem:[%s430 + $0x170] sm:$0x3f] %v364
      %479 = vst.msk [vmem:[%s430 + $0x178] sm:$0x3f] %vm446, %v365
      %480 = vst [vmem:[%s430 + $0x180] sm:$0xff] %v366
      %481 = vst [vmem:[%s430 + $0x188] sm:$0xff] %v367
      %482 = vst [vmem:[%s430 + $0x190] sm:$0xff] %v368
      %483 = vst [vmem:[%s430 + $0x198] sm:$0xff] %v369
      %484 = vst [vmem:[%s430 + $0x1a0] sm:$0xff] %v370
      %485 = vst [vmem:[%s430 + $0x1a8] sm:$0xff] %v371
      %486 = vst [vmem:[%s430 + $0x1b0] sm:$0xff] %v372
      %487 = vst.msk [vmem:[%s430 + $0x1b8] sm:$0xff] %vm177, %v373
      %488 = vst [vmem:[%s430 + $0x1c0] sm:$0x3f] %v374
      %489 = vst [vmem:[%s430 + $0x1c8] sm:$0x3f] %v375
      %490 = vst [vmem:[%s430 + $0x1d0] sm:$0x3f] %v376
      %491 = vst [vmem:[%s430 + $0x1d8] sm:$0x3f] %v377
      %492 = vst [vmem:[%s430 + $0x1e0] sm:$0x3f] %v378
      %493 = vst [vmem:[%s430 + $0x1e8] sm:$0x3f] %v379
      %494 = vst [vmem:[%s430 + $0x1f0] sm:$0x3f] %v380
      %495 = vst.msk [vmem:[%s430 + $0x1f8] sm:$0x3f] %vm446, %v381
      %496 = vst [vmem:[%s430 + $0x200] sm:$0xff] %v382
      %497 = vst [vmem:[%s430 + $0x208] sm:$0xff] %v383
      %498 = vst [vmem:[%s430 + $0x210] sm:$0xff] %v384
      %499 = vst [vmem:[%s430 + $0x218] sm:$0xff] %v385
      %500 = vst [vmem:[%s430 + $0x220] sm:$0xff] %v386
      %501 = vst [vmem:[%s430 + $0x228] sm:$0xff] %v387
      %502 = vst [vmem:[%s430 + $0x230] sm:$0xff] %v388
      %503 = vst.msk [vmem:[%s430 + $0x238] sm:$0xff] %vm177, %v389
      %504 = vst [vmem:[%s430 + $0x240] sm:$0x3f] %v390
      %505 = vst [vmem:[%s430 + $0x248] sm:$0x3f] %v391
      %506 = vst [vmem:[%s430 + $0x250] sm:$0x3f] %v392
      %507 = vst [vmem:[%s430 + $0x258] sm:$0x3f] %v393
      %508 = vst [vmem:[%s430 + $0x260] sm:$0x3f] %v394
      %509 = vst [vmem:[%s430 + $0x268] sm:$0x3f] %v395
      %510 = vst [vmem:[%s430 + $0x270] sm:$0x3f] %v396
      %511 = vst.msk [vmem:[%s430 + $0x278] sm:$0x3f] %vm446, %v397
      %512 = vst [vmem:[%s430 + $0x280] sm:$0xff] %v398
      %513 = vst [vmem:[%s430 + $0x288] sm:$0xff] %v399
      %514 = vst [vmem:[%s430 + $0x290] sm:$0xff] %v400
      %515 = vst [vmem:[%s430 + $0x298] sm:$0xff] %v401
      %516 = vst [vmem:[%s430 + $0x2a0] sm:$0xff] %v402
      %517 = vst [vmem:[%s430 + $0x2a8] sm:$0xff] %v403
      %518 = vst [vmem:[%s430 + $0x2b0] sm:$0xff] %v404
      %519 = vst.msk [vmem:[%s430 + $0x2b8] sm:$0xff] %vm177, %v405
      %520 = vst [vmem:[%s430 + $0x2c0] sm:$0x3f] %v406
      %521 = vst [vmem:[%s430 + $0x2c8] sm:$0x3f] %v407
      %522 = vst [vmem:[%s430 + $0x2d0] sm:$0x3f] %v408
      %523 = vst [vmem:[%s430 + $0x2d8] sm:$0x3f] %v409
      %524 = vst [vmem:[%s430 + $0x2e0] sm:$0x3f] %v410
      %525 = vst [vmem:[%s430 + $0x2e8] sm:$0x3f] %v411
      %526 = vst [vmem:[%s430 + $0x2f0] sm:$0x3f] %v412
      %527 = vst.msk [vmem:[%s430 + $0x2f8] sm:$0x3f] %vm446, %v413
      %528 = vst [vmem:[%s430 + $0x300] sm:$0xff] %v414
      %529 = vst [vmem:[%s430 + $0x308] sm:$0xff] %v415
      %530 = vst [vmem:[%s430 + $0x310] sm:$0xff] %v416
      %531 = vst [vmem:[%s430 + $0x318] sm:$0xff] %v417
      %532 = vst [vmem:[%s430 + $0x320] sm:$0xff] %v418
      %533 = vst [vmem:[%s430 + $0x328] sm:$0xff] %v419
      %534 = vst [vmem:[%s430 + $0x330] sm:$0xff] %v420
      %535 = vst.msk [vmem:[%s430 + $0x338] sm:$0xff] %vm177, %v421
      %536 = vst [vmem:[%s430 + $0x340] sm:$0x3f] %v422
      %537 = vst [vmem:[%s430 + $0x348] sm:$0x3f] %v423
      %538 = vst [vmem:[%s430 + $0x350] sm:$0x3f] %v424
      %539 = vst [vmem:[%s430 + $0x358] sm:$0x3f] %v425
      %540 = vst [vmem:[%s430 + $0x360] sm:$0x3f] %v426
      %541 = vst [vmem:[%s430 + $0x368] sm:$0x3f] %v427
      %542 = vst [vmem:[%s430 + $0x370] sm:$0x3f] %v428
      %543 = vst.msk [vmem:[%s430 + $0x378] sm:$0x3f] %vm446, %v429
      %p544 = scmp.gt.s32.totalorder %s18, 0
      // Predicated region
      $region29: #{tpu_custom_call.1} parent=27 // pred_check
        %p545 = pneg %p544
      $region30: #{tpu_custom_call.1} parent=27 // pred_check_branch
        %547 = sbr.rel (%p545) target = $region32
      $region31: #{tpu_custom_call.1} parent=27 // pred_region
        %s548 = ssub.s32 %s169, 1
        %s549 = smul.u32 %s548, 16
        %s550 = smul.addr %s549, 8
        %s551 = scalar_lea.vmem %s157, %s550
        %v552 = vld [vmem:[%s551] sm:$0xff]
        %v553 = vld [vmem:[%s551 + $0x8] sm:$0xff]
        %v554 = vld [vmem:[%s551 + $0x10] sm:$0xff]
        %v555 = vld [vmem:[%s551 + $0x18] sm:$0xff]
        %v556 = vld [vmem:[%s551 + $0x20] sm:$0xff]
        %v557 = vld [vmem:[%s551 + $0x28] sm:$0xff]
        %v558 = vld [vmem:[%s551 + $0x30] sm:$0xff]
        %v559 = vld [vmem:[%s551 + $0x38] sm:$0xff]
        %v560 = vld [vmem:[%s551 + $0x40] sm:$0x3f]
        %v561 = vld [vmem:[%s551 + $0x48] sm:$0x3f]
        %v562 = vld [vmem:[%s551 + $0x50] sm:$0x3f]
        %v563 = vld [vmem:[%s551 + $0x58] sm:$0x3f]
        %v564 = vld [vmem:[%s551 + $0x60] sm:$0x3f]
        %v565 = vld [vmem:[%s551 + $0x68] sm:$0x3f]
        %v566 = vld [vmem:[%s551 + $0x70] sm:$0x3f]
        %v567 = vld [vmem:[%s551 + $0x78] sm:$0x3f]
        %568 = vst [vmem:[#allocation2] sm:$0xff] %v552
        %569 = vst [vmem:[#allocation2 + $0x8] sm:$0xff] %v553
        %570 = vst [vmem:[#allocation2 + $0x10] sm:$0xff] %v554
        %571 = vst [vmem:[#allocation2 + $0x18] sm:$0xff] %v555
        %572 = vst [vmem:[#allocation2 + $0x20] sm:$0xff] %v556
        %573 = vst [vmem:[#allocation2 + $0x28] sm:$0xff] %v557
        %574 = vst [vmem:[#allocation2 + $0x30] sm:$0xff] %v558
        %575 = vst.msk [vmem:[#allocation2 + $0x38] sm:$0xff] %vm177, %v559
        %576 = vst [vmem:[#allocation2 + $0x40] sm:$0x3f] %v560
        %577 = vst [vmem:[#allocation2 + $0x48] sm:$0x3f] %v561
        %578 = vst [vmem:[#allocation2 + $0x50] sm:$0x3f] %v562
        %579 = vst [vmem:[#allocation2 + $0x58] sm:$0x3f] %v563
        %580 = vst [vmem:[#allocation2 + $0x60] sm:$0x3f] %v564
        %581 = vst [vmem:[#allocation2 + $0x68] sm:$0x3f] %v565
        %582 = vst [vmem:[#allocation2 + $0x70] sm:$0x3f] %v566
        %583 = vst.msk [vmem:[#allocation2 + $0x78] sm:$0x3f] %vm446, %v567
      $region32: #{tpu_custom_call.1} parent=27 // pred_fallthru
        _
      %p584 = scmp.lt.s32.totalorder %s18, 1
      // Predicated region
      $region33: #{tpu_custom_call.1} parent=27 // pred_check
        %p585 = pneg %p584
      $region34: #{tpu_custom_call.1} parent=27 // pred_check_branch
        %587 = sbr.rel (%p585) target = $region36
      $region35: #{tpu_custom_call.1} parent=27 // pred_region
        %s588 = sadd.s32 %s169, 7
        %s589 = smul.u32 %s588, 16
        %s590 = smul.addr %s589, 8
        %s591 = scalar_lea.vmem %s157, %s590
        %v592 = vld [vmem:[%s591] sm:$0xff]
        %v593 = vld [vmem:[%s591 + $0x8] sm:$0xff]
        %v594 = vld [vmem:[%s591 + $0x10] sm:$0xff]
        %v595 = vld [vmem:[%s591 + $0x18] sm:$0xff]
        %v596 = vld [vmem:[%s591 + $0x20] sm:$0xff]
        %v597 = vld [vmem:[%s591 + $0x28] sm:$0xff]
        %v598 = vld [vmem:[%s591 + $0x30] sm:$0xff]
        %v599 = vld [vmem:[%s591 + $0x38] sm:$0xff]
        %v600 = vld [vmem:[%s591 + $0x40] sm:$0x3f]
        %v601 = vld [vmem:[%s591 + $0x48] sm:$0x3f]
        %v602 = vld [vmem:[%s591 + $0x50] sm:$0x3f]
        %v603 = vld [vmem:[%s591 + $0x58] sm:$0x3f]
        %v604 = vld [vmem:[%s591 + $0x60] sm:$0x3f]
        %v605 = vld [vmem:[%s591 + $0x68] sm:$0x3f]
        %v606 = vld [vmem:[%s591 + $0x70] sm:$0x3f]
        %v607 = vld [vmem:[%s591 + $0x78] sm:$0x3f]
        %s608 = scalar_lea.vmem [#allocation2], 1024
        %609 = vst [vmem:[%s608] sm:$0xff] %v592
        %610 = vst [vmem:[%s608 + $0x8] sm:$0xff] %v593
        %611 = vst [vmem:[%s608 + $0x10] sm:$0xff] %v594
        %612 = vst [vmem:[%s608 + $0x18] sm:$0xff] %v595
        %613 = vst [vmem:[%s608 + $0x20] sm:$0xff] %v596
        %614 = vst [vmem:[%s608 + $0x28] sm:$0xff] %v597
        %615 = vst [vmem:[%s608 + $0x30] sm:$0xff] %v598
        %616 = vst.msk [vmem:[%s608 + $0x38] sm:$0xff] %vm177, %v599
        %617 = vst [vmem:[%s608 + $0x40] sm:$0x3f] %v600
        %618 = vst [vmem:[%s608 + $0x48] sm:$0x3f] %v601
        %619 = vst [vmem:[%s608 + $0x50] sm:$0x3f] %v602
        %620 = vst [vmem:[%s608 + $0x58] sm:$0x3f] %v603
        %621 = vst [vmem:[%s608 + $0x60] sm:$0x3f] %v604
        %622 = vst [vmem:[%s608 + $0x68] sm:$0x3f] %v605
        %623 = vst [vmem:[%s608 + $0x70] sm:$0x3f] %v606
        %624 = vst.msk [vmem:[%s608 + $0x78] sm:$0x3f] %vm446, %v607
      $region36: #{tpu_custom_call.1} parent=27 // pred_fallthru
        _
      %v625 = vld [vmem:[%s1] sm:$0xff]
      %v626 = vld [vmem:[%s1 + $0x8] sm:$0xff]
      %v627 = vld [vmem:[%s1 + $0x10] sm:$0xff]
      %v628 = vld [vmem:[%s1 + $0x18] sm:$0xff]
      %v629 = vld [vmem:[%s1 + $0x20] sm:$0xff]
      %v630 = vld [vmem:[%s1 + $0x28] sm:$0xff]
      %v631 = vld [vmem:[%s1 + $0x30] sm:$0xff]
      %v632 = vld [vmem:[%s1 + $0x38] sm:$0xff]
      %v633 = vld [vmem:[%s1 + $0x40] sm:$0x1]
      %v634 = vld [vmem:[%s1 + $0x48] sm:$0x1]
      %v635 = vld [vmem:[%s1 + $0x50] sm:$0x1]
      %v636 = vld [vmem:[%s1 + $0x58] sm:$0x1]
      %v637 = vld [vmem:[%s1 + $0x60] sm:$0x1]
      %v638 = vld [vmem:[%s1 + $0x68] sm:$0x1]
      %v639 = vld [vmem:[%s1 + $0x70] sm:$0x1]
      %v640 = vld [vmem:[%s1 + $0x78] sm:$0x1]
      %v641 = vld [vmem:[#allocation2] sm:$0xff]
      %v642 = vld [vmem:[#allocation2 + $0x8] sm:$0xff]
      %v643 = vld [vmem:[#allocation2 + $0x10] sm:$0xff]
      %v644 = vld [vmem:[#allocation2 + $0x18] sm:$0xff]
      %v645 = vld [vmem:[#allocation2 + $0x20] sm:$0xff]
      %v646 = vld [vmem:[#allocation2 + $0x28] sm:$0xff]
      %v647 = vld [vmem:[#allocation2 + $0x30] sm:$0xff]
      %v648 = vld [vmem:[#allocation2 + $0x38] sm:$0xff]
      %v649 = vld [vmem:[#allocation2 + $0x40] sm:$0xff]
      %v650 = vld [vmem:[#allocation2 + $0x48] sm:$0xff]
      %v651 = vld [vmem:[#allocation2 + $0x50] sm:$0xff]
      %v652 = vld [vmem:[#allocation2 + $0x58] sm:$0xff]
      %v653 = vld [vmem:[#allocation2 + $0x60] sm:$0xff]
      %v654 = vld [vmem:[#allocation2 + $0x68] sm:$0xff]
      %v655 = vld [vmem:[#allocation2 + $0x70] sm:$0xff]
      %v656 = vld [vmem:[#allocation2 + $0x78] sm:$0xff]
      %v657 = vld [vmem:[#allocation2 + $0x80] sm:$0xff]
      %v658 = vld [vmem:[#allocation2 + $0x88] sm:$0xff]
      %v659 = vld [vmem:[#allocation2 + $0x90] sm:$0xff]
      %v660 = vld [vmem:[#allocation2 + $0x98] sm:$0xff]
      %v661 = vld [vmem:[#allocation2 + $0xa0] sm:$0xff]
      %v662 = vld [vmem:[#allocation2 + $0xa8] sm:$0xff]
      %v663 = vld [vmem:[#allocation2 + $0xb0] sm:$0xff]
      %v664 = vld [vmem:[#allocation2 + $0xb8] sm:$0xff]
      %v665 = vld [vmem:[#allocation2 + $0xc0] sm:$0xff]
      %v666 = vld [vmem:[#allocation2 + $0xc8] sm:$0xff]
      %v667 = vld [vmem:[#allocation2 + $0xd0] sm:$0xff]
      %v668 = vld [vmem:[#allocation2 + $0xd8] sm:$0xff]
      %v669 = vld [vmem:[#allocation2 + $0xe0] sm:$0xff]
      %v670 = vld [vmem:[#allocation2 + $0xe8] sm:$0xff]
      %v671 = vld [vmem:[#allocation2 + $0xf0] sm:$0xff]
      %v672 = vld [vmem:[#allocation2 + $0xf8] sm:$0xff]
      %v673 = vld [vmem:[#allocation2 + $0x100] sm:$0xff]
      %v674 = vld [vmem:[#allocation2 + $0x108] sm:$0xff]
      %v675 = vld [vmem:[#allocation2 + $0x110] sm:$0xff]
      %v676 = vld [vmem:[#allocation2 + $0x118] sm:$0xff]
      %v677 = vld [vmem:[#allocation2 + $0x120] sm:$0xff]
      %v678 = vld [vmem:[#allocation2 + $0x128] sm:$0xff]
      %v679 = vld [vmem:[#allocation2 + $0x130] sm:$0xff]
      %v680 = vld [vmem:[#allocation2 + $0x138] sm:$0xff]
      %v681 = vld [vmem:[#allocation2 + $0x140] sm:$0xff]
      %v682 = vld [vmem:[#allocation2 + $0x148] sm:$0xff]
      %v683 = vld [vmem:[#allocation2 + $0x150] sm:$0xff]
      %v684 = vld [vmem:[#allocation2 + $0x158] sm:$0xff]
      %v685 = vld [vmem:[#allocation2 + $0x160] sm:$0xff]
      %v686 = vld [vmem:[#allocation2 + $0x168] sm:$0xff]
      %v687 = vld [vmem:[#allocation2 + $0x170] sm:$0xff]
      %v688 = vld [vmem:[#allocation2 + $0x178] sm:$0xff]
      %v689 = vld [vmem:[#allocation2 + $0x180] sm:$0xff]
      %v690 = vld [vmem:[#allocation2 + $0x188] sm:$0xff]
      %v691 = vld [vmem:[#allocation2 + $0x190] sm:$0xff]
      %v692 = vld [vmem:[#allocation2 + $0x198] sm:$0xff]
      %v693 = vld [vmem:[#allocation2 + $0x1a0] sm:$0xff]
      %v694 = vld [vmem:[#allocation2 + $0x1a8] sm:$0xff]
      %v695 = vld [vmem:[#allocation2 + $0x1b0] sm:$0xff]
      %v696 = vld [vmem:[#allocation2 + $0x1b8] sm:$0xff]
      %v697 = vld [vmem:[#allocation2 + $0x1c0] sm:$0xff]
      %v698 = vld [vmem:[#allocation2 + $0x1c8] sm:$0xff]
      %v699 = vld [vmem:[#allocation2 + $0x1d0] sm:$0xff]
      %v700 = vld [vmem:[#allocation2 + $0x1d8] sm:$0xff]
      %v701 = vld [vmem:[#allocation2 + $0x1e0] sm:$0xff]
      %v702 = vld [vmem:[#allocation2 + $0x1e8] sm:$0xff]
      %v703 = vld [vmem:[#allocation2 + $0x1f0] sm:$0xff]
      %v704 = vld [vmem:[#allocation2 + $0x1f8] sm:$0xff]
      %v705 = vld [vmem:[#allocation2 + $0x200] sm:$0xff]
      %v706 = vld [vmem:[#allocation2 + $0x208] sm:$0xff]
      %v707 = vld [vmem:[#allocation2 + $0x210] sm:$0xff]
      %v708 = vld [vmem:[#allocation2 + $0x218] sm:$0xff]
      %v709 = vld [vmem:[#allocation2 + $0x220] sm:$0xff]
      %v710 = vld [vmem:[#allocation2 + $0x228] sm:$0xff]
      %v711 = vld [vmem:[#allocation2 + $0x230] sm:$0xff]
      %v712 = vld [vmem:[#allocation2 + $0x238] sm:$0xff]
      %v713 = vld [vmem:[#allocation2 + $0x240] sm:$0xff]
      %v714 = vld [vmem:[#allocation2 + $0x248] sm:$0xff]
      %v715 = vld [vmem:[#allocation2 + $0x250] sm:$0xff]
      %v716 = vld [vmem:[#allocation2 + $0x258] sm:$0xff]
      %v717 = vld [vmem:[#allocation2 + $0x260] sm:$0xff]
      %v718 = vld [vmem:[#allocation2 + $0x268] sm:$0xff]
      %v719 = vld [vmem:[#allocation2 + $0x270] sm:$0xff]
      %v720 = vld [vmem:[#allocation2 + $0x278] sm:$0xff]
      %v721 = vld [vmem:[#allocation2 + $0x280] sm:$0xff]
      %v722 = vld [vmem:[#allocation2 + $0x288] sm:$0xff]
      %v723 = vld [vmem:[#allocation2 + $0x290] sm:$0xff]
      %v724 = vld [vmem:[#allocation2 + $0x298] sm:$0xff]
      %v725 = vld [vmem:[#allocation2 + $0x2a0] sm:$0xff]
      %v726 = vld [vmem:[#allocation2 + $0x2a8] sm:$0xff]
      %v727 = vld [vmem:[#allocation2 + $0x2b0] sm:$0xff]
      %v728 = vld [vmem:[#allocation2 + $0x2b8] sm:$0xff]
      %v729 = vld [vmem:[#allocation2 + $0x2c0] sm:$0xff]
      %v730 = vld [vmem:[#allocation2 + $0x2c8] sm:$0xff]
      %v731 = vld [vmem:[#allocation2 + $0x2d0] sm:$0xff]
      %v732 = vld [vmem:[#allocation2 + $0x2d8] sm:$0xff]
      %v733 = vld [vmem:[#allocation2 + $0x2e0] sm:$0xff]
      %v734 = vld [vmem:[#allocation2 + $0x2e8] sm:$0xff]
      %v735 = vld [vmem:[#allocation2 + $0x2f0] sm:$0xff]
      %v736 = vld [vmem:[#allocation2 + $0x2f8] sm:$0xff]
      %v737 = vld [vmem:[#allocation2 + $0x300] sm:$0xff]
      %v738 = vld [vmem:[#allocation2 + $0x308] sm:$0xff]
      %v739 = vld [vmem:[#allocation2 + $0x310] sm:$0xff]
      %v740 = vld [vmem:[#allocation2 + $0x318] sm:$0xff]
      %v741 = vld [vmem:[#allocation2 + $0x320] sm:$0xff]
      %v742 = vld [vmem:[#allocation2 + $0x328] sm:$0xff]
      %v743 = vld [vmem:[#allocation2 + $0x330] sm:$0xff]
      %v744 = vld [vmem:[#allocation2 + $0x338] sm:$0xff]
      %v745 = vld [vmem:[#allocation2 + $0x340] sm:$0xff]
      %v746 = vld [vmem:[#allocation2 + $0x348] sm:$0xff]
      %v747 = vld [vmem:[#allocation2 + $0x350] sm:$0xff]
      %v748 = vld [vmem:[#allocation2 + $0x358] sm:$0xff]
      %v749 = vld [vmem:[#allocation2 + $0x360] sm:$0xff]
      %v750 = vld [vmem:[#allocation2 + $0x368] sm:$0xff]
      %v751 = vld [vmem:[#allocation2 + $0x370] sm:$0xff]
      %v752 = vld [vmem:[#allocation2 + $0x378] sm:$0xff]
      %v753 = vrot.slane %v641, 7
      %v754 = vrot.slane %v642, 7
      %v755 = vrot.slane %v643, 7
      %v756 = vrot.slane %v644, 7
      %v757 = vrot.slane %v645, 7
      %v758 = vrot.slane %v646, 7
      %v759 = vrot.slane %v647, 7
      %v760 = vrot.slane %v648, 7
      %v761 = vrot.slane %v657, 7
      %v762 = vrot.slane %v658, 7
      %v763 = vrot.slane %v659, 7
      %v764 = vrot.slane %v660, 7
      %v765 = vrot.slane %v661, 7
      %v766 = vrot.slane %v662, 7
      %v767 = vrot.slane %v663, 7
      %v768 = vrot.slane %v664, 7
      %v769 = vrot.slane %v673, 7
      %v770 = vrot.slane %v674, 7
      %v771 = vrot.slane %v675, 7
      %v772 = vrot.slane %v676, 7
      %v773 = vrot.slane %v677, 7
      %v774 = vrot.slane %v678, 7
      %v775 = vrot.slane %v679, 7
      %v776 = vrot.slane %v680, 7
      %v777 = vrot.slane %v689, 7
      %v778 = vrot.slane %v690, 7
      %v779 = vrot.slane %v691, 7
      %v780 = vrot.slane %v692, 7
      %v781 = vrot.slane %v693, 7
      %v782 = vrot.slane %v694, 7
      %v783 = vrot.slane %v695, 7
      %v784 = vrot.slane %v696, 7
      %v785 = vrot.slane %v705, 7
      %v786 = vrot.slane %v706, 7
      %v787 = vrot.slane %v707, 7
      %v788 = vrot.slane %v708, 7
      %v789 = vrot.slane %v709, 7
      %v790 = vrot.slane %v710, 7
      %v791 = vrot.slane %v711, 7
      %v792 = vrot.slane %v712, 7
      %v793 = vrot.slane %v721, 7
      %v794 = vrot.slane %v722, 7
      %v795 = vrot.slane %v723, 7
      %v796 = vrot.slane %v724, 7
      %v797 = vrot.slane %v725, 7
      %v798 = vrot.slane %v726, 7
      %v799 = vrot.slane %v727, 7
      %v800 = vrot.slane %v728, 7
      %v801 = vrot.slane %v737, 7
      %v802 = vrot.slane %v738, 7
      %v803 = vrot.slane %v739, 7
      %v804 = vrot.slane %v740, 7
      %v805 = vrot.slane %v741, 7
      %v806 = vrot.slane %v742, 7
      %v807 = vrot.slane %v743, 7
      %v808 = vrot.slane %v744, 7
      %v809 = vrot.slane %v649, 7
      %v810 = vrot.slane %v650, 7
      %v811 = vrot.slane %v651, 7
      %v812 = vrot.slane %v652, 7
      %v813 = vrot.slane %v653, 7
      %v814 = vrot.slane %v654, 7
      %v815 = vrot.slane %v655, 7
      %v816 = vrot.slane %v656, 7
      %v817 = vrot.slane %v665, 7
      %v818 = vrot.slane %v666, 7
      %v819 = vrot.slane %v667, 7
      %v820 = vrot.slane %v668, 7
      %v821 = vrot.slane %v669, 7
      %v822 = vrot.slane %v670, 7
      %v823 = vrot.slane %v671, 7
      %v824 = vrot.slane %v672, 7
      %v825 = vrot.slane %v681, 7
      %v826 = vrot.slane %v682, 7
      %v827 = vrot.slane %v683, 7
      %v828 = vrot.slane %v684, 7
      %v829 = vrot.slane %v685, 7
      %v830 = vrot.slane %v686, 7
      %v831 = vrot.slane %v687, 7
      %v832 = vrot.slane %v688, 7
      %v833 = vrot.slane %v697, 7
      %v834 = vrot.slane %v698, 7
      %v835 = vrot.slane %v699, 7
      %v836 = vrot.slane %v700, 7
      %v837 = vrot.slane %v701, 7
      %v838 = vrot.slane %v702, 7
      %v839 = vrot.slane %v703, 7
      %v840 = vrot.slane %v704, 7
      %v841 = vrot.slane %v713, 7
      %v842 = vrot.slane %v714, 7
      %v843 = vrot.slane %v715, 7
      %v844 = vrot.slane %v716, 7
      %v845 = vrot.slane %v717, 7
      %v846 = vrot.slane %v718, 7
      %v847 = vrot.slane %v719, 7
      %v848 = vrot.slane %v720, 7
      %v849 = vrot.slane %v729, 7
      %v850 = vrot.slane %v730, 7
      %v851 = vrot.slane %v731, 7
      %v852 = vrot.slane %v732, 7
      %v853 = vrot.slane %v733, 7
      %v854 = vrot.slane %v734, 7
      %v855 = vrot.slane %v735, 7
      %v856 = vrot.slane %v736, 7
      %v857 = vrot.slane %v745, 7
      %v858 = vrot.slane %v746, 7
      %v859 = vrot.slane %v747, 7
      %v860 = vrot.slane %v748, 7
      %v861 = vrot.slane %v749, 7
      %v862 = vrot.slane %v750, 7
      %v863 = vrot.slane %v751, 7
      %v864 = vrot.slane %v752, 7
      %v865 = vlaneseq
      %v866 = vshrl.u32 %v865, 7
      %vm867 = vcmp.lt.s32.totalorder %v866, 1
      %v868 = vsel %vm867, %v753, %v809
      %v869 = vsel %vm867, %v754, %v810
      %v870 = vsel %vm867, %v755, %v811
      %v871 = vsel %vm867, %v756, %v812
      %v872 = vsel %vm867, %v757, %v813
      %v873 = vsel %vm867, %v758, %v814
      %v874 = vsel %vm867, %v759, %v815
      %v875 = vsel %vm867, %v760, %v816
      %v876 = vsel %vm867, %v761, %v817
      %v877 = vsel %vm867, %v762, %v818
      %v878 = vsel %vm867, %v763, %v819
      %v879 = vsel %vm867, %v764, %v820
      %v880 = vsel %vm867, %v765, %v821
      %v881 = vsel %vm867, %v766, %v822
      %v882 = vsel %vm867, %v767, %v823
      %v883 = vsel %vm867, %v768, %v824
      %v884 = vsel %vm867, %v769, %v825
      %v885 = vsel %vm867, %v770, %v826
      %v886 = vsel %vm867, %v771, %v827
      %v887 = vsel %vm867, %v772, %v828
      %v888 = vsel %vm867, %v773, %v829
      %v889 = vsel %vm867, %v774, %v830
      %v890 = vsel %vm867, %v775, %v831
      %v891 = vsel %vm867, %v776, %v832
      %v892 = vsel %vm867, %v777, %v833
      %v893 = vsel %vm867, %v778, %v834
      %v894 = vsel %vm867, %v779, %v835
      %v895 = vsel %vm867, %v780, %v836
      %v896 = vsel %vm867, %v781, %v837
      %v897 = vsel %vm867, %v782, %v838
      %v898 = vsel %vm867, %v783, %v839
      %v899 = vsel %vm867, %v784, %v840
      %v900 = vsel %vm867, %v785, %v841
      %v901 = vsel %vm867, %v786, %v842
      %v902 = vsel %vm867, %v787, %v843
      %v903 = vsel %vm867, %v788, %v844
      %v904 = vsel %vm867, %v789, %v845
      %v905 = vsel %vm867, %v790, %v846
      %v906 = vsel %vm867, %v791, %v847
      %v907 = vsel %vm867, %v792, %v848
      %v908 = vsel %vm867, %v793, %v849
      %v909 = vsel %vm867, %v794, %v850
      %v910 = vsel %vm867, %v795, %v851
      %v911 = vsel %vm867, %v796, %v852
      %v912 = vsel %vm867, %v797, %v853
      %v913 = vsel %vm867, %v798, %v854
      %v914 = vsel %vm867, %v799, %v855
      %v915 = vsel %vm867, %v800, %v856
      %v916 = vsel %vm867, %v801, %v857
      %v917 = vsel %vm867, %v802, %v858
      %v918 = vsel %vm867, %v803, %v859
      %v919 = vsel %vm867, %v804, %v860
      %v920 = vsel %vm867, %v805, %v861
      %v921 = vsel %vm867, %v806, %v862
      %v922 = vsel %vm867, %v807, %v863
      %v923 = vsel %vm867, %v808, %v864
      %v924 = vsel %vm867, %v809, %v753
      %v925 = vsel %vm867, %v810, %v754
      %v926 = vsel %vm867, %v811, %v755
      %v927 = vsel %vm867, %v812, %v756
      %v928 = vsel %vm867, %v813, %v757
      %v929 = vsel %vm867, %v814, %v758
      %v930 = vsel %vm867, %v815, %v759
      %v931 = vsel %vm867, %v816, %v760
      %v932 = vsel %vm867, %v817, %v761
      %v933 = vsel %vm867, %v818, %v762
      %v934 = vsel %vm867, %v819, %v763
      %v935 = vsel %vm867, %v820, %v764
      %v936 = vsel %vm867, %v821, %v765
      %v937 = vsel %vm867, %v822, %v766
      %v938 = vsel %vm867, %v823, %v767
      %v939 = vsel %vm867, %v824, %v768
      %v940 = vsel %vm867, %v825, %v769
      %v941 = vsel %vm867, %v826, %v770
      %v942 = vsel %vm867, %v827, %v771
      %v943 = vsel %vm867, %v828, %v772
      %v944 = vsel %vm867, %v829, %v773
      %v945 = vsel %vm867, %v830, %v774
      %v946 = vsel %vm867, %v831, %v775
      %v947 = vsel %vm867, %v832, %v776
      %v948 = vsel %vm867, %v833, %v777
      %v949 = vsel %vm867, %v834, %v778
      %v950 = vsel %vm867, %v835, %v779
      %v951 = vsel %vm867, %v836, %v780
      %v952 = vsel %vm867, %v837, %v781
      %v953 = vsel %vm867, %v838, %v782
      %v954 = vsel %vm867, %v839, %v783
      %v955 = vsel %vm867, %v840, %v784
      %v956 = vsel %vm867, %v841, %v785
      %v957 = vsel %vm867, %v842, %v786
      %v958 = vsel %vm867, %v843, %v787
      %v959 = vsel %vm867, %v844, %v788
      %v960 = vsel %vm867, %v845, %v789
      %v961 = vsel %vm867, %v846, %v790
      %v962 = vsel %vm867, %v847, %v791
      %v963 = vsel %vm867, %v848, %v792
      %v964 = vsel %vm867, %v849, %v793
      %v965 = vsel %vm867, %v850, %v794
      %v966 = vsel %vm867, %v851, %v795
      %v967 = vsel %vm867, %v852, %v796
      %v968 = vsel %vm867, %v853, %v797
      %v969 = vsel %vm867, %v854, %v798
      %v970 = vsel %vm867, %v855, %v799
      %v971 = vsel %vm867, %v856, %v800
      %v972 = vsel %vm867, %v857, %v801
      %v973 = vsel %vm867, %v858, %v802
      %v974 = vsel %vm867, %v859, %v803
      %v975 = vsel %vm867, %v860, %v804
      %v976 = vsel %vm867, %v861, %v805
      %v977 = vsel %vm867, %v862, %v806
      %v978 = vsel %vm867, %v863, %v807
      %v979 = vsel %vm867, %v864, %v808
      %v980 = vperm.slane %v625, 0
      %v981 = vperm.slane %v626, 0
      %v982 = vperm.slane %v627, 0
      %v983 = vperm.slane %v628, 0
      %v984 = vperm.slane %v629, 0
      %v985 = vperm.slane %v630, 0
      %v986 = vperm.slane %v631, 0
      %v987 = vperm.slane %v632, 0
      %v988 = vmul.f32 %v924, %v980
      %v989 = vmul.f32 %v925, %v981
      %v990 = vmul.f32 %v926, %v982
      %v991 = vmul.f32 %v927, %v983
      %v992 = vmul.f32 %v928, %v984
      %v993 = vmul.f32 %v929, %v985
      %v994 = vmul.f32 %v930, %v986
      %v995 = vmul.f32 %v931, %v987
      %v996 = vmul.f32 %v868, %v980
      %v997 = vmul.f32 %v869, %v981
      %v998 = vmul.f32 %v870, %v982
      %v999 = vmul.f32 %v871, %v983
      %v1000 = vmul.f32 %v872, %v984
      %v1001 = vmul.f32 %v873, %v985
      %v1002 = vmul.f32 %v874, %v986
      %v1003 = vmul.f32 %v875, %v987
      %v1004 = vmul.f32 %v932, %v980
      %v1005 = vmul.f32 %v933, %v981
      %v1006 = vmul.f32 %v934, %v982
      %v1007 = vmul.f32 %v935, %v983
      %v1008 = vmul.f32 %v936, %v984
      %v1009 = vmul.f32 %v937, %v985
      %v1010 = vmul.f32 %v938, %v986
      %v1011 = vmul.f32 %v939, %v987
      %v1012 = vmul.f32 %v876, %v980
      %v1013 = vmul.f32 %v877, %v981
      %v1014 = vmul.f32 %v878, %v982
      %v1015 = vmul.f32 %v879, %v983
      %v1016 = vmul.f32 %v880, %v984
      %v1017 = vmul.f32 %v881, %v985
      %v1018 = vmul.f32 %v882, %v986
      %v1019 = vmul.f32 %v883, %v987
      %v1020 = vmul.f32 %v940, %v980
      %v1021 = vmul.f32 %v941, %v981
      %v1022 = vmul.f32 %v942, %v982
      %v1023 = vmul.f32 %v943, %v983
      %v1024 = vmul.f32 %v944, %v984
      %v1025 = vmul.f32 %v945, %v985
      %v1026 = vmul.f32 %v946, %v986
      %v1027 = vmul.f32 %v947, %v987
      %v1028 = vmul.f32 %v884, %v980
      %v1029 = vmul.f32 %v885, %v981
      %v1030 = vmul.f32 %v886, %v982
      %v1031 = vmul.f32 %v887, %v983
      %v1032 = vmul.f32 %v888, %v984
      %v1033 = vmul.f32 %v889, %v985
      %v1034 = vmul.f32 %v890, %v986
      %v1035 = vmul.f32 %v891, %v987
      %v1036 = vmul.f32 %v948, %v980
      %v1037 = vmul.f32 %v949, %v981
      %v1038 = vmul.f32 %v950, %v982
      %v1039 = vmul.f32 %v951, %v983
      %v1040 = vmul.f32 %v952, %v984
      %v1041 = vmul.f32 %v953, %v985
      %v1042 = vmul.f32 %v954, %v986
      %v1043 = vmul.f32 %v955, %v987
      %v1044 = vmul.f32 %v892, %v980
      %v1045 = vmul.f32 %v893, %v981
      %v1046 = vmul.f32 %v894, %v982
      %v1047 = vmul.f32 %v895, %v983
      %v1048 = vmul.f32 %v896, %v984
      %v1049 = vmul.f32 %v897, %v985
      %v1050 = vmul.f32 %v898, %v986
      %v1051 = vmul.f32 %v899, %v987
      %v1052 = vmul.f32 %v956, %v980
      %v1053 = vmul.f32 %v957, %v981
      %v1054 = vmul.f32 %v958, %v982
      %v1055 = vmul.f32 %v959, %v983
      %v1056 = vmul.f32 %v960, %v984
      %v1057 = vmul.f32 %v961, %v985
      %v1058 = vmul.f32 %v962, %v986
      %v1059 = vmul.f32 %v963, %v987
      %v1060 = vmul.f32 %v900, %v980
      %v1061 = vmul.f32 %v901, %v981
      %v1062 = vmul.f32 %v902, %v982
      %v1063 = vmul.f32 %v903, %v983
      %v1064 = vmul.f32 %v904, %v984
      %v1065 = vmul.f32 %v905, %v985
      %v1066 = vmul.f32 %v906, %v986
      %v1067 = vmul.f32 %v907, %v987
      %v1068 = vmul.f32 %v964, %v980
      %v1069 = vmul.f32 %v965, %v981
      %v1070 = vmul.f32 %v966, %v982
      %v1071 = vmul.f32 %v967, %v983
      %v1072 = vmul.f32 %v968, %v984
      %v1073 = vmul.f32 %v969, %v985
      %v1074 = vmul.f32 %v970, %v986
      %v1075 = vmul.f32 %v971, %v987
      %v1076 = vmul.f32 %v908, %v980
      %v1077 = vmul.f32 %v909, %v981
      %v1078 = vmul.f32 %v910, %v982
      %v1079 = vmul.f32 %v911, %v983
      %v1080 = vmul.f32 %v912, %v984
      %v1081 = vmul.f32 %v913, %v985
      %v1082 = vmul.f32 %v914, %v986
      %v1083 = vmul.f32 %v915, %v987
      %v1084 = vmul.f32 %v972, %v980
      %v1085 = vmul.f32 %v973, %v981
      %v1086 = vmul.f32 %v974, %v982
      %v1087 = vmul.f32 %v975, %v983
      %v1088 = vmul.f32 %v976, %v984
      %v1089 = vmul.f32 %v977, %v985
      %v1090 = vmul.f32 %v978, %v986
      %v1091 = vmul.f32 %v979, %v987
      %v1092 = vmul.f32 %v916, %v980
      %v1093 = vmul.f32 %v917, %v981
      %v1094 = vmul.f32 %v918, %v982
      %v1095 = vmul.f32 %v919, %v983
      %v1096 = vmul.f32 %v920, %v984
      %v1097 = vmul.f32 %v921, %v985
      %v1098 = vmul.f32 %v922, %v986
      %v1099 = vmul.f32 %v923, %v987
      %v1100 = vperm.slane %v625, 1
      %v1101 = vperm.slane %v626, 1
      %v1102 = vperm.slane %v627, 1
      %v1103 = vperm.slane %v628, 1
      %v1104 = vperm.slane %v629, 1
      %v1105 = vperm.slane %v630, 1
      %v1106 = vperm.slane %v631, 1
      %v1107 = vperm.slane %v632, 1
      %v1108 = vmul.f32 %v641, %v1100
      %v1109 = vmul.f32 %v642, %v1101
      %v1110 = vmul.f32 %v643, %v1102
      %v1111 = vmul.f32 %v644, %v1103
      %v1112 = vmul.f32 %v645, %v1104
      %v1113 = vmul.f32 %v646, %v1105
      %v1114 = vmul.f32 %v647, %v1106
      %v1115 = vmul.f32 %v648, %v1107
      %v1116 = vmul.f32 %v649, %v1100
      %v1117 = vmul.f32 %v650, %v1101
      %v1118 = vmul.f32 %v651, %v1102
      %v1119 = vmul.f32 %v652, %v1103
      %v1120 = vmul.f32 %v653, %v1104
      %v1121 = vmul.f32 %v654, %v1105
      %v1122 = vmul.f32 %v655, %v1106
      %v1123 = vmul.f32 %v656, %v1107
      %v1124 = vmul.f32 %v657, %v1100
      %v1125 = vmul.f32 %v658, %v1101
      %v1126 = vmul.f32 %v659, %v1102
      %v1127 = vmul.f32 %v660, %v1103
      %v1128 = vmul.f32 %v661, %v1104
      %v1129 = vmul.f32 %v662, %v1105
      %v1130 = vmul.f32 %v663, %v1106
      %v1131 = vmul.f32 %v664, %v1107
      %v1132 = vmul.f32 %v665, %v1100
      %v1133 = vmul.f32 %v666, %v1101
      %v1134 = vmul.f32 %v667, %v1102
      %v1135 = vmul.f32 %v668, %v1103
      %v1136 = vmul.f32 %v669, %v1104
      %v1137 = vmul.f32 %v670, %v1105
      %v1138 = vmul.f32 %v671, %v1106
      %v1139 = vmul.f32 %v672, %v1107
      %v1140 = vmul.f32 %v673, %v1100
      %v1141 = vmul.f32 %v674, %v1101
      %v1142 = vmul.f32 %v675, %v1102
      %v1143 = vmul.f32 %v676, %v1103
      %v1144 = vmul.f32 %v677, %v1104
      %v1145 = vmul.f32 %v678, %v1105
      %v1146 = vmul.f32 %v679, %v1106
      %v1147 = vmul.f32 %v680, %v1107
      %v1148 = vmul.f32 %v681, %v1100
      %v1149 = vmul.f32 %v682, %v1101
      %v1150 = vmul.f32 %v683, %v1102
      %v1151 = vmul.f32 %v684, %v1103
      %v1152 = vmul.f32 %v685, %v1104
      %v1153 = vmul.f32 %v686, %v1105
      %v1154 = vmul.f32 %v687, %v1106
      %v1155 = vmul.f32 %v688, %v1107
      %v1156 = vmul.f32 %v689, %v1100
      %v1157 = vmul.f32 %v690, %v1101
      %v1158 = vmul.f32 %v691, %v1102
      %v1159 = vmul.f32 %v692, %v1103
      %v1160 = vmul.f32 %v693, %v1104
      %v1161 = vmul.f32 %v694, %v1105
      %v1162 = vmul.f32 %v695, %v1106
      %v1163 = vmul.f32 %v696, %v1107
      %v1164 = vmul.f32 %v697, %v1100
      %v1165 = vmul.f32 %v698, %v1101
      %v1166 = vmul.f32 %v699, %v1102
      %v1167 = vmul.f32 %v700, %v1103
      %v1168 = vmul.f32 %v701, %v1104
      %v1169 = vmul.f32 %v702, %v1105
      %v1170 = vmul.f32 %v703, %v1106
      %v1171 = vmul.f32 %v704, %v1107
      %v1172 = vmul.f32 %v705, %v1100
      %v1173 = vmul.f32 %v706, %v1101
      %v1174 = vmul.f32 %v707, %v1102
      %v1175 = vmul.f32 %v708, %v1103
      %v1176 = vmul.f32 %v709, %v1104
      %v1177 = vmul.f32 %v710, %v1105
      %v1178 = vmul.f32 %v711, %v1106
      %v1179 = vmul.f32 %v712, %v1107
      %v1180 = vmul.f32 %v713, %v1100
      %v1181 = vmul.f32 %v714, %v1101
      %v1182 = vmul.f32 %v715, %v1102
      %v1183 = vmul.f32 %v716, %v1103
      %v1184 = vmul.f32 %v717, %v1104
      %v1185 = vmul.f32 %v718, %v1105
      %v1186 = vmul.f32 %v719, %v1106
      %v1187 = vmul.f32 %v720, %v1107
      %v1188 = vmul.f32 %v721, %v1100
      %v1189 = vmul.f32 %v722, %v1101
      %v1190 = vmul.f32 %v723, %v1102
      %v1191 = vmul.f32 %v724, %v1103
      %v1192 = vmul.f32 %v725, %v1104
      %v1193 = vmul.f32 %v726, %v1105
      %v1194 = vmul.f32 %v727, %v1106
      %v1195 = vmul.f32 %v728, %v1107
      %v1196 = vmul.f32 %v729, %v1100
      %v1197 = vmul.f32 %v730, %v1101
      %v1198 = vmul.f32 %v731, %v1102
      %v1199 = vmul.f32 %v732, %v1103
      %v1200 = vmul.f32 %v733, %v1104
      %v1201 = vmul.f32 %v734, %v1105
      %v1202 = vmul.f32 %v735, %v1106
      %v1203 = vmul.f32 %v736, %v1107
      %v1204 = vmul.f32 %v737, %v1100
      %v1205 = vmul.f32 %v738, %v1101
      %v1206 = vmul.f32 %v739, %v1102
      %v1207 = vmul.f32 %v740, %v1103
      %v1208 = vmul.f32 %v741, %v1104
      %v1209 = vmul.f32 %v742, %v1105
      %v1210 = vmul.f32 %v743, %v1106
      %v1211 = vmul.f32 %v744, %v1107
      %v1212 = vmul.f32 %v745, %v1100
      %v1213 = vmul.f32 %v746, %v1101
      %v1214 = vmul.f32 %v747, %v1102
      %v1215 = vmul.f32 %v748, %v1103
      %v1216 = vmul.f32 %v749, %v1104
      %v1217 = vmul.f32 %v750, %v1105
      %v1218 = vmul.f32 %v751, %v1106
      %v1219 = vmul.f32 %v752, %v1107
      %v1220 = vadd.f32 %v988, %v1108
      %v1221 = vadd.f32 %v989, %v1109
      %v1222 = vadd.f32 %v990, %v1110
      %v1223 = vadd.f32 %v991, %v1111
      %v1224 = vadd.f32 %v992, %v1112
      %v1225 = vadd.f32 %v993, %v1113
      %v1226 = vadd.f32 %v994, %v1114
      %v1227 = vadd.f32 %v995, %v1115
      %v1228 = vadd.f32 %v996, %v1116
      %v1229 = vadd.f32 %v997, %v1117
      %v1230 = vadd.f32 %v998, %v1118
      %v1231 = vadd.f32 %v999, %v1119
      %v1232 = vadd.f32 %v1000, %v1120
      %v1233 = vadd.f32 %v1001, %v1121
      %v1234 = vadd.f32 %v1002, %v1122
      %v1235 = vadd.f32 %v1003, %v1123
      %v1236 = vadd.f32 %v1004, %v1124
      %v1237 = vadd.f32 %v1005, %v1125
      %v1238 = vadd.f32 %v1006, %v1126
      %v1239 = vadd.f32 %v1007, %v1127
      %v1240 = vadd.f32 %v1008, %v1128
      %v1241 = vadd.f32 %v1009, %v1129
      %v1242 = vadd.f32 %v1010, %v1130
      %v1243 = vadd.f32 %v1011, %v1131
      %v1244 = vadd.f32 %v1012, %v1132
      %v1245 = vadd.f32 %v1013, %v1133
      %v1246 = vadd.f32 %v1014, %v1134
      %v1247 = vadd.f32 %v1015, %v1135
      %v1248 = vadd.f32 %v1016, %v1136
      %v1249 = vadd.f32 %v1017, %v1137
      %v1250 = vadd.f32 %v1018, %v1138
      %v1251 = vadd.f32 %v1019, %v1139
      %v1252 = vadd.f32 %v1020, %v1140
      %v1253 = vadd.f32 %v1021, %v1141
      %v1254 = vadd.f32 %v1022, %v1142
      %v1255 = vadd.f32 %v1023, %v1143
      %v1256 = vadd.f32 %v1024, %v1144
      %v1257 = vadd.f32 %v1025, %v1145
      %v1258 = vadd.f32 %v1026, %v1146
      %v1259 = vadd.f32 %v1027, %v1147
      %v1260 = vadd.f32 %v1028, %v1148
      %v1261 = vadd.f32 %v1029, %v1149
      %v1262 = vadd.f32 %v1030, %v1150
      %v1263 = vadd.f32 %v1031, %v1151
      %v1264 = vadd.f32 %v1032, %v1152
      %v1265 = vadd.f32 %v1033, %v1153
      %v1266 = vadd.f32 %v1034, %v1154
      %v1267 = vadd.f32 %v1035, %v1155
      %v1268 = vadd.f32 %v1036, %v1156
      %v1269 = vadd.f32 %v1037, %v1157
      %v1270 = vadd.f32 %v1038, %v1158
      %v1271 = vadd.f32 %v1039, %v1159
      %v1272 = vadd.f32 %v1040, %v1160
      %v1273 = vadd.f32 %v1041, %v1161
      %v1274 = vadd.f32 %v1042, %v1162
      %v1275 = vadd.f32 %v1043, %v1163
      %v1276 = vadd.f32 %v1044, %v1164
      %v1277 = vadd.f32 %v1045, %v1165
      %v1278 = vadd.f32 %v1046, %v1166
      %v1279 = vadd.f32 %v1047, %v1167
      %v1280 = vadd.f32 %v1048, %v1168
      %v1281 = vadd.f32 %v1049, %v1169
      %v1282 = vadd.f32 %v1050, %v1170
      %v1283 = vadd.f32 %v1051, %v1171
      %v1284 = vadd.f32 %v1052, %v1172
      %v1285 = vadd.f32 %v1053, %v1173
      %v1286 = vadd.f32 %v1054, %v1174
      %v1287 = vadd.f32 %v1055, %v1175
      %v1288 = vadd.f32 %v1056, %v1176
      %v1289 = vadd.f32 %v1057, %v1177
      %v1290 = vadd.f32 %v1058, %v1178
      %v1291 = vadd.f32 %v1059, %v1179
      %v1292 = vadd.f32 %v1060, %v1180
      %v1293 = vadd.f32 %v1061, %v1181
      %v1294 = vadd.f32 %v1062, %v1182
      %v1295 = vadd.f32 %v1063, %v1183
      %v1296 = vadd.f32 %v1064, %v1184
      %v1297 = vadd.f32 %v1065, %v1185
      %v1298 = vadd.f32 %v1066, %v1186
      %v1299 = vadd.f32 %v1067, %v1187
      %v1300 = vadd.f32 %v1068, %v1188
      %v1301 = vadd.f32 %v1069, %v1189
      %v1302 = vadd.f32 %v1070, %v1190
      %v1303 = vadd.f32 %v1071, %v1191
      %v1304 = vadd.f32 %v1072, %v1192
      %v1305 = vadd.f32 %v1073, %v1193
      %v1306 = vadd.f32 %v1074, %v1194
      %v1307 = vadd.f32 %v1075, %v1195
      %v1308 = vadd.f32 %v1076, %v1196
      %v1309 = vadd.f32 %v1077, %v1197
      %v1310 = vadd.f32 %v1078, %v1198
      %v1311 = vadd.f32 %v1079, %v1199
      %v1312 = vadd.f32 %v1080, %v1200
      %v1313 = vadd.f32 %v1081, %v1201
      %v1314 = vadd.f32 %v1082, %v1202
      %v1315 = vadd.f32 %v1083, %v1203
      %v1316 = vadd.f32 %v1084, %v1204
      %v1317 = vadd.f32 %v1085, %v1205
      %v1318 = vadd.f32 %v1086, %v1206
      %v1319 = vadd.f32 %v1087, %v1207
      %v1320 = vadd.f32 %v1088, %v1208
      %v1321 = vadd.f32 %v1089, %v1209
      %v1322 = vadd.f32 %v1090, %v1210
      %v1323 = vadd.f32 %v1091, %v1211
      %v1324 = vadd.f32 %v1092, %v1212
      %v1325 = vadd.f32 %v1093, %v1213
      %v1326 = vadd.f32 %v1094, %v1214
      %v1327 = vadd.f32 %v1095, %v1215
      %v1328 = vadd.f32 %v1096, %v1216
      %v1329 = vadd.f32 %v1097, %v1217
      %v1330 = vadd.f32 %v1098, %v1218
      %v1331 = vadd.f32 %v1099, %v1219
      %v1332 = vrot.slane %v641, 1
      %v1333 = vrot.slane %v642, 1
      %v1334 = vrot.slane %v643, 1
      %v1335 = vrot.slane %v644, 1
      %v1336 = vrot.slane %v645, 1
      %v1337 = vrot.slane %v646, 1
      %v1338 = vrot.slane %v647, 1
      %v1339 = vrot.slane %v648, 1
      %v1340 = vrot.slane %v657, 1
      %v1341 = vrot.slane %v658, 1
      %v1342 = vrot.slane %v659, 1
      %v1343 = vrot.slane %v660, 1
      %v1344 = vrot.slane %v661, 1
      %v1345 = vrot.slane %v662, 1
      %v1346 = vrot.slane %v663, 1
      %v1347 = vrot.slane %v664, 1
      %v1348 = vrot.slane %v673, 1
      %v1349 = vrot.slane %v674, 1
      %v1350 = vrot.slane %v675, 1
      %v1351 = vrot.slane %v676, 1
      %v1352 = vrot.slane %v677, 1
      %v1353 = vrot.slane %v678, 1
      %v1354 = vrot.slane %v679, 1
      %v1355 = vrot.slane %v680, 1
      %v1356 = vrot.slane %v689, 1
      %v1357 = vrot.slane %v690, 1
      %v1358 = vrot.slane %v691, 1
      %v1359 = vrot.slane %v692, 1
      %v1360 = vrot.slane %v693, 1
      %v1361 = vrot.slane %v694, 1
      %v1362 = vrot.slane %v695, 1
      %v1363 = vrot.slane %v696, 1
      %v1364 = vrot.slane %v705, 1
      %v1365 = vrot.slane %v706, 1
      %v1366 = vrot.slane %v707, 1
      %v1367 = vrot.slane %v708, 1
      %v1368 = vrot.slane %v709, 1
      %v1369 = vrot.slane %v710, 1
      %v1370 = vrot.slane %v711, 1
      %v1371 = vrot.slane %v712, 1
      %v1372 = vrot.slane %v721, 1
      %v1373 = vrot.slane %v722, 1
      %v1374 = vrot.slane %v723, 1
      %v1375 = vrot.slane %v724, 1
      %v1376 = vrot.slane %v725, 1
      %v1377 = vrot.slane %v726, 1
      %v1378 = vrot.slane %v727, 1
      %v1379 = vrot.slane %v728, 1
      %v1380 = vrot.slane %v737, 1
      %v1381 = vrot.slane %v738, 1
      %v1382 = vrot.slane %v739, 1
      %v1383 = vrot.slane %v740, 1
      %v1384 = vrot.slane %v741, 1
      %v1385 = vrot.slane %v742, 1
      %v1386 = vrot.slane %v743, 1
      %v1387 = vrot.slane %v744, 1
      %v1388 = vrot.slane %v649, 1
      %v1389 = vrot.slane %v650, 1
      %v1390 = vrot.slane %v651, 1
      %v1391 = vrot.slane %v652, 1
      %v1392 = vrot.slane %v653, 1
      %v1393 = vrot.slane %v654, 1
      %v1394 = vrot.slane %v655, 1
      %v1395 = vrot.slane %v656, 1
      %v1396 = vrot.slane %v665, 1
      %v1397 = vrot.slane %v666, 1
      %v1398 = vrot.slane %v667, 1
      %v1399 = vrot.slane %v668, 1
      %v1400 = vrot.slane %v669, 1
      %v1401 = vrot.slane %v670, 1
      %v1402 = vrot.slane %v671, 1
      %v1403 = vrot.slane %v672, 1
      %v1404 = vrot.slane %v681, 1
      %v1405 = vrot.slane %v682, 1
      %v1406 = vrot.slane %v683, 1
      %v1407 = vrot.slane %v684, 1
      %v1408 = vrot.slane %v685, 1
      %v1409 = vrot.slane %v686, 1
      %v1410 = vrot.slane %v687, 1
      %v1411 = vrot.slane %v688, 1
      %v1412 = vrot.slane %v697, 1
      %v1413 = vrot.slane %v698, 1
      %v1414 = vrot.slane %v699, 1
      %v1415 = vrot.slane %v700, 1
      %v1416 = vrot.slane %v701, 1
      %v1417 = vrot.slane %v702, 1
      %v1418 = vrot.slane %v703, 1
      %v1419 = vrot.slane %v704, 1
      %v1420 = vrot.slane %v713, 1
      %v1421 = vrot.slane %v714, 1
      %v1422 = vrot.slane %v715, 1
      %v1423 = vrot.slane %v716, 1
      %v1424 = vrot.slane %v717, 1
      %v1425 = vrot.slane %v718, 1
      %v1426 = vrot.slane %v719, 1
      %v1427 = vrot.slane %v720, 1
      %v1428 = vrot.slane %v729, 1
      %v1429 = vrot.slane %v730, 1
      %v1430 = vrot.slane %v731, 1
      %v1431 = vrot.slane %v732, 1
      %v1432 = vrot.slane %v733, 1
      %v1433 = vrot.slane %v734, 1
      %v1434 = vrot.slane %v735, 1
      %v1435 = vrot.slane %v736, 1
      %v1436 = vrot.slane %v745, 1
      %v1437 = vrot.slane %v746, 1
      %v1438 = vrot.slane %v747, 1
      %v1439 = vrot.slane %v748, 1
      %v1440 = vrot.slane %v749, 1
      %v1441 = vrot.slane %v750, 1
      %v1442 = vrot.slane %v751, 1
      %v1443 = vrot.slane %v752, 1
      %vm1444 = vcmp.lt.s32.totalorder %v866, 7
      %v1445 = vsel %vm1444, %v1332, %v1388
      %v1446 = vsel %vm1444, %v1333, %v1389
      %v1447 = vsel %vm1444, %v1334, %v1390
      %v1448 = vsel %vm1444, %v1335, %v1391
      %v1449 = vsel %vm1444, %v1336, %v1392
      %v1450 = vsel %vm1444, %v1337, %v1393
      %v1451 = vsel %vm1444, %v1338, %v1394
      %v1452 = vsel %vm1444, %v1339, %v1395
      %v1453 = vsel %vm1444, %v1340, %v1396
      %v1454 = vsel %vm1444, %v1341, %v1397
      %v1455 = vsel %vm1444, %v1342, %v1398
      %v1456 = vsel %vm1444, %v1343, %v1399
      %v1457 = vsel %vm1444, %v1344, %v1400
      %v1458 = vsel %vm1444, %v1345, %v1401
      %v1459 = vsel %vm1444, %v1346, %v1402
      %v1460 = vsel %vm1444, %v1347, %v1403
      %v1461 = vsel %vm1444, %v1348, %v1404
      %v1462 = vsel %vm1444, %v1349, %v1405
      %v1463 = vsel %vm1444, %v1350, %v1406
      %v1464 = vsel %vm1444, %v1351, %v1407
      %v1465 = vsel %vm1444, %v1352, %v1408
      %v1466 = vsel %vm1444, %v1353, %v1409
      %v1467 = vsel %vm1444, %v1354, %v1410
      %v1468 = vsel %vm1444, %v1355, %v1411
      %v1469 = vsel %vm1444, %v1356, %v1412
      %v1470 = vsel %vm1444, %v1357, %v1413
      %v1471 = vsel %vm1444, %v1358, %v1414
      %v1472 = vsel %vm1444, %v1359, %v1415
      %v1473 = vsel %vm1444, %v1360, %v1416
      %v1474 = vsel %vm1444, %v1361, %v1417
      %v1475 = vsel %vm1444, %v1362, %v1418
      %v1476 = vsel %vm1444, %v1363, %v1419
      %v1477 = vsel %vm1444, %v1364, %v1420
      %v1478 = vsel %vm1444, %v1365, %v1421
      %v1479 = vsel %vm1444, %v1366, %v1422
      %v1480 = vsel %vm1444, %v1367, %v1423
      %v1481 = vsel %vm1444, %v1368, %v1424
      %v1482 = vsel %vm1444, %v1369, %v1425
      %v1483 = vsel %vm1444, %v1370, %v1426
      %v1484 = vsel %vm1444, %v1371, %v1427
      %v1485 = vsel %vm1444, %v1372, %v1428
      %v1486 = vsel %vm1444, %v1373, %v1429
      %v1487 = vsel %vm1444, %v1374, %v1430
      %v1488 = vsel %vm1444, %v1375, %v1431
      %v1489 = vsel %vm1444, %v1376, %v1432
      %v1490 = vsel %vm1444, %v1377, %v1433
      %v1491 = vsel %vm1444, %v1378, %v1434
      %v1492 = vsel %vm1444, %v1379, %v1435
      %v1493 = vsel %vm1444, %v1380, %v1436
      %v1494 = vsel %vm1444, %v1381, %v1437
      %v1495 = vsel %vm1444, %v1382, %v1438
      %v1496 = vsel %vm1444, %v1383, %v1439
      %v1497 = vsel %vm1444, %v1384, %v1440
      %v1498 = vsel %vm1444, %v1385, %v1441
      %v1499 = vsel %vm1444, %v1386, %v1442
      %v1500 = vsel %vm1444, %v1387, %v1443
      %v1501 = vsel %vm1444, %v1388, %v1332
      %v1502 = vsel %vm1444, %v1389, %v1333
      %v1503 = vsel %vm1444, %v1390, %v1334
      %v1504 = vsel %vm1444, %v1391, %v1335
      %v1505 = vsel %vm1444, %v1392, %v1336
      %v1506 = vsel %vm1444, %v1393, %v1337
      %v1507 = vsel %vm1444, %v1394, %v1338
      %v1508 = vsel %vm1444, %v1395, %v1339
      %v1509 = vsel %vm1444, %v1396, %v1340
      %v1510 = vsel %vm1444, %v1397, %v1341
      %v1511 = vsel %vm1444, %v1398, %v1342
      %v1512 = vsel %vm1444, %v1399, %v1343
      %v1513 = vsel %vm1444, %v1400, %v1344
      %v1514 = vsel %vm1444, %v1401, %v1345
      %v1515 = vsel %vm1444, %v1402, %v1346
      %v1516 = vsel %vm1444, %v1403, %v1347
      %v1517 = vsel %vm1444, %v1404, %v1348
      %v1518 = vsel %vm1444, %v1405, %v1349
      %v1519 = vsel %vm1444, %v1406, %v1350
      %v1520 = vsel %vm1444, %v1407, %v1351
      %v1521 = vsel %vm1444, %v1408, %v1352
      %v1522 = vsel %vm1444, %v1409, %v1353
      %v1523 = vsel %vm1444, %v1410, %v1354
      %v1524 = vsel %vm1444, %v1411, %v1355
      %v1525 = vsel %vm1444, %v1412, %v1356
      %v1526 = vsel %vm1444, %v1413, %v1357
      %v1527 = vsel %vm1444, %v1414, %v1358
      %v1528 = vsel %vm1444, %v1415, %v1359
      %v1529 = vsel %vm1444, %v1416, %v1360
      %v1530 = vsel %vm1444, %v1417, %v1361
      %v1531 = vsel %vm1444, %v1418, %v1362
      %v1532 = vsel %vm1444, %v1419, %v1363
      %v1533 = vsel %vm1444, %v1420, %v1364
      %v1534 = vsel %vm1444, %v1421, %v1365
      %v1535 = vsel %vm1444, %v1422, %v1366
      %v1536 = vsel %vm1444, %v1423, %v1367
      %v1537 = vsel %vm1444, %v1424, %v1368
      %v1538 = vsel %vm1444, %v1425, %v1369
      %v1539 = vsel %vm1444, %v1426, %v1370
      %v1540 = vsel %vm1444, %v1427, %v1371
      %v1541 = vsel %vm1444, %v1428, %v1372
      %v1542 = vsel %vm1444, %v1429, %v1373
      %v1543 = vsel %vm1444, %v1430, %v1374
      %v1544 = vsel %vm1444, %v1431, %v1375
      %v1545 = vsel %vm1444, %v1432, %v1376
      %v1546 = vsel %vm1444, %v1433, %v1377
      %v1547 = vsel %vm1444, %v1434, %v1378
      %v1548 = vsel %vm1444, %v1435, %v1379
      %v1549 = vsel %vm1444, %v1436, %v1380
      %v1550 = vsel %vm1444, %v1437, %v1381
      %v1551 = vsel %vm1444, %v1438, %v1382
      %v1552 = vsel %vm1444, %v1439, %v1383
      %v1553 = vsel %vm1444, %v1440, %v1384
      %v1554 = vsel %vm1444, %v1441, %v1385
      %v1555 = vsel %vm1444, %v1442, %v1386
      %v1556 = vsel %vm1444, %v1443, %v1387
      %v1557 = vperm.slane %v625, 2
      %v1558 = vperm.slane %v626, 2
      %v1559 = vperm.slane %v627, 2
      %v1560 = vperm.slane %v628, 2
      %v1561 = vperm.slane %v629, 2
      %v1562 = vperm.slane %v630, 2
      %v1563 = vperm.slane %v631, 2
      %v1564 = vperm.slane %v632, 2
      %v1565 = vmul.f32 %v1445, %v1557
      %v1566 = vmul.f32 %v1446, %v1558
      %v1567 = vmul.f32 %v1447, %v1559
      %v1568 = vmul.f32 %v1448, %v1560
      %v1569 = vmul.f32 %v1449, %v1561
      %v1570 = vmul.f32 %v1450, %v1562
      %v1571 = vmul.f32 %v1451, %v1563
      %v1572 = vmul.f32 %v1452, %v1564
      %v1573 = vmul.f32 %v1501, %v1557
      %v1574 = vmul.f32 %v1502, %v1558
      %v1575 = vmul.f32 %v1503, %v1559
      %v1576 = vmul.f32 %v1504, %v1560
      %v1577 = vmul.f32 %v1505, %v1561
      %v1578 = vmul.f32 %v1506, %v1562
      %v1579 = vmul.f32 %v1507, %v1563
      %v1580 = vmul.f32 %v1508, %v1564
      %v1581 = vmul.f32 %v1453, %v1557
      %v1582 = vmul.f32 %v1454, %v1558
      %v1583 = vmul.f32 %v1455, %v1559
      %v1584 = vmul.f32 %v1456, %v1560
      %v1585 = vmul.f32 %v1457, %v1561
      %v1586 = vmul.f32 %v1458, %v1562
      %v1587 = vmul.f32 %v1459, %v1563
      %v1588 = vmul.f32 %v1460, %v1564
      %v1589 = vmul.f32 %v1509, %v1557
      %v1590 = vmul.f32 %v1510, %v1558
      %v1591 = vmul.f32 %v1511, %v1559
      %v1592 = vmul.f32 %v1512, %v1560
      %v1593 = vmul.f32 %v1513, %v1561
      %v1594 = vmul.f32 %v1514, %v1562
      %v1595 = vmul.f32 %v1515, %v1563
      %v1596 = vmul.f32 %v1516, %v1564
      %v1597 = vmul.f32 %v1461, %v1557
      %v1598 = vmul.f32 %v1462, %v1558
      %v1599 = vmul.f32 %v1463, %v1559
      %v1600 = vmul.f32 %v1464, %v1560
      %v1601 = vmul.f32 %v1465, %v1561
      %v1602 = vmul.f32 %v1466, %v1562
      %v1603 = vmul.f32 %v1467, %v1563
      %v1604 = vmul.f32 %v1468, %v1564
      %v1605 = vmul.f32 %v1517, %v1557
      %v1606 = vmul.f32 %v1518, %v1558
      %v1607 = vmul.f32 %v1519, %v1559
      %v1608 = vmul.f32 %v1520, %v1560
      %v1609 = vmul.f32 %v1521, %v1561
      %v1610 = vmul.f32 %v1522, %v1562
      %v1611 = vmul.f32 %v1523, %v1563
      %v1612 = vmul.f32 %v1524, %v1564
      %v1613 = vmul.f32 %v1469, %v1557
      %v1614 = vmul.f32 %v1470, %v1558
      %v1615 = vmul.f32 %v1471, %v1559
      %v1616 = vmul.f32 %v1472, %v1560
      %v1617 = vmul.f32 %v1473, %v1561
      %v1618 = vmul.f32 %v1474, %v1562
      %v1619 = vmul.f32 %v1475, %v1563
      %v1620 = vmul.f32 %v1476, %v1564
      %v1621 = vmul.f32 %v1525, %v1557
      %v1622 = vmul.f32 %v1526, %v1558
      %v1623 = vmul.f32 %v1527, %v1559
      %v1624 = vmul.f32 %v1528, %v1560
      %v1625 = vmul.f32 %v1529, %v1561
      %v1626 = vmul.f32 %v1530, %v1562
      %v1627 = vmul.f32 %v1531, %v1563
      %v1628 = vmul.f32 %v1532, %v1564
      %v1629 = vmul.f32 %v1477, %v1557
      %v1630 = vmul.f32 %v1478, %v1558
      %v1631 = vmul.f32 %v1479, %v1559
      %v1632 = vmul.f32 %v1480, %v1560
      %v1633 = vmul.f32 %v1481, %v1561
      %v1634 = vmul.f32 %v1482, %v1562
      %v1635 = vmul.f32 %v1483, %v1563
      %v1636 = vmul.f32 %v1484, %v1564
      %v1637 = vmul.f32 %v1533, %v1557
      %v1638 = vmul.f32 %v1534, %v1558
      %v1639 = vmul.f32 %v1535, %v1559
      %v1640 = vmul.f32 %v1536, %v1560
      %v1641 = vmul.f32 %v1537, %v1561
      %v1642 = vmul.f32 %v1538, %v1562
      %v1643 = vmul.f32 %v1539, %v1563
      %v1644 = vmul.f32 %v1540, %v1564
      %v1645 = vmul.f32 %v1485, %v1557
      %v1646 = vmul.f32 %v1486, %v1558
      %v1647 = vmul.f32 %v1487, %v1559
      %v1648 = vmul.f32 %v1488, %v1560
      %v1649 = vmul.f32 %v1489, %v1561
      %v1650 = vmul.f32 %v1490, %v1562
      %v1651 = vmul.f32 %v1491, %v1563
      %v1652 = vmul.f32 %v1492, %v1564
      %v1653 = vmul.f32 %v1541, %v1557
      %v1654 = vmul.f32 %v1542, %v1558
      %v1655 = vmul.f32 %v1543, %v1559
      %v1656 = vmul.f32 %v1544, %v1560
      %v1657 = vmul.f32 %v1545, %v1561
      %v1658 = vmul.f32 %v1546, %v1562
      %v1659 = vmul.f32 %v1547, %v1563
      %v1660 = vmul.f32 %v1548, %v1564
      %v1661 = vmul.f32 %v1493, %v1557
      %v1662 = vmul.f32 %v1494, %v1558
      %v1663 = vmul.f32 %v1495, %v1559
      %v1664 = vmul.f32 %v1496, %v1560
      %v1665 = vmul.f32 %v1497, %v1561
      %v1666 = vmul.f32 %v1498, %v1562
      %v1667 = vmul.f32 %v1499, %v1563
      %v1668 = vmul.f32 %v1500, %v1564
      %v1669 = vmul.f32 %v1549, %v1557
      %v1670 = vmul.f32 %v1550, %v1558
      %v1671 = vmul.f32 %v1551, %v1559
      %v1672 = vmul.f32 %v1552, %v1560
      %v1673 = vmul.f32 %v1553, %v1561
      %v1674 = vmul.f32 %v1554, %v1562
      %v1675 = vmul.f32 %v1555, %v1563
      %v1676 = vmul.f32 %v1556, %v1564
      %v1677 = vadd.f32 %v1220, %v1565
      %v1678 = vadd.f32 %v1221, %v1566
      %v1679 = vadd.f32 %v1222, %v1567
      %v1680 = vadd.f32 %v1223, %v1568
      %v1681 = vadd.f32 %v1224, %v1569
      %v1682 = vadd.f32 %v1225, %v1570
      %v1683 = vadd.f32 %v1226, %v1571
      %v1684 = vadd.f32 %v1227, %v1572
      %v1685 = vadd.f32 %v1228, %v1573
      %v1686 = vadd.f32 %v1229, %v1574
      %v1687 = vadd.f32 %v1230, %v1575
      %v1688 = vadd.f32 %v1231, %v1576
      %v1689 = vadd.f32 %v1232, %v1577
      %v1690 = vadd.f32 %v1233, %v1578
      %v1691 = vadd.f32 %v1234, %v1579
      %v1692 = vadd.f32 %v1235, %v1580
      %v1693 = vadd.f32 %v1236, %v1581
      %v1694 = vadd.f32 %v1237, %v1582
      %v1695 = vadd.f32 %v1238, %v1583
      %v1696 = vadd.f32 %v1239, %v1584
      %v1697 = vadd.f32 %v1240, %v1585
      %v1698 = vadd.f32 %v1241, %v1586
      %v1699 = vadd.f32 %v1242, %v1587
      %v1700 = vadd.f32 %v1243, %v1588
      %v1701 = vadd.f32 %v1244, %v1589
      %v1702 = vadd.f32 %v1245, %v1590
      %v1703 = vadd.f32 %v1246, %v1591
      %v1704 = vadd.f32 %v1247, %v1592
      %v1705 = vadd.f32 %v1248, %v1593
      %v1706 = vadd.f32 %v1249, %v1594
      %v1707 = vadd.f32 %v1250, %v1595
      %v1708 = vadd.f32 %v1251, %v1596
      %v1709 = vadd.f32 %v1252, %v1597
      %v1710 = vadd.f32 %v1253, %v1598
      %v1711 = vadd.f32 %v1254, %v1599
      %v1712 = vadd.f32 %v1255, %v1600
      %v1713 = vadd.f32 %v1256, %v1601
      %v1714 = vadd.f32 %v1257, %v1602
      %v1715 = vadd.f32 %v1258, %v1603
      %v1716 = vadd.f32 %v1259, %v1604
      %v1717 = vadd.f32 %v1260, %v1605
      %v1718 = vadd.f32 %v1261, %v1606
      %v1719 = vadd.f32 %v1262, %v1607
      %v1720 = vadd.f32 %v1263, %v1608
      %v1721 = vadd.f32 %v1264, %v1609
      %v1722 = vadd.f32 %v1265, %v1610
      %v1723 = vadd.f32 %v1266, %v1611
      %v1724 = vadd.f32 %v1267, %v1612
      %v1725 = vadd.f32 %v1268, %v1613
      %v1726 = vadd.f32 %v1269, %v1614
      %v1727 = vadd.f32 %v1270, %v1615
      %v1728 = vadd.f32 %v1271, %v1616
      %v1729 = vadd.f32 %v1272, %v1617
      %v1730 = vadd.f32 %v1273, %v1618
      %v1731 = vadd.f32 %v1274, %v1619
      %v1732 = vadd.f32 %v1275, %v1620
      %v1733 = vadd.f32 %v1276, %v1621
      %v1734 = vadd.f32 %v1277, %v1622
      %v1735 = vadd.f32 %v1278, %v1623
      %v1736 = vadd.f32 %v1279, %v1624
      %v1737 = vadd.f32 %v1280, %v1625
      %v1738 = vadd.f32 %v1281, %v1626
      %v1739 = vadd.f32 %v1282, %v1627
      %v1740 = vadd.f32 %v1283, %v1628
      %v1741 = vadd.f32 %v1284, %v1629
      %v1742 = vadd.f32 %v1285, %v1630
      %v1743 = vadd.f32 %v1286, %v1631
      %v1744 = vadd.f32 %v1287, %v1632
      %v1745 = vadd.f32 %v1288, %v1633
      %v1746 = vadd.f32 %v1289, %v1634
      %v1747 = vadd.f32 %v1290, %v1635
      %v1748 = vadd.f32 %v1291, %v1636
      %v1749 = vadd.f32 %v1292, %v1637
      %v1750 = vadd.f32 %v1293, %v1638
      %v1751 = vadd.f32 %v1294, %v1639
      %v1752 = vadd.f32 %v1295, %v1640
      %v1753 = vadd.f32 %v1296, %v1641
      %v1754 = vadd.f32 %v1297, %v1642
      %v1755 = vadd.f32 %v1298, %v1643
      %v1756 = vadd.f32 %v1299, %v1644
      %v1757 = vadd.f32 %v1300, %v1645
      %v1758 = vadd.f32 %v1301, %v1646
      %v1759 = vadd.f32 %v1302, %v1647
      %v1760 = vadd.f32 %v1303, %v1648
      %v1761 = vadd.f32 %v1304, %v1649
      %v1762 = vadd.f32 %v1305, %v1650
      %v1763 = vadd.f32 %v1306, %v1651
      %v1764 = vadd.f32 %v1307, %v1652
      %v1765 = vadd.f32 %v1308, %v1653
      %v1766 = vadd.f32 %v1309, %v1654
      %v1767 = vadd.f32 %v1310, %v1655
      %v1768 = vadd.f32 %v1311, %v1656
      %v1769 = vadd.f32 %v1312, %v1657
      %v1770 = vadd.f32 %v1313, %v1658
      %v1771 = vadd.f32 %v1314, %v1659
      %v1772 = vadd.f32 %v1315, %v1660
      %v1773 = vadd.f32 %v1316, %v1661
      %v1774 = vadd.f32 %v1317, %v1662
      %v1775 = vadd.f32 %v1318, %v1663
      %v1776 = vadd.f32 %v1319, %v1664
      %v1777 = vadd.f32 %v1320, %v1665
      %v1778 = vadd.f32 %v1321, %v1666
      %v1779 = vadd.f32 %v1322, %v1667
      %v1780 = vadd.f32 %v1323, %v1668
      %v1781 = vadd.f32 %v1324, %v1669
      %v1782 = vadd.f32 %v1325, %v1670
      %v1783 = vadd.f32 %v1326, %v1671
      %v1784 = vadd.f32 %v1327, %v1672
      %v1785 = vadd.f32 %v1328, %v1673
      %v1786 = vadd.f32 %v1329, %v1674
      %v1787 = vadd.f32 %v1330, %v1675
      %v1788 = vadd.f32 %v1331, %v1676
      %v1789 = vld [vmem:[%s430] sm:$0xff]
      %v1790 = vld [vmem:[%s430 + $0x8] sm:$0xff]
      %v1791 = vld [vmem:[%s430 + $0x10] sm:$0xff]
      %v1792 = vld [vmem:[%s430 + $0x18] sm:$0xff]
      %v1793 = vld [vmem:[%s430 + $0x20] sm:$0xff]
      %v1794 = vld [vmem:[%s430 + $0x28] sm:$0xff]
      %v1795 = vld [vmem:[%s430 + $0x30] sm:$0xff]
      %v1796 = vld [vmem:[%s430 + $0x38] sm:$0xff]
      %v1797 = vld [vmem:[%s430 + $0x40] sm:$0xff]
      %v1798 = vld [vmem:[%s430 + $0x48] sm:$0xff]
      %v1799 = vld [vmem:[%s430 + $0x50] sm:$0xff]
      %v1800 = vld [vmem:[%s430 + $0x58] sm:$0xff]
      %v1801 = vld [vmem:[%s430 + $0x60] sm:$0xff]
      %v1802 = vld [vmem:[%s430 + $0x68] sm:$0xff]
      %v1803 = vld [vmem:[%s430 + $0x70] sm:$0xff]
      %v1804 = vld [vmem:[%s430 + $0x78] sm:$0xff]
      %v1805 = vld [vmem:[%s430 + $0x80] sm:$0xff]
      %v1806 = vld [vmem:[%s430 + $0x88] sm:$0xff]
      %v1807 = vld [vmem:[%s430 + $0x90] sm:$0xff]
      %v1808 = vld [vmem:[%s430 + $0x98] sm:$0xff]
      %v1809 = vld [vmem:[%s430 + $0xa0] sm:$0xff]
      %v1810 = vld [vmem:[%s430 + $0xa8] sm:$0xff]
      %v1811 = vld [vmem:[%s430 + $0xb0] sm:$0xff]
      %v1812 = vld [vmem:[%s430 + $0xb8] sm:$0xff]
      %v1813 = vld [vmem:[%s430 + $0xc0] sm:$0xff]
      %v1814 = vld [vmem:[%s430 + $0xc8] sm:$0xff]
      %v1815 = vld [vmem:[%s430 + $0xd0] sm:$0xff]
      %v1816 = vld [vmem:[%s430 + $0xd8] sm:$0xff]
      %v1817 = vld [vmem:[%s430 + $0xe0] sm:$0xff]
      %v1818 = vld [vmem:[%s430 + $0xe8] sm:$0xff]
      %v1819 = vld [vmem:[%s430 + $0xf0] sm:$0xff]
      %v1820 = vld [vmem:[%s430 + $0xf8] sm:$0xff]
      %v1821 = vld [vmem:[%s430 + $0x100] sm:$0xff]
      %v1822 = vld [vmem:[%s430 + $0x108] sm:$0xff]
      %v1823 = vld [vmem:[%s430 + $0x110] sm:$0xff]
      %v1824 = vld [vmem:[%s430 + $0x118] sm:$0xff]
      %v1825 = vld [vmem:[%s430 + $0x120] sm:$0xff]
      %v1826 = vld [vmem:[%s430 + $0x128] sm:$0xff]
      %v1827 = vld [vmem:[%s430 + $0x130] sm:$0xff]
      %v1828 = vld [vmem:[%s430 + $0x138] sm:$0xff]
      %v1829 = vld [vmem:[%s430 + $0x140] sm:$0xff]
      %v1830 = vld [vmem:[%s430 + $0x148] sm:$0xff]
      %v1831 = vld [vmem:[%s430 + $0x150] sm:$0xff]
      %v1832 = vld [vmem:[%s430 + $0x158] sm:$0xff]
      %v1833 = vld [vmem:[%s430 + $0x160] sm:$0xff]
      %v1834 = vld [vmem:[%s430 + $0x168] sm:$0xff]
      %v1835 = vld [vmem:[%s430 + $0x170] sm:$0xff]
      %v1836 = vld [vmem:[%s430 + $0x178] sm:$0xff]
      %v1837 = vld [vmem:[%s430 + $0x180] sm:$0xff]
      %v1838 = vld [vmem:[%s430 + $0x188] sm:$0xff]
      %v1839 = vld [vmem:[%s430 + $0x190] sm:$0xff]
      %v1840 = vld [vmem:[%s430 + $0x198] sm:$0xff]
      %v1841 = vld [vmem:[%s430 + $0x1a0] sm:$0xff]
      %v1842 = vld [vmem:[%s430 + $0x1a8] sm:$0xff]
      %v1843 = vld [vmem:[%s430 + $0x1b0] sm:$0xff]
      %v1844 = vld [vmem:[%s430 + $0x1b8] sm:$0xff]
      %v1845 = vld [vmem:[%s430 + $0x1c0] sm:$0xff]
      %v1846 = vld [vmem:[%s430 + $0x1c8] sm:$0xff]
      %v1847 = vld [vmem:[%s430 + $0x1d0] sm:$0xff]
      %v1848 = vld [vmem:[%s430 + $0x1d8] sm:$0xff]
      %v1849 = vld [vmem:[%s430 + $0x1e0] sm:$0xff]
      %v1850 = vld [vmem:[%s430 + $0x1e8] sm:$0xff]
      %v1851 = vld [vmem:[%s430 + $0x1f0] sm:$0xff]
      %v1852 = vld [vmem:[%s430 + $0x1f8] sm:$0xff]
      %v1853 = vld [vmem:[%s430 + $0x200] sm:$0xff]
      %v1854 = vld [vmem:[%s430 + $0x208] sm:$0xff]
      %v1855 = vld [vmem:[%s430 + $0x210] sm:$0xff]
      %v1856 = vld [vmem:[%s430 + $0x218] sm:$0xff]
      %v1857 = vld [vmem:[%s430 + $0x220] sm:$0xff]
      %v1858 = vld [vmem:[%s430 + $0x228] sm:$0xff]
      %v1859 = vld [vmem:[%s430 + $0x230] sm:$0xff]
      %v1860 = vld [vmem:[%s430 + $0x238] sm:$0xff]
      %v1861 = vld [vmem:[%s430 + $0x240] sm:$0xff]
      %v1862 = vld [vmem:[%s430 + $0x248] sm:$0xff]
      %v1863 = vld [vmem:[%s430 + $0x250] sm:$0xff]
      %v1864 = vld [vmem:[%s430 + $0x258] sm:$0xff]
      %v1865 = vld [vmem:[%s430 + $0x260] sm:$0xff]
      %v1866 = vld [vmem:[%s430 + $0x268] sm:$0xff]
      %v1867 = vld [vmem:[%s430 + $0x270] sm:$0xff]
      %v1868 = vld [vmem:[%s430 + $0x278] sm:$0xff]
      %v1869 = vld [vmem:[%s430 + $0x280] sm:$0xff]
      %v1870 = vld [vmem:[%s430 + $0x288] sm:$0xff]
      %v1871 = vld [vmem:[%s430 + $0x290] sm:$0xff]
      %v1872 = vld [vmem:[%s430 + $0x298] sm:$0xff]
      %v1873 = vld [vmem:[%s430 + $0x2a0] sm:$0xff]
      %v1874 = vld [vmem:[%s430 + $0x2a8] sm:$0xff]
      %v1875 = vld [vmem:[%s430 + $0x2b0] sm:$0xff]
      %v1876 = vld [vmem:[%s430 + $0x2b8] sm:$0xff]
      %v1877 = vld [vmem:[%s430 + $0x2c0] sm:$0xff]
      %v1878 = vld [vmem:[%s430 + $0x2c8] sm:$0xff]
      %v1879 = vld [vmem:[%s430 + $0x2d0] sm:$0xff]
      %v1880 = vld [vmem:[%s430 + $0x2d8] sm:$0xff]
      %v1881 = vld [vmem:[%s430 + $0x2e0] sm:$0xff]
      %v1882 = vld [vmem:[%s430 + $0x2e8] sm:$0xff]
      %v1883 = vld [vmem:[%s430 + $0x2f0] sm:$0xff]
      %v1884 = vld [vmem:[%s430 + $0x2f8] sm:$0xff]
      %v1885 = vld [vmem:[%s430 + $0x300] sm:$0xff]
      %v1886 = vld [vmem:[%s430 + $0x308] sm:$0xff]
      %v1887 = vld [vmem:[%s430 + $0x310] sm:$0xff]
      %v1888 = vld [vmem:[%s430 + $0x318] sm:$0xff]
      %v1889 = vld [vmem:[%s430 + $0x320] sm:$0xff]
      %v1890 = vld [vmem:[%s430 + $0x328] sm:$0xff]
      %v1891 = vld [vmem:[%s430 + $0x330] sm:$0xff]
      %v1892 = vld [vmem:[%s430 + $0x338] sm:$0xff]
      %v1893 = vld [vmem:[%s430 + $0x340] sm:$0xff]
      %v1894 = vld [vmem:[%s430 + $0x348] sm:$0xff]
      %v1895 = vld [vmem:[%s430 + $0x350] sm:$0xff]
      %v1896 = vld [vmem:[%s430 + $0x358] sm:$0xff]
      %v1897 = vld [vmem:[%s430 + $0x360] sm:$0xff]
      %v1898 = vld [vmem:[%s430 + $0x368] sm:$0xff]
      %v1899 = vld [vmem:[%s430 + $0x370] sm:$0xff]
      %v1900 = vld [vmem:[%s430 + $0x378] sm:$0xff]
      %v1901 = vrot.slane %v1789, 7
      %v1902 = vrot.slane %v1790, 7
      %v1903 = vrot.slane %v1791, 7
      %v1904 = vrot.slane %v1792, 7
      %v1905 = vrot.slane %v1793, 7
      %v1906 = vrot.slane %v1794, 7
      %v1907 = vrot.slane %v1795, 7
      %v1908 = vrot.slane %v1796, 7
      %v1909 = vrot.slane %v1805, 7
      %v1910 = vrot.slane %v1806, 7
      %v1911 = vrot.slane %v1807, 7
      %v1912 = vrot.slane %v1808, 7
      %v1913 = vrot.slane %v1809, 7
      %v1914 = vrot.slane %v1810, 7
      %v1915 = vrot.slane %v1811, 7
      %v1916 = vrot.slane %v1812, 7
      %v1917 = vrot.slane %v1821, 7
      %v1918 = vrot.slane %v1822, 7
      %v1919 = vrot.slane %v1823, 7
      %v1920 = vrot.slane %v1824, 7
      %v1921 = vrot.slane %v1825, 7
      %v1922 = vrot.slane %v1826, 7
      %v1923 = vrot.slane %v1827, 7
      %v1924 = vrot.slane %v1828, 7
      %v1925 = vrot.slane %v1837, 7
      %v1926 = vrot.slane %v1838, 7
      %v1927 = vrot.slane %v1839, 7
      %v1928 = vrot.slane %v1840, 7
      %v1929 = vrot.slane %v1841, 7
      %v1930 = vrot.slane %v1842, 7
      %v1931 = vrot.slane %v1843, 7
      %v1932 = vrot.slane %v1844, 7
      %v1933 = vrot.slane %v1853, 7
      %v1934 = vrot.slane %v1854, 7
      %v1935 = vrot.slane %v1855, 7
      %v1936 = vrot.slane %v1856, 7
      %v1937 = vrot.slane %v1857, 7
      %v1938 = vrot.slane %v1858, 7
      %v1939 = vrot.slane %v1859, 7
      %v1940 = vrot.slane %v1860, 7
      %v1941 = vrot.slane %v1869, 7
      %v1942 = vrot.slane %v1870, 7
      %v1943 = vrot.slane %v1871, 7
      %v1944 = vrot.slane %v1872, 7
      %v1945 = vrot.slane %v1873, 7
      %v1946 = vrot.slane %v1874, 7
      %v1947 = vrot.slane %v1875, 7
      %v1948 = vrot.slane %v1876, 7
      %v1949 = vrot.slane %v1885, 7
      %v1950 = vrot.slane %v1886, 7
      %v1951 = vrot.slane %v1887, 7
      %v1952 = vrot.slane %v1888, 7
      %v1953 = vrot.slane %v1889, 7
      %v1954 = vrot.slane %v1890, 7
      %v1955 = vrot.slane %v1891, 7
      %v1956 = vrot.slane %v1892, 7
      %v1957 = vrot.slane %v1797, 7
      %v1958 = vrot.slane %v1798, 7
      %v1959 = vrot.slane %v1799, 7
      %v1960 = vrot.slane %v1800, 7
      %v1961 = vrot.slane %v1801, 7
      %v1962 = vrot.slane %v1802, 7
      %v1963 = vrot.slane %v1803, 7
      %v1964 = vrot.slane %v1804, 7
      %v1965 = vrot.slane %v1813, 7
      %v1966 = vrot.slane %v1814, 7
      %v1967 = vrot.slane %v1815, 7
      %v1968 = vrot.slane %v1816, 7
      %v1969 = vrot.slane %v1817, 7
      %v1970 = vrot.slane %v1818, 7
      %v1971 = vrot.slane %v1819, 7
      %v1972 = vrot.slane %v1820, 7
      %v1973 = vrot.slane %v1829, 7
      %v1974 = vrot.slane %v1830, 7
      %v1975 = vrot.slane %v1831, 7
      %v1976 = vrot.slane %v1832, 7
      %v1977 = vrot.slane %v1833, 7
      %v1978 = vrot.slane %v1834, 7
      %v1979 = vrot.slane %v1835, 7
      %v1980 = vrot.slane %v1836, 7
      %v1981 = vrot.slane %v1845, 7
      %v1982 = vrot.slane %v1846, 7
      %v1983 = vrot.slane %v1847, 7
      %v1984 = vrot.slane %v1848, 7
      %v1985 = vrot.slane %v1849, 7
      %v1986 = vrot.slane %v1850, 7
      %v1987 = vrot.slane %v1851, 7
      %v1988 = vrot.slane %v1852, 7
      %v1989 = vrot.slane %v1861, 7
      %v1990 = vrot.slane %v1862, 7
      %v1991 = vrot.slane %v1863, 7
      %v1992 = vrot.slane %v1864, 7
      %v1993 = vrot.slane %v1865, 7
      %v1994 = vrot.slane %v1866, 7
      %v1995 = vrot.slane %v1867, 7
      %v1996 = vrot.slane %v1868, 7
      %v1997 = vrot.slane %v1877, 7
      %v1998 = vrot.slane %v1878, 7
      %v1999 = vrot.slane %v1879, 7
      %v2000 = vrot.slane %v1880, 7
      %v2001 = vrot.slane %v1881, 7
      %v2002 = vrot.slane %v1882, 7
      %v2003 = vrot.slane %v1883, 7
      %v2004 = vrot.slane %v1884, 7
      %v2005 = vrot.slane %v1893, 7
      %v2006 = vrot.slane %v1894, 7
      %v2007 = vrot.slane %v1895, 7
      %v2008 = vrot.slane %v1896, 7
      %v2009 = vrot.slane %v1897, 7
      %v2010 = vrot.slane %v1898, 7
      %v2011 = vrot.slane %v1899, 7
      %v2012 = vrot.slane %v1900, 7
      %v2013 = vsel %vm867, %v1901, %v1957
      %v2014 = vsel %vm867, %v1902, %v1958
      %v2015 = vsel %vm867, %v1903, %v1959
      %v2016 = vsel %vm867, %v1904, %v1960
      %v2017 = vsel %vm867, %v1905, %v1961
      %v2018 = vsel %vm867, %v1906, %v1962
      %v2019 = vsel %vm867, %v1907, %v1963
      %v2020 = vsel %vm867, %v1908, %v1964
      %v2021 = vsel %vm867, %v1909, %v1965
      %v2022 = vsel %vm867, %v1910, %v1966
      %v2023 = vsel %vm867, %v1911, %v1967
      %v2024 = vsel %vm867, %v1912, %v1968
      %v2025 = vsel %vm867, %v1913, %v1969
      %v2026 = vsel %vm867, %v1914, %v1970
      %v2027 = vsel %vm867, %v1915, %v1971
      %v2028 = vsel %vm867, %v1916, %v1972
      %v2029 = vsel %vm867, %v1917, %v1973
      %v2030 = vsel %vm867, %v1918, %v1974
      %v2031 = vsel %vm867, %v1919, %v1975
      %v2032 = vsel %vm867, %v1920, %v1976
      %v2033 = vsel %vm867, %v1921, %v1977
      %v2034 = vsel %vm867, %v1922, %v1978
      %v2035 = vsel %vm867, %v1923, %v1979
      %v2036 = vsel %vm867, %v1924, %v1980
      %v2037 = vsel %vm867, %v1925, %v1981
      %v2038 = vsel %vm867, %v1926, %v1982
      %v2039 = vsel %vm867, %v1927, %v1983
      %v2040 = vsel %vm867, %v1928, %v1984
      %v2041 = vsel %vm867, %v1929, %v1985
      %v2042 = vsel %vm867, %v1930, %v1986
      %v2043 = vsel %vm867, %v1931, %v1987
      %v2044 = vsel %vm867, %v1932, %v1988
      %v2045 = vsel %vm867, %v1933, %v1989
      %v2046 = vsel %vm867, %v1934, %v1990
      %v2047 = vsel %vm867, %v1935, %v1991
      %v2048 = vsel %vm867, %v1936, %v1992
      %v2049 = vsel %vm867, %v1937, %v1993
      %v2050 = vsel %vm867, %v1938, %v1994
      %v2051 = vsel %vm867, %v1939, %v1995
      %v2052 = vsel %vm867, %v1940, %v1996
      %v2053 = vsel %vm867, %v1941, %v1997
      %v2054 = vsel %vm867, %v1942, %v1998
      %v2055 = vsel %vm867, %v1943, %v1999
      %v2056 = vsel %vm867, %v1944, %v2000
      %v2057 = vsel %vm867, %v1945, %v2001
      %v2058 = vsel %vm867, %v1946, %v2002
      %v2059 = vsel %vm867, %v1947, %v2003
      %v2060 = vsel %vm867, %v1948, %v2004
      %v2061 = vsel %vm867, %v1949, %v2005
      %v2062 = vsel %vm867, %v1950, %v2006
      %v2063 = vsel %vm867, %v1951, %v2007
      %v2064 = vsel %vm867, %v1952, %v2008
      %v2065 = vsel %vm867, %v1953, %v2009
      %v2066 = vsel %vm867, %v1954, %v2010
      %v2067 = vsel %vm867, %v1955, %v2011
      %v2068 = vsel %vm867, %v1956, %v2012
      %v2069 = vsel %vm867, %v1957, %v1901
      %v2070 = vsel %vm867, %v1958, %v1902
      %v2071 = vsel %vm867, %v1959, %v1903
      %v2072 = vsel %vm867, %v1960, %v1904
      %v2073 = vsel %vm867, %v1961, %v1905
      %v2074 = vsel %vm867, %v1962, %v1906
      %v2075 = vsel %vm867, %v1963, %v1907
      %v2076 = vsel %vm867, %v1964, %v1908
      %v2077 = vsel %vm867, %v1965, %v1909
      %v2078 = vsel %vm867, %v1966, %v1910
      %v2079 = vsel %vm867, %v1967, %v1911
      %v2080 = vsel %vm867, %v1968, %v1912
      %v2081 = vsel %vm867, %v1969, %v1913
      %v2082 = vsel %vm867, %v1970, %v1914
      %v2083 = vsel %vm867, %v1971, %v1915
      %v2084 = vsel %vm867, %v1972, %v1916
      %v2085 = vsel %vm867, %v1973, %v1917
      %v2086 = vsel %vm867, %v1974, %v1918
      %v2087 = vsel %vm867, %v1975, %v1919
      %v2088 = vsel %vm867, %v1976, %v1920
      %v2089 = vsel %vm867, %v1977, %v1921
      %v2090 = vsel %vm867, %v1978, %v1922
      %v2091 = vsel %vm867, %v1979, %v1923
      %v2092 = vsel %vm867, %v1980, %v1924
      %v2093 = vsel %vm867, %v1981, %v1925
      %v2094 = vsel %vm867, %v1982, %v1926
      %v2095 = vsel %vm867, %v1983, %v1927
      %v2096 = vsel %vm867, %v1984, %v1928
      %v2097 = vsel %vm867, %v1985, %v1929
      %v2098 = vsel %vm867, %v1986, %v1930
      %v2099 = vsel %vm867, %v1987, %v1931
      %v2100 = vsel %vm867, %v1988, %v1932
      %v2101 = vsel %vm867, %v1989, %v1933
      %v2102 = vsel %vm867, %v1990, %v1934
      %v2103 = vsel %vm867, %v1991, %v1935
      %v2104 = vsel %vm867, %v1992, %v1936
      %v2105 = vsel %vm867, %v1993, %v1937
      %v2106 = vsel %vm867, %v1994, %v1938
      %v2107 = vsel %vm867, %v1995, %v1939
      %v2108 = vsel %vm867, %v1996, %v1940
      %v2109 = vsel %vm867, %v1997, %v1941
      %v2110 = vsel %vm867, %v1998, %v1942
      %v2111 = vsel %vm867, %v1999, %v1943
      %v2112 = vsel %vm867, %v2000, %v1944
      %v2113 = vsel %vm867, %v2001, %v1945
      %v2114 = vsel %vm867, %v2002, %v1946
      %v2115 = vsel %vm867, %v2003, %v1947
      %v2116 = vsel %vm867, %v2004, %v1948
      %v2117 = vsel %vm867, %v2005, %v1949
      %v2118 = vsel %vm867, %v2006, %v1950
      %v2119 = vsel %vm867, %v2007, %v1951
      %v2120 = vsel %vm867, %v2008, %v1952
      %v2121 = vsel %vm867, %v2009, %v1953
      %v2122 = vsel %vm867, %v2010, %v1954
      %v2123 = vsel %vm867, %v2011, %v1955
      %v2124 = vsel %vm867, %v2012, %v1956
      %v2125 = vperm.slane %v625, 3
      %v2126 = vperm.slane %v626, 3
      %v2127 = vperm.slane %v627, 3
      %v2128 = vperm.slane %v628, 3
      %v2129 = vperm.slane %v629, 3
      %v2130 = vperm.slane %v630, 3
      %v2131 = vperm.slane %v631, 3
      %v2132 = vperm.slane %v632, 3
      %v2133 = vmul.f32 %v2069, %v2125
      %v2134 = vmul.f32 %v2070, %v2126
      %v2135 = vmul.f32 %v2071, %v2127
      %v2136 = vmul.f32 %v2072, %v2128
      %v2137 = vmul.f32 %v2073, %v2129
      %v2138 = vmul.f32 %v2074, %v2130
      %v2139 = vmul.f32 %v2075, %v2131
      %v2140 = vmul.f32 %v2076, %v2132
      %v2141 = vmul.f32 %v2013, %v2125
      %v2142 = vmul.f32 %v2014, %v2126
      %v2143 = vmul.f32 %v2015, %v2127
      %v2144 = vmul.f32 %v2016, %v2128
      %v2145 = vmul.f32 %v2017, %v2129
      %v2146 = vmul.f32 %v2018, %v2130
      %v2147 = vmul.f32 %v2019, %v2131
      %v2148 = vmul.f32 %v2020, %v2132
      %v2149 = vmul.f32 %v2077, %v2125
      %v2150 = vmul.f32 %v2078, %v2126
      %v2151 = vmul.f32 %v2079, %v2127
      %v2152 = vmul.f32 %v2080, %v2128
      %v2153 = vmul.f32 %v2081, %v2129
      %v2154 = vmul.f32 %v2082, %v2130
      %v2155 = vmul.f32 %v2083, %v2131
      %v2156 = vmul.f32 %v2084, %v2132
      %v2157 = vmul.f32 %v2021, %v2125
      %v2158 = vmul.f32 %v2022, %v2126
      %v2159 = vmul.f32 %v2023, %v2127
      %v2160 = vmul.f32 %v2024, %v2128
      %v2161 = vmul.f32 %v2025, %v2129
      %v2162 = vmul.f32 %v2026, %v2130
      %v2163 = vmul.f32 %v2027, %v2131
      %v2164 = vmul.f32 %v2028, %v2132
      %v2165 = vmul.f32 %v2085, %v2125
      %v2166 = vmul.f32 %v2086, %v2126
      %v2167 = vmul.f32 %v2087, %v2127
      %v2168 = vmul.f32 %v2088, %v2128
      %v2169 = vmul.f32 %v2089, %v2129
      %v2170 = vmul.f32 %v2090, %v2130
      %v2171 = vmul.f32 %v2091, %v2131
      %v2172 = vmul.f32 %v2092, %v2132
      %v2173 = vmul.f32 %v2029, %v2125
      %v2174 = vmul.f32 %v2030, %v2126
      %v2175 = vmul.f32 %v2031, %v2127
      %v2176 = vmul.f32 %v2032, %v2128
      %v2177 = vmul.f32 %v2033, %v2129
      %v2178 = vmul.f32 %v2034, %v2130
      %v2179 = vmul.f32 %v2035, %v2131
      %v2180 = vmul.f32 %v2036, %v2132
      %v2181 = vmul.f32 %v2093, %v2125
      %v2182 = vmul.f32 %v2094, %v2126
      %v2183 = vmul.f32 %v2095, %v2127
      %v2184 = vmul.f32 %v2096, %v2128
      %v2185 = vmul.f32 %v2097, %v2129
      %v2186 = vmul.f32 %v2098, %v2130
      %v2187 = vmul.f32 %v2099, %v2131
      %v2188 = vmul.f32 %v2100, %v2132
      %v2189 = vmul.f32 %v2037, %v2125
      %v2190 = vmul.f32 %v2038, %v2126
      %v2191 = vmul.f32 %v2039, %v2127
      %v2192 = vmul.f32 %v2040, %v2128
      %v2193 = vmul.f32 %v2041, %v2129
      %v2194 = vmul.f32 %v2042, %v2130
      %v2195 = vmul.f32 %v2043, %v2131
      %v2196 = vmul.f32 %v2044, %v2132
      %v2197 = vmul.f32 %v2101, %v2125
      %v2198 = vmul.f32 %v2102, %v2126
      %v2199 = vmul.f32 %v2103, %v2127
      %v2200 = vmul.f32 %v2104, %v2128
      %v2201 = vmul.f32 %v2105, %v2129
      %v2202 = vmul.f32 %v2106, %v2130
      %v2203 = vmul.f32 %v2107, %v2131
      %v2204 = vmul.f32 %v2108, %v2132
      %v2205 = vmul.f32 %v2045, %v2125
      %v2206 = vmul.f32 %v2046, %v2126
      %v2207 = vmul.f32 %v2047, %v2127
      %v2208 = vmul.f32 %v2048, %v2128
      %v2209 = vmul.f32 %v2049, %v2129
      %v2210 = vmul.f32 %v2050, %v2130
      %v2211 = vmul.f32 %v2051, %v2131
      %v2212 = vmul.f32 %v2052, %v2132
      %v2213 = vmul.f32 %v2109, %v2125
      %v2214 = vmul.f32 %v2110, %v2126
      %v2215 = vmul.f32 %v2111, %v2127
      %v2216 = vmul.f32 %v2112, %v2128
      %v2217 = vmul.f32 %v2113, %v2129
      %v2218 = vmul.f32 %v2114, %v2130
      %v2219 = vmul.f32 %v2115, %v2131
      %v2220 = vmul.f32 %v2116, %v2132
      %v2221 = vmul.f32 %v2053, %v2125
      %v2222 = vmul.f32 %v2054, %v2126
      %v2223 = vmul.f32 %v2055, %v2127
      %v2224 = vmul.f32 %v2056, %v2128
      %v2225 = vmul.f32 %v2057, %v2129
      %v2226 = vmul.f32 %v2058, %v2130
      %v2227 = vmul.f32 %v2059, %v2131
      %v2228 = vmul.f32 %v2060, %v2132
      %v2229 = vmul.f32 %v2117, %v2125
      %v2230 = vmul.f32 %v2118, %v2126
      %v2231 = vmul.f32 %v2119, %v2127
      %v2232 = vmul.f32 %v2120, %v2128
      %v2233 = vmul.f32 %v2121, %v2129
      %v2234 = vmul.f32 %v2122, %v2130
      %v2235 = vmul.f32 %v2123, %v2131
      %v2236 = vmul.f32 %v2124, %v2132
      %v2237 = vmul.f32 %v2061, %v2125
      %v2238 = vmul.f32 %v2062, %v2126
      %v2239 = vmul.f32 %v2063, %v2127
      %v2240 = vmul.f32 %v2064, %v2128
      %v2241 = vmul.f32 %v2065, %v2129
      %v2242 = vmul.f32 %v2066, %v2130
      %v2243 = vmul.f32 %v2067, %v2131
      %v2244 = vmul.f32 %v2068, %v2132
      %v2245 = vadd.f32 %v1677, %v2133
      %v2246 = vadd.f32 %v1678, %v2134
      %v2247 = vadd.f32 %v1679, %v2135
      %v2248 = vadd.f32 %v1680, %v2136
      %v2249 = vadd.f32 %v1681, %v2137
      %v2250 = vadd.f32 %v1682, %v2138
      %v2251 = vadd.f32 %v1683, %v2139
      %v2252 = vadd.f32 %v1684, %v2140
      %v2253 = vadd.f32 %v1685, %v2141
      %v2254 = vadd.f32 %v1686, %v2142
      %v2255 = vadd.f32 %v1687, %v2143
      %v2256 = vadd.f32 %v1688, %v2144
      %v2257 = vadd.f32 %v1689, %v2145
      %v2258 = vadd.f32 %v1690, %v2146
      %v2259 = vadd.f32 %v1691, %v2147
      %v2260 = vadd.f32 %v1692, %v2148
      %v2261 = vadd.f32 %v1693, %v2149
      %v2262 = vadd.f32 %v1694, %v2150
      %v2263 = vadd.f32 %v1695, %v2151
      %v2264 = vadd.f32 %v1696, %v2152
      %v2265 = vadd.f32 %v1697, %v2153
      %v2266 = vadd.f32 %v1698, %v2154
      %v2267 = vadd.f32 %v1699, %v2155
      %v2268 = vadd.f32 %v1700, %v2156
      %v2269 = vadd.f32 %v1701, %v2157
      %v2270 = vadd.f32 %v1702, %v2158
      %v2271 = vadd.f32 %v1703, %v2159
      %v2272 = vadd.f32 %v1704, %v2160
      %v2273 = vadd.f32 %v1705, %v2161
      %v2274 = vadd.f32 %v1706, %v2162
      %v2275 = vadd.f32 %v1707, %v2163
      %v2276 = vadd.f32 %v1708, %v2164
      %v2277 = vadd.f32 %v1709, %v2165
      %v2278 = vadd.f32 %v1710, %v2166
      %v2279 = vadd.f32 %v1711, %v2167
      %v2280 = vadd.f32 %v1712, %v2168
      %v2281 = vadd.f32 %v1713, %v2169
      %v2282 = vadd.f32 %v1714, %v2170
      %v2283 = vadd.f32 %v1715, %v2171
      %v2284 = vadd.f32 %v1716, %v2172
      %v2285 = vadd.f32 %v1717, %v2173
      %v2286 = vadd.f32 %v1718, %v2174
      %v2287 = vadd.f32 %v1719, %v2175
      %v2288 = vadd.f32 %v1720, %v2176
      %v2289 = vadd.f32 %v1721, %v2177
      %v2290 = vadd.f32 %v1722, %v2178
      %v2291 = vadd.f32 %v1723, %v2179
      %v2292 = vadd.f32 %v1724, %v2180
      %v2293 = vadd.f32 %v1725, %v2181
      %v2294 = vadd.f32 %v1726, %v2182
      %v2295 = vadd.f32 %v1727, %v2183
      %v2296 = vadd.f32 %v1728, %v2184
      %v2297 = vadd.f32 %v1729, %v2185
      %v2298 = vadd.f32 %v1730, %v2186
      %v2299 = vadd.f32 %v1731, %v2187
      %v2300 = vadd.f32 %v1732, %v2188
      %v2301 = vadd.f32 %v1733, %v2189
      %v2302 = vadd.f32 %v1734, %v2190
      %v2303 = vadd.f32 %v1735, %v2191
      %v2304 = vadd.f32 %v1736, %v2192
      %v2305 = vadd.f32 %v1737, %v2193
      %v2306 = vadd.f32 %v1738, %v2194
      %v2307 = vadd.f32 %v1739, %v2195
      %v2308 = vadd.f32 %v1740, %v2196
      %v2309 = vadd.f32 %v1741, %v2197
      %v2310 = vadd.f32 %v1742, %v2198
      %v2311 = vadd.f32 %v1743, %v2199
      %v2312 = vadd.f32 %v1744, %v2200
      %v2313 = vadd.f32 %v1745, %v2201
      %v2314 = vadd.f32 %v1746, %v2202
      %v2315 = vadd.f32 %v1747, %v2203
      %v2316 = vadd.f32 %v1748, %v2204
      %v2317 = vadd.f32 %v1749, %v2205
      %v2318 = vadd.f32 %v1750, %v2206
      %v2319 = vadd.f32 %v1751, %v2207
      %v2320 = vadd.f32 %v1752, %v2208
      %v2321 = vadd.f32 %v1753, %v2209
      %v2322 = vadd.f32 %v1754, %v2210
      %v2323 = vadd.f32 %v1755, %v2211
      %v2324 = vadd.f32 %v1756, %v2212
      %v2325 = vadd.f32 %v1757, %v2213
      %v2326 = vadd.f32 %v1758, %v2214
      %v2327 = vadd.f32 %v1759, %v2215
      %v2328 = vadd.f32 %v1760, %v2216
      %v2329 = vadd.f32 %v1761, %v2217
      %v2330 = vadd.f32 %v1762, %v2218
      %v2331 = vadd.f32 %v1763, %v2219
      %v2332 = vadd.f32 %v1764, %v2220
      %v2333 = vadd.f32 %v1765, %v2221
      %v2334 = vadd.f32 %v1766, %v2222
      %v2335 = vadd.f32 %v1767, %v2223
      %v2336 = vadd.f32 %v1768, %v2224
      %v2337 = vadd.f32 %v1769, %v2225
      %v2338 = vadd.f32 %v1770, %v2226
      %v2339 = vadd.f32 %v1771, %v2227
      %v2340 = vadd.f32 %v1772, %v2228
      %v2341 = vadd.f32 %v1773, %v2229
      %v2342 = vadd.f32 %v1774, %v2230
      %v2343 = vadd.f32 %v1775, %v2231
      %v2344 = vadd.f32 %v1776, %v2232
      %v2345 = vadd.f32 %v1777, %v2233
      %v2346 = vadd.f32 %v1778, %v2234
      %v2347 = vadd.f32 %v1779, %v2235
      %v2348 = vadd.f32 %v1780, %v2236
      %v2349 = vadd.f32 %v1781, %v2237
      %v2350 = vadd.f32 %v1782, %v2238
      %v2351 = vadd.f32 %v1783, %v2239
      %v2352 = vadd.f32 %v1784, %v2240
      %v2353 = vadd.f32 %v1785, %v2241
      %v2354 = vadd.f32 %v1786, %v2242
      %v2355 = vadd.f32 %v1787, %v2243
      %v2356 = vadd.f32 %v1788, %v2244
      %v2357 = vperm.slane %v625, 4
      %v2358 = vperm.slane %v626, 4
      %v2359 = vperm.slane %v627, 4
      %v2360 = vperm.slane %v628, 4
      %v2361 = vperm.slane %v629, 4
      %v2362 = vperm.slane %v630, 4
      %v2363 = vperm.slane %v631, 4
      %v2364 = vperm.slane %v632, 4
      %v2365 = vmul.f32 %v1789, %v2357
      %v2366 = vmul.f32 %v1790, %v2358
      %v2367 = vmul.f32 %v1791, %v2359
      %v2368 = vmul.f32 %v1792, %v2360
      %v2369 = vmul.f32 %v1793, %v2361
      %v2370 = vmul.f32 %v1794, %v2362
      %v2371 = vmul.f32 %v1795, %v2363
      %v2372 = vmul.f32 %v1796, %v2364
      %v2373 = vmul.f32 %v1797, %v2357
      %v2374 = vmul.f32 %v1798, %v2358
      %v2375 = vmul.f32 %v1799, %v2359
      %v2376 = vmul.f32 %v1800, %v2360
      %v2377 = vmul.f32 %v1801, %v2361
      %v2378 = vmul.f32 %v1802, %v2362
      %v2379 = vmul.f32 %v1803, %v2363
      %v2380 = vmul.f32 %v1804, %v2364
      %v2381 = vmul.f32 %v1805, %v2357
      %v2382 = vmul.f32 %v1806, %v2358
      %v2383 = vmul.f32 %v1807, %v2359
      %v2384 = vmul.f32 %v1808, %v2360
      %v2385 = vmul.f32 %v1809, %v2361
      %v2386 = vmul.f32 %v1810, %v2362
      %v2387 = vmul.f32 %v1811, %v2363
      %v2388 = vmul.f32 %v1812, %v2364
      %v2389 = vmul.f32 %v1813, %v2357
      %v2390 = vmul.f32 %v1814, %v2358
      %v2391 = vmul.f32 %v1815, %v2359
      %v2392 = vmul.f32 %v1816, %v2360
      %v2393 = vmul.f32 %v1817, %v2361
      %v2394 = vmul.f32 %v1818, %v2362
      %v2395 = vmul.f32 %v1819, %v2363
      %v2396 = vmul.f32 %v1820, %v2364
      %v2397 = vmul.f32 %v1821, %v2357
      %v2398 = vmul.f32 %v1822, %v2358
      %v2399 = vmul.f32 %v1823, %v2359
      %v2400 = vmul.f32 %v1824, %v2360
      %v2401 = vmul.f32 %v1825, %v2361
      %v2402 = vmul.f32 %v1826, %v2362
      %v2403 = vmul.f32 %v1827, %v2363
      %v2404 = vmul.f32 %v1828, %v2364
      %v2405 = vmul.f32 %v1829, %v2357
      %v2406 = vmul.f32 %v1830, %v2358
      %v2407 = vmul.f32 %v1831, %v2359
      %v2408 = vmul.f32 %v1832, %v2360
      %v2409 = vmul.f32 %v1833, %v2361
      %v2410 = vmul.f32 %v1834, %v2362
      %v2411 = vmul.f32 %v1835, %v2363
      %v2412 = vmul.f32 %v1836, %v2364
      %v2413 = vmul.f32 %v1837, %v2357
      %v2414 = vmul.f32 %v1838, %v2358
      %v2415 = vmul.f32 %v1839, %v2359
      %v2416 = vmul.f32 %v1840, %v2360
      %v2417 = vmul.f32 %v1841, %v2361
      %v2418 = vmul.f32 %v1842, %v2362
      %v2419 = vmul.f32 %v1843, %v2363
      %v2420 = vmul.f32 %v1844, %v2364
      %v2421 = vmul.f32 %v1845, %v2357
      %v2422 = vmul.f32 %v1846, %v2358
      %v2423 = vmul.f32 %v1847, %v2359
      %v2424 = vmul.f32 %v1848, %v2360
      %v2425 = vmul.f32 %v1849, %v2361
      %v2426 = vmul.f32 %v1850, %v2362
      %v2427 = vmul.f32 %v1851, %v2363
      %v2428 = vmul.f32 %v1852, %v2364
      %v2429 = vmul.f32 %v1853, %v2357
      %v2430 = vmul.f32 %v1854, %v2358
      %v2431 = vmul.f32 %v1855, %v2359
      %v2432 = vmul.f32 %v1856, %v2360
      %v2433 = vmul.f32 %v1857, %v2361
      %v2434 = vmul.f32 %v1858, %v2362
      %v2435 = vmul.f32 %v1859, %v2363
      %v2436 = vmul.f32 %v1860, %v2364
      %v2437 = vmul.f32 %v1861, %v2357
      %v2438 = vmul.f32 %v1862, %v2358
      %v2439 = vmul.f32 %v1863, %v2359
      %v2440 = vmul.f32 %v1864, %v2360
      %v2441 = vmul.f32 %v1865, %v2361
      %v2442 = vmul.f32 %v1866, %v2362
      %v2443 = vmul.f32 %v1867, %v2363
      %v2444 = vmul.f32 %v1868, %v2364
      %v2445 = vmul.f32 %v1869, %v2357
      %v2446 = vmul.f32 %v1870, %v2358
      %v2447 = vmul.f32 %v1871, %v2359
      %v2448 = vmul.f32 %v1872, %v2360
      %v2449 = vmul.f32 %v1873, %v2361
      %v2450 = vmul.f32 %v1874, %v2362
      %v2451 = vmul.f32 %v1875, %v2363
      %v2452 = vmul.f32 %v1876, %v2364
      %v2453 = vmul.f32 %v1877, %v2357
      %v2454 = vmul.f32 %v1878, %v2358
      %v2455 = vmul.f32 %v1879, %v2359
      %v2456 = vmul.f32 %v1880, %v2360
      %v2457 = vmul.f32 %v1881, %v2361
      %v2458 = vmul.f32 %v1882, %v2362
      %v2459 = vmul.f32 %v1883, %v2363
      %v2460 = vmul.f32 %v1884, %v2364
      %v2461 = vmul.f32 %v1885, %v2357
      %v2462 = vmul.f32 %v1886, %v2358
      %v2463 = vmul.f32 %v1887, %v2359
      %v2464 = vmul.f32 %v1888, %v2360
      %v2465 = vmul.f32 %v1889, %v2361
      %v2466 = vmul.f32 %v1890, %v2362
      %v2467 = vmul.f32 %v1891, %v2363
      %v2468 = vmul.f32 %v1892, %v2364
      %v2469 = vmul.f32 %v1893, %v2357
      %v2470 = vmul.f32 %v1894, %v2358
      %v2471 = vmul.f32 %v1895, %v2359
      %v2472 = vmul.f32 %v1896, %v2360
      %v2473 = vmul.f32 %v1897, %v2361
      %v2474 = vmul.f32 %v1898, %v2362
      %v2475 = vmul.f32 %v1899, %v2363
      %v2476 = vmul.f32 %v1900, %v2364
      %v2477 = vadd.f32 %v2245, %v2365
      %v2478 = vadd.f32 %v2246, %v2366
      %v2479 = vadd.f32 %v2247, %v2367
      %v2480 = vadd.f32 %v2248, %v2368
      %v2481 = vadd.f32 %v2249, %v2369
      %v2482 = vadd.f32 %v2250, %v2370
      %v2483 = vadd.f32 %v2251, %v2371
      %v2484 = vadd.f32 %v2252, %v2372
      %v2485 = vadd.f32 %v2253, %v2373
      %v2486 = vadd.f32 %v2254, %v2374
      %v2487 = vadd.f32 %v2255, %v2375
      %v2488 = vadd.f32 %v2256, %v2376
      %v2489 = vadd.f32 %v2257, %v2377
      %v2490 = vadd.f32 %v2258, %v2378
      %v2491 = vadd.f32 %v2259, %v2379
      %v2492 = vadd.f32 %v2260, %v2380
      %v2493 = vadd.f32 %v2261, %v2381
      %v2494 = vadd.f32 %v2262, %v2382
      %v2495 = vadd.f32 %v2263, %v2383
      %v2496 = vadd.f32 %v2264, %v2384
      %v2497 = vadd.f32 %v2265, %v2385
      %v2498 = vadd.f32 %v2266, %v2386
      %v2499 = vadd.f32 %v2267, %v2387
      %v2500 = vadd.f32 %v2268, %v2388
      %v2501 = vadd.f32 %v2269, %v2389
      %v2502 = vadd.f32 %v2270, %v2390
      %v2503 = vadd.f32 %v2271, %v2391
      %v2504 = vadd.f32 %v2272, %v2392
      %v2505 = vadd.f32 %v2273, %v2393
      %v2506 = vadd.f32 %v2274, %v2394
      %v2507 = vadd.f32 %v2275, %v2395
      %v2508 = vadd.f32 %v2276, %v2396
      %v2509 = vadd.f32 %v2277, %v2397
      %v2510 = vadd.f32 %v2278, %v2398
      %v2511 = vadd.f32 %v2279, %v2399
      %v2512 = vadd.f32 %v2280, %v2400
      %v2513 = vadd.f32 %v2281, %v2401
      %v2514 = vadd.f32 %v2282, %v2402
      %v2515 = vadd.f32 %v2283, %v2403
      %v2516 = vadd.f32 %v2284, %v2404
      %v2517 = vadd.f32 %v2285, %v2405
      %v2518 = vadd.f32 %v2286, %v2406
      %v2519 = vadd.f32 %v2287, %v2407
      %v2520 = vadd.f32 %v2288, %v2408
      %v2521 = vadd.f32 %v2289, %v2409
      %v2522 = vadd.f32 %v2290, %v2410
      %v2523 = vadd.f32 %v2291, %v2411
      %v2524 = vadd.f32 %v2292, %v2412
      %v2525 = vadd.f32 %v2293, %v2413
      %v2526 = vadd.f32 %v2294, %v2414
      %v2527 = vadd.f32 %v2295, %v2415
      %v2528 = vadd.f32 %v2296, %v2416
      %v2529 = vadd.f32 %v2297, %v2417
      %v2530 = vadd.f32 %v2298, %v2418
      %v2531 = vadd.f32 %v2299, %v2419
      %v2532 = vadd.f32 %v2300, %v2420
      %v2533 = vadd.f32 %v2301, %v2421
      %v2534 = vadd.f32 %v2302, %v2422
      %v2535 = vadd.f32 %v2303, %v2423
      %v2536 = vadd.f32 %v2304, %v2424
      %v2537 = vadd.f32 %v2305, %v2425
      %v2538 = vadd.f32 %v2306, %v2426
      %v2539 = vadd.f32 %v2307, %v2427
      %v2540 = vadd.f32 %v2308, %v2428
      %v2541 = vadd.f32 %v2309, %v2429
      %v2542 = vadd.f32 %v2310, %v2430
      %v2543 = vadd.f32 %v2311, %v2431
      %v2544 = vadd.f32 %v2312, %v2432
      %v2545 = vadd.f32 %v2313, %v2433
      %v2546 = vadd.f32 %v2314, %v2434
      %v2547 = vadd.f32 %v2315, %v2435
      %v2548 = vadd.f32 %v2316, %v2436
      %v2549 = vadd.f32 %v2317, %v2437
      %v2550 = vadd.f32 %v2318, %v2438
      %v2551 = vadd.f32 %v2319, %v2439
      %v2552 = vadd.f32 %v2320, %v2440
      %v2553 = vadd.f32 %v2321, %v2441
      %v2554 = vadd.f32 %v2322, %v2442
      %v2555 = vadd.f32 %v2323, %v2443
      %v2556 = vadd.f32 %v2324, %v2444
      %v2557 = vadd.f32 %v2325, %v2445
      %v2558 = vadd.f32 %v2326, %v2446
      %v2559 = vadd.f32 %v2327, %v2447
      %v2560 = vadd.f32 %v2328, %v2448
      %v2561 = vadd.f32 %v2329, %v2449
      %v2562 = vadd.f32 %v2330, %v2450
      %v2563 = vadd.f32 %v2331, %v2451
      %v2564 = vadd.f32 %v2332, %v2452
      %v2565 = vadd.f32 %v2333, %v2453
      %v2566 = vadd.f32 %v2334, %v2454
      %v2567 = vadd.f32 %v2335, %v2455
      %v2568 = vadd.f32 %v2336, %v2456
      %v2569 = vadd.f32 %v2337, %v2457
      %v2570 = vadd.f32 %v2338, %v2458
      %v2571 = vadd.f32 %v2339, %v2459
      %v2572 = vadd.f32 %v2340, %v2460
      %v2573 = vadd.f32 %v2341, %v2461
      %v2574 = vadd.f32 %v2342, %v2462
      %v2575 = vadd.f32 %v2343, %v2463
      %v2576 = vadd.f32 %v2344, %v2464
      %v2577 = vadd.f32 %v2345, %v2465
      %v2578 = vadd.f32 %v2346, %v2466
      %v2579 = vadd.f32 %v2347, %v2467
      %v2580 = vadd.f32 %v2348, %v2468
      %v2581 = vadd.f32 %v2349, %v2469
      %v2582 = vadd.f32 %v2350, %v2470
      %v2583 = vadd.f32 %v2351, %v2471
      %v2584 = vadd.f32 %v2352, %v2472
      %v2585 = vadd.f32 %v2353, %v2473
      %v2586 = vadd.f32 %v2354, %v2474
      %v2587 = vadd.f32 %v2355, %v2475
      %v2588 = vadd.f32 %v2356, %v2476
      %v2589 = vrot.slane %v1789, 1
      %v2590 = vrot.slane %v1790, 1
      %v2591 = vrot.slane %v1791, 1
      %v2592 = vrot.slane %v1792, 1
      %v2593 = vrot.slane %v1793, 1
      %v2594 = vrot.slane %v1794, 1
      %v2595 = vrot.slane %v1795, 1
      %v2596 = vrot.slane %v1796, 1
      %v2597 = vrot.slane %v1805, 1
      %v2598 = vrot.slane %v1806, 1
      %v2599 = vrot.slane %v1807, 1
      %v2600 = vrot.slane %v1808, 1
      %v2601 = vrot.slane %v1809, 1
      %v2602 = vrot.slane %v1810, 1
      %v2603 = vrot.slane %v1811, 1
      %v2604 = vrot.slane %v1812, 1
      %v2605 = vrot.slane %v1821, 1
      %v2606 = vrot.slane %v1822, 1
      %v2607 = vrot.slane %v1823, 1
      %v2608 = vrot.slane %v1824, 1
      %v2609 = vrot.slane %v1825, 1
      %v2610 = vrot.slane %v1826, 1
      %v2611 = vrot.slane %v1827, 1
      %v2612 = vrot.slane %v1828, 1
      %v2613 = vrot.slane %v1837, 1
      %v2614 = vrot.slane %v1838, 1
      %v2615 = vrot.slane %v1839, 1
      %v2616 = vrot.slane %v1840, 1
      %v2617 = vrot.slane %v1841, 1
      %v2618 = vrot.slane %v1842, 1
      %v2619 = vrot.slane %v1843, 1
      %v2620 = vrot.slane %v1844, 1
      %v2621 = vrot.slane %v1853, 1
      %v2622 = vrot.slane %v1854, 1
      %v2623 = vrot.slane %v1855, 1
      %v2624 = vrot.slane %v1856, 1
      %v2625 = vrot.slane %v1857, 1
      %v2626 = vrot.slane %v1858, 1
      %v2627 = vrot.slane %v1859, 1
      %v2628 = vrot.slane %v1860, 1
      %v2629 = vrot.slane %v1869, 1
      %v2630 = vrot.slane %v1870, 1
      %v2631 = vrot.slane %v1871, 1
      %v2632 = vrot.slane %v1872, 1
      %v2633 = vrot.slane %v1873, 1
      %v2634 = vrot.slane %v1874, 1
      %v2635 = vrot.slane %v1875, 1
      %v2636 = vrot.slane %v1876, 1
      %v2637 = vrot.slane %v1885, 1
      %v2638 = vrot.slane %v1886, 1
      %v2639 = vrot.slane %v1887, 1
      %v2640 = vrot.slane %v1888, 1
      %v2641 = vrot.slane %v1889, 1
      %v2642 = vrot.slane %v1890, 1
      %v2643 = vrot.slane %v1891, 1
      %v2644 = vrot.slane %v1892, 1
      %v2645 = vrot.slane %v1797, 1
      %v2646 = vrot.slane %v1798, 1
      %v2647 = vrot.slane %v1799, 1
      %v2648 = vrot.slane %v1800, 1
      %v2649 = vrot.slane %v1801, 1
      %v2650 = vrot.slane %v1802, 1
      %v2651 = vrot.slane %v1803, 1
      %v2652 = vrot.slane %v1804, 1
      %v2653 = vrot.slane %v1813, 1
      %v2654 = vrot.slane %v1814, 1
      %v2655 = vrot.slane %v1815, 1
      %v2656 = vrot.slane %v1816, 1
      %v2657 = vrot.slane %v1817, 1
      %v2658 = vrot.slane %v1818, 1
      %v2659 = vrot.slane %v1819, 1
      %v2660 = vrot.slane %v1820, 1
      %v2661 = vrot.slane %v1829, 1
      %v2662 = vrot.slane %v1830, 1
      %v2663 = vrot.slane %v1831, 1
      %v2664 = vrot.slane %v1832, 1
      %v2665 = vrot.slane %v1833, 1
      %v2666 = vrot.slane %v1834, 1
      %v2667 = vrot.slane %v1835, 1
      %v2668 = vrot.slane %v1836, 1
      %v2669 = vrot.slane %v1845, 1
      %v2670 = vrot.slane %v1846, 1
      %v2671 = vrot.slane %v1847, 1
      %v2672 = vrot.slane %v1848, 1
      %v2673 = vrot.slane %v1849, 1
      %v2674 = vrot.slane %v1850, 1
      %v2675 = vrot.slane %v1851, 1
      %v2676 = vrot.slane %v1852, 1
      %v2677 = vrot.slane %v1861, 1
      %v2678 = vrot.slane %v1862, 1
      %v2679 = vrot.slane %v1863, 1
      %v2680 = vrot.slane %v1864, 1
      %v2681 = vrot.slane %v1865, 1
      %v2682 = vrot.slane %v1866, 1
      %v2683 = vrot.slane %v1867, 1
      %v2684 = vrot.slane %v1868, 1
      %v2685 = vrot.slane %v1877, 1
      %v2686 = vrot.slane %v1878, 1
      %v2687 = vrot.slane %v1879, 1
      %v2688 = vrot.slane %v1880, 1
      %v2689 = vrot.slane %v1881, 1
      %v2690 = vrot.slane %v1882, 1
      %v2691 = vrot.slane %v1883, 1
      %v2692 = vrot.slane %v1884, 1
      %v2693 = vrot.slane %v1893, 1
      %v2694 = vrot.slane %v1894, 1
      %v2695 = vrot.slane %v1895, 1
      %v2696 = vrot.slane %v1896, 1
      %v2697 = vrot.slane %v1897, 1
      %v2698 = vrot.slane %v1898, 1
      %v2699 = vrot.slane %v1899, 1
      %v2700 = vrot.slane %v1900, 1
      %v2701 = vsel %vm1444, %v2589, %v2645
      %v2702 = vsel %vm1444, %v2590, %v2646
      %v2703 = vsel %vm1444, %v2591, %v2647
      %v2704 = vsel %vm1444, %v2592, %v2648
      %v2705 = vsel %vm1444, %v2593, %v2649
      %v2706 = vsel %vm1444, %v2594, %v2650
      %v2707 = vsel %vm1444, %v2595, %v2651
      %v2708 = vsel %vm1444, %v2596, %v2652
      %v2709 = vsel %vm1444, %v2597, %v2653
      %v2710 = vsel %vm1444, %v2598, %v2654
      %v2711 = vsel %vm1444, %v2599, %v2655
      %v2712 = vsel %vm1444, %v2600, %v2656
      %v2713 = vsel %vm1444, %v2601, %v2657
      %v2714 = vsel %vm1444, %v2602, %v2658
      %v2715 = vsel %vm1444, %v2603, %v2659
      %v2716 = vsel %vm1444, %v2604, %v2660
      %v2717 = vsel %vm1444, %v2605, %v2661
      %v2718 = vsel %vm1444, %v2606, %v2662
      %v2719 = vsel %vm1444, %v2607, %v2663
      %v2720 = vsel %vm1444, %v2608, %v2664
      %v2721 = vsel %vm1444, %v2609, %v2665
      %v2722 = vsel %vm1444, %v2610, %v2666
      %v2723 = vsel %vm1444, %v2611, %v2667
      %v2724 = vsel %vm1444, %v2612, %v2668
      %v2725 = vsel %vm1444, %v2613, %v2669
      %v2726 = vsel %vm1444, %v2614, %v2670
      %v2727 = vsel %vm1444, %v2615, %v2671
      %v2728 = vsel %vm1444, %v2616, %v2672
      %v2729 = vsel %vm1444, %v2617, %v2673
      %v2730 = vsel %vm1444, %v2618, %v2674
      %v2731 = vsel %vm1444, %v2619, %v2675
      %v2732 = vsel %vm1444, %v2620, %v2676
      %v2733 = vsel %vm1444, %v2621, %v2677
      %v2734 = vsel %vm1444, %v2622, %v2678
      %v2735 = vsel %vm1444, %v2623, %v2679
      %v2736 = vsel %vm1444, %v2624, %v2680
      %v2737 = vsel %vm1444, %v2625, %v2681
      %v2738 = vsel %vm1444, %v2626, %v2682
      %v2739 = vsel %vm1444, %v2627, %v2683
      %v2740 = vsel %vm1444, %v2628, %v2684
      %v2741 = vsel %vm1444, %v2629, %v2685
      %v2742 = vsel %vm1444, %v2630, %v2686
      %v2743 = vsel %vm1444, %v2631, %v2687
      %v2744 = vsel %vm1444, %v2632, %v2688
      %v2745 = vsel %vm1444, %v2633, %v2689
      %v2746 = vsel %vm1444, %v2634, %v2690
      %v2747 = vsel %vm1444, %v2635, %v2691
      %v2748 = vsel %vm1444, %v2636, %v2692
      %v2749 = vsel %vm1444, %v2637, %v2693
      %v2750 = vsel %vm1444, %v2638, %v2694
      %v2751 = vsel %vm1444, %v2639, %v2695
      %v2752 = vsel %vm1444, %v2640, %v2696
      %v2753 = vsel %vm1444, %v2641, %v2697
      %v2754 = vsel %vm1444, %v2642, %v2698
      %v2755 = vsel %vm1444, %v2643, %v2699
      %v2756 = vsel %vm1444, %v2644, %v2700
      %v2757 = vsel %vm1444, %v2645, %v2589
      %v2758 = vsel %vm1444, %v2646, %v2590
      %v2759 = vsel %vm1444, %v2647, %v2591
      %v2760 = vsel %vm1444, %v2648, %v2592
      %v2761 = vsel %vm1444, %v2649, %v2593
      %v2762 = vsel %vm1444, %v2650, %v2594
      %v2763 = vsel %vm1444, %v2651, %v2595
      %v2764 = vsel %vm1444, %v2652, %v2596
      %v2765 = vsel %vm1444, %v2653, %v2597
      %v2766 = vsel %vm1444, %v2654, %v2598
      %v2767 = vsel %vm1444, %v2655, %v2599
      %v2768 = vsel %vm1444, %v2656, %v2600
      %v2769 = vsel %vm1444, %v2657, %v2601
      %v2770 = vsel %vm1444, %v2658, %v2602
      %v2771 = vsel %vm1444, %v2659, %v2603
      %v2772 = vsel %vm1444, %v2660, %v2604
      %v2773 = vsel %vm1444, %v2661, %v2605
      %v2774 = vsel %vm1444, %v2662, %v2606
      %v2775 = vsel %vm1444, %v2663, %v2607
      %v2776 = vsel %vm1444, %v2664, %v2608
      %v2777 = vsel %vm1444, %v2665, %v2609
      %v2778 = vsel %vm1444, %v2666, %v2610
      %v2779 = vsel %vm1444, %v2667, %v2611
      %v2780 = vsel %vm1444, %v2668, %v2612
      %v2781 = vsel %vm1444, %v2669, %v2613
      %v2782 = vsel %vm1444, %v2670, %v2614
      %v2783 = vsel %vm1444, %v2671, %v2615
      %v2784 = vsel %vm1444, %v2672, %v2616
      %v2785 = vsel %vm1444, %v2673, %v2617
      %v2786 = vsel %vm1444, %v2674, %v2618
      %v2787 = vsel %vm1444, %v2675, %v2619
      %v2788 = vsel %vm1444, %v2676, %v2620
      %v2789 = vsel %vm1444, %v2677, %v2621
      %v2790 = vsel %vm1444, %v2678, %v2622
      %v2791 = vsel %vm1444, %v2679, %v2623
      %v2792 = vsel %vm1444, %v2680, %v2624
      %v2793 = vsel %vm1444, %v2681, %v2625
      %v2794 = vsel %vm1444, %v2682, %v2626
      %v2795 = vsel %vm1444, %v2683, %v2627
      %v2796 = vsel %vm1444, %v2684, %v2628
      %v2797 = vsel %vm1444, %v2685, %v2629
      %v2798 = vsel %vm1444, %v2686, %v2630
      %v2799 = vsel %vm1444, %v2687, %v2631
      %v2800 = vsel %vm1444, %v2688, %v2632
      %v2801 = vsel %vm1444, %v2689, %v2633
      %v2802 = vsel %vm1444, %v2690, %v2634
      %v2803 = vsel %vm1444, %v2691, %v2635
      %v2804 = vsel %vm1444, %v2692, %v2636
      %v2805 = vsel %vm1444, %v2693, %v2637
      %v2806 = vsel %vm1444, %v2694, %v2638
      %v2807 = vsel %vm1444, %v2695, %v2639
      %v2808 = vsel %vm1444, %v2696, %v2640
      %v2809 = vsel %vm1444, %v2697, %v2641
      %v2810 = vsel %vm1444, %v2698, %v2642
      %v2811 = vsel %vm1444, %v2699, %v2643
      %v2812 = vsel %vm1444, %v2700, %v2644
      %v2813 = vperm.slane %v625, 5
      %v2814 = vperm.slane %v626, 5
      %v2815 = vperm.slane %v627, 5
      %v2816 = vperm.slane %v628, 5
      %v2817 = vperm.slane %v629, 5
      %v2818 = vperm.slane %v630, 5
      %v2819 = vperm.slane %v631, 5
      %v2820 = vperm.slane %v632, 5
      %v2821 = vmul.f32 %v2701, %v2813
      %v2822 = vmul.f32 %v2702, %v2814
      %v2823 = vmul.f32 %v2703, %v2815
      %v2824 = vmul.f32 %v2704, %v2816
      %v2825 = vmul.f32 %v2705, %v2817
      %v2826 = vmul.f32 %v2706, %v2818
      %v2827 = vmul.f32 %v2707, %v2819
      %v2828 = vmul.f32 %v2708, %v2820
      %v2829 = vmul.f32 %v2757, %v2813
      %v2830 = vmul.f32 %v2758, %v2814
      %v2831 = vmul.f32 %v2759, %v2815
      %v2832 = vmul.f32 %v2760, %v2816
      %v2833 = vmul.f32 %v2761, %v2817
      %v2834 = vmul.f32 %v2762, %v2818
      %v2835 = vmul.f32 %v2763, %v2819
      %v2836 = vmul.f32 %v2764, %v2820
      %v2837 = vmul.f32 %v2709, %v2813
      %v2838 = vmul.f32 %v2710, %v2814
      %v2839 = vmul.f32 %v2711, %v2815
      %v2840 = vmul.f32 %v2712, %v2816
      %v2841 = vmul.f32 %v2713, %v2817
      %v2842 = vmul.f32 %v2714, %v2818
      %v2843 = vmul.f32 %v2715, %v2819
      %v2844 = vmul.f32 %v2716, %v2820
      %v2845 = vmul.f32 %v2765, %v2813
      %v2846 = vmul.f32 %v2766, %v2814
      %v2847 = vmul.f32 %v2767, %v2815
      %v2848 = vmul.f32 %v2768, %v2816
      %v2849 = vmul.f32 %v2769, %v2817
      %v2850 = vmul.f32 %v2770, %v2818
      %v2851 = vmul.f32 %v2771, %v2819
      %v2852 = vmul.f32 %v2772, %v2820
      %v2853 = vmul.f32 %v2717, %v2813
      %v2854 = vmul.f32 %v2718, %v2814
      %v2855 = vmul.f32 %v2719, %v2815
      %v2856 = vmul.f32 %v2720, %v2816
      %v2857 = vmul.f32 %v2721, %v2817
      %v2858 = vmul.f32 %v2722, %v2818
      %v2859 = vmul.f32 %v2723, %v2819
      %v2860 = vmul.f32 %v2724, %v2820
      %v2861 = vmul.f32 %v2773, %v2813
      %v2862 = vmul.f32 %v2774, %v2814
      %v2863 = vmul.f32 %v2775, %v2815
      %v2864 = vmul.f32 %v2776, %v2816
      %v2865 = vmul.f32 %v2777, %v2817
      %v2866 = vmul.f32 %v2778, %v2818
      %v2867 = vmul.f32 %v2779, %v2819
      %v2868 = vmul.f32 %v2780, %v2820
      %v2869 = vmul.f32 %v2725, %v2813
      %v2870 = vmul.f32 %v2726, %v2814
      %v2871 = vmul.f32 %v2727, %v2815
      %v2872 = vmul.f32 %v2728, %v2816
      %v2873 = vmul.f32 %v2729, %v2817
      %v2874 = vmul.f32 %v2730, %v2818
      %v2875 = vmul.f32 %v2731, %v2819
      %v2876 = vmul.f32 %v2732, %v2820
      %v2877 = vmul.f32 %v2781, %v2813
      %v2878 = vmul.f32 %v2782, %v2814
      %v2879 = vmul.f32 %v2783, %v2815
      %v2880 = vmul.f32 %v2784, %v2816
      %v2881 = vmul.f32 %v2785, %v2817
      %v2882 = vmul.f32 %v2786, %v2818
      %v2883 = vmul.f32 %v2787, %v2819
      %v2884 = vmul.f32 %v2788, %v2820
      %v2885 = vmul.f32 %v2733, %v2813
      %v2886 = vmul.f32 %v2734, %v2814
      %v2887 = vmul.f32 %v2735, %v2815
      %v2888 = vmul.f32 %v2736, %v2816
      %v2889 = vmul.f32 %v2737, %v2817
      %v2890 = vmul.f32 %v2738, %v2818
      %v2891 = vmul.f32 %v2739, %v2819
      %v2892 = vmul.f32 %v2740, %v2820
      %v2893 = vmul.f32 %v2789, %v2813
      %v2894 = vmul.f32 %v2790, %v2814
      %v2895 = vmul.f32 %v2791, %v2815
      %v2896 = vmul.f32 %v2792, %v2816
      %v2897 = vmul.f32 %v2793, %v2817
      %v2898 = vmul.f32 %v2794, %v2818
      %v2899 = vmul.f32 %v2795, %v2819
      %v2900 = vmul.f32 %v2796, %v2820
      %v2901 = vmul.f32 %v2741, %v2813
      %v2902 = vmul.f32 %v2742, %v2814
      %v2903 = vmul.f32 %v2743, %v2815
      %v2904 = vmul.f32 %v2744, %v2816
      %v2905 = vmul.f32 %v2745, %v2817
      %v2906 = vmul.f32 %v2746, %v2818
      %v2907 = vmul.f32 %v2747, %v2819
      %v2908 = vmul.f32 %v2748, %v2820
      %v2909 = vmul.f32 %v2797, %v2813
      %v2910 = vmul.f32 %v2798, %v2814
      %v2911 = vmul.f32 %v2799, %v2815
      %v2912 = vmul.f32 %v2800, %v2816
      %v2913 = vmul.f32 %v2801, %v2817
      %v2914 = vmul.f32 %v2802, %v2818
      %v2915 = vmul.f32 %v2803, %v2819
      %v2916 = vmul.f32 %v2804, %v2820
      %v2917 = vmul.f32 %v2749, %v2813
      %v2918 = vmul.f32 %v2750, %v2814
      %v2919 = vmul.f32 %v2751, %v2815
      %v2920 = vmul.f32 %v2752, %v2816
      %v2921 = vmul.f32 %v2753, %v2817
      %v2922 = vmul.f32 %v2754, %v2818
      %v2923 = vmul.f32 %v2755, %v2819
      %v2924 = vmul.f32 %v2756, %v2820
      %v2925 = vmul.f32 %v2805, %v2813
      %v2926 = vmul.f32 %v2806, %v2814
      %v2927 = vmul.f32 %v2807, %v2815
      %v2928 = vmul.f32 %v2808, %v2816
      %v2929 = vmul.f32 %v2809, %v2817
      %v2930 = vmul.f32 %v2810, %v2818
      %v2931 = vmul.f32 %v2811, %v2819
      %v2932 = vmul.f32 %v2812, %v2820
      %v2933 = vadd.f32 %v2477, %v2821
      %v2934 = vadd.f32 %v2478, %v2822
      %v2935 = vadd.f32 %v2479, %v2823
      %v2936 = vadd.f32 %v2480, %v2824
      %v2937 = vadd.f32 %v2481, %v2825
      %v2938 = vadd.f32 %v2482, %v2826
      %v2939 = vadd.f32 %v2483, %v2827
      %v2940 = vadd.f32 %v2484, %v2828
      %v2941 = vadd.f32 %v2485, %v2829
      %v2942 = vadd.f32 %v2486, %v2830
      %v2943 = vadd.f32 %v2487, %v2831
      %v2944 = vadd.f32 %v2488, %v2832
      %v2945 = vadd.f32 %v2489, %v2833
      %v2946 = vadd.f32 %v2490, %v2834
      %v2947 = vadd.f32 %v2491, %v2835
      %v2948 = vadd.f32 %v2492, %v2836
      %v2949 = vadd.f32 %v2493, %v2837
      %v2950 = vadd.f32 %v2494, %v2838
      %v2951 = vadd.f32 %v2495, %v2839
      %v2952 = vadd.f32 %v2496, %v2840
      %v2953 = vadd.f32 %v2497, %v2841
      %v2954 = vadd.f32 %v2498, %v2842
      %v2955 = vadd.f32 %v2499, %v2843
      %v2956 = vadd.f32 %v2500, %v2844
      %v2957 = vadd.f32 %v2501, %v2845
      %v2958 = vadd.f32 %v2502, %v2846
      %v2959 = vadd.f32 %v2503, %v2847
      %v2960 = vadd.f32 %v2504, %v2848
      %v2961 = vadd.f32 %v2505, %v2849
      %v2962 = vadd.f32 %v2506, %v2850
      %v2963 = vadd.f32 %v2507, %v2851
      %v2964 = vadd.f32 %v2508, %v2852
      %v2965 = vadd.f32 %v2509, %v2853
      %v2966 = vadd.f32 %v2510, %v2854
      %v2967 = vadd.f32 %v2511, %v2855
      %v2968 = vadd.f32 %v2512, %v2856
      %v2969 = vadd.f32 %v2513, %v2857
      %v2970 = vadd.f32 %v2514, %v2858
      %v2971 = vadd.f32 %v2515, %v2859
      %v2972 = vadd.f32 %v2516, %v2860
      %v2973 = vadd.f32 %v2517, %v2861
      %v2974 = vadd.f32 %v2518, %v2862
      %v2975 = vadd.f32 %v2519, %v2863
      %v2976 = vadd.f32 %v2520, %v2864
      %v2977 = vadd.f32 %v2521, %v2865
      %v2978 = vadd.f32 %v2522, %v2866
      %v2979 = vadd.f32 %v2523, %v2867
      %v2980 = vadd.f32 %v2524, %v2868
      %v2981 = vadd.f32 %v2525, %v2869
      %v2982 = vadd.f32 %v2526, %v2870
      %v2983 = vadd.f32 %v2527, %v2871
      %v2984 = vadd.f32 %v2528, %v2872
      %v2985 = vadd.f32 %v2529, %v2873
      %v2986 = vadd.f32 %v2530, %v2874
      %v2987 = vadd.f32 %v2531, %v2875
      %v2988 = vadd.f32 %v2532, %v2876
      %v2989 = vadd.f32 %v2533, %v2877
      %v2990 = vadd.f32 %v2534, %v2878
      %v2991 = vadd.f32 %v2535, %v2879
      %v2992 = vadd.f32 %v2536, %v2880
      %v2993 = vadd.f32 %v2537, %v2881
      %v2994 = vadd.f32 %v2538, %v2882
      %v2995 = vadd.f32 %v2539, %v2883
      %v2996 = vadd.f32 %v2540, %v2884
      %v2997 = vadd.f32 %v2541, %v2885
      %v2998 = vadd.f32 %v2542, %v2886
      %v2999 = vadd.f32 %v2543, %v2887
      %v3000 = vadd.f32 %v2544, %v2888
      %v3001 = vadd.f32 %v2545, %v2889
      %v3002 = vadd.f32 %v2546, %v2890
      %v3003 = vadd.f32 %v2547, %v2891
      %v3004 = vadd.f32 %v2548, %v2892
      %v3005 = vadd.f32 %v2549, %v2893
      %v3006 = vadd.f32 %v2550, %v2894
      %v3007 = vadd.f32 %v2551, %v2895
      %v3008 = vadd.f32 %v2552, %v2896
      %v3009 = vadd.f32 %v2553, %v2897
      %v3010 = vadd.f32 %v2554, %v2898
      %v3011 = vadd.f32 %v2555, %v2899
      %v3012 = vadd.f32 %v2556, %v2900
      %v3013 = vadd.f32 %v2557, %v2901
      %v3014 = vadd.f32 %v2558, %v2902
      %v3015 = vadd.f32 %v2559, %v2903
      %v3016 = vadd.f32 %v2560, %v2904
      %v3017 = vadd.f32 %v2561, %v2905
      %v3018 = vadd.f32 %v2562, %v2906
      %v3019 = vadd.f32 %v2563, %v2907
      %v3020 = vadd.f32 %v2564, %v2908
      %v3021 = vadd.f32 %v2565, %v2909
      %v3022 = vadd.f32 %v2566, %v2910
      %v3023 = vadd.f32 %v2567, %v2911
      %v3024 = vadd.f32 %v2568, %v2912
      %v3025 = vadd.f32 %v2569, %v2913
      %v3026 = vadd.f32 %v2570, %v2914
      %v3027 = vadd.f32 %v2571, %v2915
      %v3028 = vadd.f32 %v2572, %v2916
      %v3029 = vadd.f32 %v2573, %v2917
      %v3030 = vadd.f32 %v2574, %v2918
      %v3031 = vadd.f32 %v2575, %v2919
      %v3032 = vadd.f32 %v2576, %v2920
      %v3033 = vadd.f32 %v2577, %v2921
      %v3034 = vadd.f32 %v2578, %v2922
      %v3035 = vadd.f32 %v2579, %v2923
      %v3036 = vadd.f32 %v2580, %v2924
      %v3037 = vadd.f32 %v2581, %v2925
      %v3038 = vadd.f32 %v2582, %v2926
      %v3039 = vadd.f32 %v2583, %v2927
      %v3040 = vadd.f32 %v2584, %v2928
      %v3041 = vadd.f32 %v2585, %v2929
      %v3042 = vadd.f32 %v2586, %v2930
      %v3043 = vadd.f32 %v2587, %v2931
      %v3044 = vadd.f32 %v2588, %v2932
      %s3045 = scalar_lea.vmem [#allocation2], 256
      %v3046 = vld [vmem:[%s3045] sm:$0xff]
      %v3047 = vld [vmem:[%s3045 + $0x8] sm:$0xff]
      %v3048 = vld [vmem:[%s3045 + $0x10] sm:$0xff]
      %v3049 = vld [vmem:[%s3045 + $0x18] sm:$0xff]
      %v3050 = vld [vmem:[%s3045 + $0x20] sm:$0xff]
      %v3051 = vld [vmem:[%s3045 + $0x28] sm:$0xff]
      %v3052 = vld [vmem:[%s3045 + $0x30] sm:$0xff]
      %v3053 = vld [vmem:[%s3045 + $0x38] sm:$0xff]
      %v3054 = vld [vmem:[%s3045 + $0x40] sm:$0xff]
      %v3055 = vld [vmem:[%s3045 + $0x48] sm:$0xff]
      %v3056 = vld [vmem:[%s3045 + $0x50] sm:$0xff]
      %v3057 = vld [vmem:[%s3045 + $0x58] sm:$0xff]
      %v3058 = vld [vmem:[%s3045 + $0x60] sm:$0xff]
      %v3059 = vld [vmem:[%s3045 + $0x68] sm:$0xff]
      %v3060 = vld [vmem:[%s3045 + $0x70] sm:$0xff]
      %v3061 = vld [vmem:[%s3045 + $0x78] sm:$0xff]
      %v3062 = vld [vmem:[%s3045 + $0x80] sm:$0xff]
      %v3063 = vld [vmem:[%s3045 + $0x88] sm:$0xff]
      %v3064 = vld [vmem:[%s3045 + $0x90] sm:$0xff]
      %v3065 = vld [vmem:[%s3045 + $0x98] sm:$0xff]
      %v3066 = vld [vmem:[%s3045 + $0xa0] sm:$0xff]
      %v3067 = vld [vmem:[%s3045 + $0xa8] sm:$0xff]
      %v3068 = vld [vmem:[%s3045 + $0xb0] sm:$0xff]
      %v3069 = vld [vmem:[%s3045 + $0xb8] sm:$0xff]
      %v3070 = vld [vmem:[%s3045 + $0xc0] sm:$0xff]
      %v3071 = vld [vmem:[%s3045 + $0xc8] sm:$0xff]
      %v3072 = vld [vmem:[%s3045 + $0xd0] sm:$0xff]
      %v3073 = vld [vmem:[%s3045 + $0xd8] sm:$0xff]
      %v3074 = vld [vmem:[%s3045 + $0xe0] sm:$0xff]
      %v3075 = vld [vmem:[%s3045 + $0xe8] sm:$0xff]
      %v3076 = vld [vmem:[%s3045 + $0xf0] sm:$0xff]
      %v3077 = vld [vmem:[%s3045 + $0xf8] sm:$0xff]
      %v3078 = vld [vmem:[%s3045 + $0x100] sm:$0xff]
      %v3079 = vld [vmem:[%s3045 + $0x108] sm:$0xff]
      %v3080 = vld [vmem:[%s3045 + $0x110] sm:$0xff]
      %v3081 = vld [vmem:[%s3045 + $0x118] sm:$0xff]
      %v3082 = vld [vmem:[%s3045 + $0x120] sm:$0xff]
      %v3083 = vld [vmem:[%s3045 + $0x128] sm:$0xff]
      %v3084 = vld [vmem:[%s3045 + $0x130] sm:$0xff]
      %v3085 = vld [vmem:[%s3045 + $0x138] sm:$0xff]
      %v3086 = vld [vmem:[%s3045 + $0x140] sm:$0xff]
      %v3087 = vld [vmem:[%s3045 + $0x148] sm:$0xff]
      %v3088 = vld [vmem:[%s3045 + $0x150] sm:$0xff]
      %v3089 = vld [vmem:[%s3045 + $0x158] sm:$0xff]
      %v3090 = vld [vmem:[%s3045 + $0x160] sm:$0xff]
      %v3091 = vld [vmem:[%s3045 + $0x168] sm:$0xff]
      %v3092 = vld [vmem:[%s3045 + $0x170] sm:$0xff]
      %v3093 = vld [vmem:[%s3045 + $0x178] sm:$0xff]
      %v3094 = vld [vmem:[%s3045 + $0x180] sm:$0xff]
      %v3095 = vld [vmem:[%s3045 + $0x188] sm:$0xff]
      %v3096 = vld [vmem:[%s3045 + $0x190] sm:$0xff]
      %v3097 = vld [vmem:[%s3045 + $0x198] sm:$0xff]
      %v3098 = vld [vmem:[%s3045 + $0x1a0] sm:$0xff]
      %v3099 = vld [vmem:[%s3045 + $0x1a8] sm:$0xff]
      %v3100 = vld [vmem:[%s3045 + $0x1b0] sm:$0xff]
      %v3101 = vld [vmem:[%s3045 + $0x1b8] sm:$0xff]
      %v3102 = vld [vmem:[%s3045 + $0x1c0] sm:$0xff]
      %v3103 = vld [vmem:[%s3045 + $0x1c8] sm:$0xff]
      %v3104 = vld [vmem:[%s3045 + $0x1d0] sm:$0xff]
      %v3105 = vld [vmem:[%s3045 + $0x1d8] sm:$0xff]
      %v3106 = vld [vmem:[%s3045 + $0x1e0] sm:$0xff]
      %v3107 = vld [vmem:[%s3045 + $0x1e8] sm:$0xff]
      %v3108 = vld [vmem:[%s3045 + $0x1f0] sm:$0xff]
      %v3109 = vld [vmem:[%s3045 + $0x1f8] sm:$0xff]
      %v3110 = vld [vmem:[%s3045 + $0x200] sm:$0xff]
      %v3111 = vld [vmem:[%s3045 + $0x208] sm:$0xff]
      %v3112 = vld [vmem:[%s3045 + $0x210] sm:$0xff]
      %v3113 = vld [vmem:[%s3045 + $0x218] sm:$0xff]
      %v3114 = vld [vmem:[%s3045 + $0x220] sm:$0xff]
      %v3115 = vld [vmem:[%s3045 + $0x228] sm:$0xff]
      %v3116 = vld [vmem:[%s3045 + $0x230] sm:$0xff]
      %v3117 = vld [vmem:[%s3045 + $0x238] sm:$0xff]
      %v3118 = vld [vmem:[%s3045 + $0x240] sm:$0xff]
      %v3119 = vld [vmem:[%s3045 + $0x248] sm:$0xff]
      %v3120 = vld [vmem:[%s3045 + $0x250] sm:$0xff]
      %v3121 = vld [vmem:[%s3045 + $0x258] sm:$0xff]
      %v3122 = vld [vmem:[%s3045 + $0x260] sm:$0xff]
      %v3123 = vld [vmem:[%s3045 + $0x268] sm:$0xff]
      %v3124 = vld [vmem:[%s3045 + $0x270] sm:$0xff]
      %v3125 = vld [vmem:[%s3045 + $0x278] sm:$0xff]
      %v3126 = vld [vmem:[%s3045 + $0x280] sm:$0xff]
      %v3127 = vld [vmem:[%s3045 + $0x288] sm:$0xff]
      %v3128 = vld [vmem:[%s3045 + $0x290] sm:$0xff]
      %v3129 = vld [vmem:[%s3045 + $0x298] sm:$0xff]
      %v3130 = vld [vmem:[%s3045 + $0x2a0] sm:$0xff]
      %v3131 = vld [vmem:[%s3045 + $0x2a8] sm:$0xff]
      %v3132 = vld [vmem:[%s3045 + $0x2b0] sm:$0xff]
      %v3133 = vld [vmem:[%s3045 + $0x2b8] sm:$0xff]
      %v3134 = vld [vmem:[%s3045 + $0x2c0] sm:$0xff]
      %v3135 = vld [vmem:[%s3045 + $0x2c8] sm:$0xff]
      %v3136 = vld [vmem:[%s3045 + $0x2d0] sm:$0xff]
      %v3137 = vld [vmem:[%s3045 + $0x2d8] sm:$0xff]
      %v3138 = vld [vmem:[%s3045 + $0x2e0] sm:$0xff]
      %v3139 = vld [vmem:[%s3045 + $0x2e8] sm:$0xff]
      %v3140 = vld [vmem:[%s3045 + $0x2f0] sm:$0xff]
      %v3141 = vld [vmem:[%s3045 + $0x2f8] sm:$0xff]
      %v3142 = vld [vmem:[%s3045 + $0x300] sm:$0xff]
      %v3143 = vld [vmem:[%s3045 + $0x308] sm:$0xff]
      %v3144 = vld [vmem:[%s3045 + $0x310] sm:$0xff]
      %v3145 = vld [vmem:[%s3045 + $0x318] sm:$0xff]
      %v3146 = vld [vmem:[%s3045 + $0x320] sm:$0xff]
      %v3147 = vld [vmem:[%s3045 + $0x328] sm:$0xff]
      %v3148 = vld [vmem:[%s3045 + $0x330] sm:$0xff]
      %v3149 = vld [vmem:[%s3045 + $0x338] sm:$0xff]
      %v3150 = vld [vmem:[%s3045 + $0x340] sm:$0xff]
      %v3151 = vld [vmem:[%s3045 + $0x348] sm:$0xff]
      %v3152 = vld [vmem:[%s3045 + $0x350] sm:$0xff]
      %v3153 = vld [vmem:[%s3045 + $0x358] sm:$0xff]
      %v3154 = vld [vmem:[%s3045 + $0x360] sm:$0xff]
      %v3155 = vld [vmem:[%s3045 + $0x368] sm:$0xff]
      %v3156 = vld [vmem:[%s3045 + $0x370] sm:$0xff]
      %v3157 = vld [vmem:[%s3045 + $0x378] sm:$0xff]
      %v3158 = vrot.slane %v3046, 7
      %v3159 = vrot.slane %v3047, 7
      %v3160 = vrot.slane %v3048, 7
      %v3161 = vrot.slane %v3049, 7
      %v3162 = vrot.slane %v3050, 7
      %v3163 = vrot.slane %v3051, 7
      %v3164 = vrot.slane %v3052, 7
      %v3165 = vrot.slane %v3053, 7
      %v3166 = vrot.slane %v3062, 7
      %v3167 = vrot.slane %v3063, 7
      %v3168 = vrot.slane %v3064, 7
      %v3169 = vrot.slane %v3065, 7
      %v3170 = vrot.slane %v3066, 7
      %v3171 = vrot.slane %v3067, 7
      %v3172 = vrot.slane %v3068, 7
      %v3173 = vrot.slane %v3069, 7
      %v3174 = vrot.slane %v3078, 7
      %v3175 = vrot.slane %v3079, 7
      %v3176 = vrot.slane %v3080, 7
      %v3177 = vrot.slane %v3081, 7
      %v3178 = vrot.slane %v3082, 7
      %v3179 = vrot.slane %v3083, 7
      %v3180 = vrot.slane %v3084, 7
      %v3181 = vrot.slane %v3085, 7
      %v3182 = vrot.slane %v3094, 7
      %v3183 = vrot.slane %v3095, 7
      %v3184 = vrot.slane %v3096, 7
      %v3185 = vrot.slane %v3097, 7
      %v3186 = vrot.slane %v3098, 7
      %v3187 = vrot.slane %v3099, 7
      %v3188 = vrot.slane %v3100, 7
      %v3189 = vrot.slane %v3101, 7
      %v3190 = vrot.slane %v3110, 7
      %v3191 = vrot.slane %v3111, 7
      %v3192 = vrot.slane %v3112, 7
      %v3193 = vrot.slane %v3113, 7
      %v3194 = vrot.slane %v3114, 7
      %v3195 = vrot.slane %v3115, 7
      %v3196 = vrot.slane %v3116, 7
      %v3197 = vrot.slane %v3117, 7
      %v3198 = vrot.slane %v3126, 7
      %v3199 = vrot.slane %v3127, 7
      %v3200 = vrot.slane %v3128, 7
      %v3201 = vrot.slane %v3129, 7
      %v3202 = vrot.slane %v3130, 7
      %v3203 = vrot.slane %v3131, 7
      %v3204 = vrot.slane %v3132, 7
      %v3205 = vrot.slane %v3133, 7
      %v3206 = vrot.slane %v3142, 7
      %v3207 = vrot.slane %v3143, 7
      %v3208 = vrot.slane %v3144, 7
      %v3209 = vrot.slane %v3145, 7
      %v3210 = vrot.slane %v3146, 7
      %v3211 = vrot.slane %v3147, 7
      %v3212 = vrot.slane %v3148, 7
      %v3213 = vrot.slane %v3149, 7
      %v3214 = vrot.slane %v3054, 7
      %v3215 = vrot.slane %v3055, 7
      %v3216 = vrot.slane %v3056, 7
      %v3217 = vrot.slane %v3057, 7
      %v3218 = vrot.slane %v3058, 7
      %v3219 = vrot.slane %v3059, 7
      %v3220 = vrot.slane %v3060, 7
      %v3221 = vrot.slane %v3061, 7
      %v3222 = vrot.slane %v3070, 7
      %v3223 = vrot.slane %v3071, 7
      %v3224 = vrot.slane %v3072, 7
      %v3225 = vrot.slane %v3073, 7
      %v3226 = vrot.slane %v3074, 7
      %v3227 = vrot.slane %v3075, 7
      %v3228 = vrot.slane %v3076, 7
      %v3229 = vrot.slane %v3077, 7
      %v3230 = vrot.slane %v3086, 7
      %v3231 = vrot.slane %v3087, 7
      %v3232 = vrot.slane %v3088, 7
      %v3233 = vrot.slane %v3089, 7
      %v3234 = vrot.slane %v3090, 7
      %v3235 = vrot.slane %v3091, 7
      %v3236 = vrot.slane %v3092, 7
      %v3237 = vrot.slane %v3093, 7
      %v3238 = vrot.slane %v3102, 7
      %v3239 = vrot.slane %v3103, 7
      %v3240 = vrot.slane %v3104, 7
      %v3241 = vrot.slane %v3105, 7
      %v3242 = vrot.slane %v3106, 7
      %v3243 = vrot.slane %v3107, 7
      %v3244 = vrot.slane %v3108, 7
      %v3245 = vrot.slane %v3109, 7
      %v3246 = vrot.slane %v3118, 7
      %v3247 = vrot.slane %v3119, 7
      %v3248 = vrot.slane %v3120, 7
      %v3249 = vrot.slane %v3121, 7
      %v3250 = vrot.slane %v3122, 7
      %v3251 = vrot.slane %v3123, 7
      %v3252 = vrot.slane %v3124, 7
      %v3253 = vrot.slane %v3125, 7
      %v3254 = vrot.slane %v3134, 7
      %v3255 = vrot.slane %v3135, 7
      %v3256 = vrot.slane %v3136, 7
      %v3257 = vrot.slane %v3137, 7
      %v3258 = vrot.slane %v3138, 7
      %v3259 = vrot.slane %v3139, 7
      %v3260 = vrot.slane %v3140, 7
      %v3261 = vrot.slane %v3141, 7
      %v3262 = vrot.slane %v3150, 7
      %v3263 = vrot.slane %v3151, 7
      %v3264 = vrot.slane %v3152, 7
      %v3265 = vrot.slane %v3153, 7
      %v3266 = vrot.slane %v3154, 7
      %v3267 = vrot.slane %v3155, 7
      %v3268 = vrot.slane %v3156, 7
      %v3269 = vrot.slane %v3157, 7
      %v3270 = vsel %vm867, %v3158, %v3214
      %v3271 = vsel %vm867, %v3159, %v3215
      %v3272 = vsel %vm867, %v3160, %v3216
      %v3273 = vsel %vm867, %v3161, %v3217
      %v3274 = vsel %vm867, %v3162, %v3218
      %v3275 = vsel %vm867, %v3163, %v3219
      %v3276 = vsel %vm867, %v3164, %v3220
      %v3277 = vsel %vm867, %v3165, %v3221
      %v3278 = vsel %vm867, %v3166, %v3222
      %v3279 = vsel %vm867, %v3167, %v3223
      %v3280 = vsel %vm867, %v3168, %v3224
      %v3281 = vsel %vm867, %v3169, %v3225
      %v3282 = vsel %vm867, %v3170, %v3226
      %v3283 = vsel %vm867, %v3171, %v3227
      %v3284 = vsel %vm867, %v3172, %v3228
      %v3285 = vsel %vm867, %v3173, %v3229
      %v3286 = vsel %vm867, %v3174, %v3230
      %v3287 = vsel %vm867, %v3175, %v3231
      %v3288 = vsel %vm867, %v3176, %v3232
      %v3289 = vsel %vm867, %v3177, %v3233
      %v3290 = vsel %vm867, %v3178, %v3234
      %v3291 = vsel %vm867, %v3179, %v3235
      %v3292 = vsel %vm867, %v3180, %v3236
      %v3293 = vsel %vm867, %v3181, %v3237
      %v3294 = vsel %vm867, %v3182, %v3238
      %v3295 = vsel %vm867, %v3183, %v3239
      %v3296 = vsel %vm867, %v3184, %v3240
      %v3297 = vsel %vm867, %v3185, %v3241
      %v3298 = vsel %vm867, %v3186, %v3242
      %v3299 = vsel %vm867, %v3187, %v3243
      %v3300 = vsel %vm867, %v3188, %v3244
      %v3301 = vsel %vm867, %v3189, %v3245
      %v3302 = vsel %vm867, %v3190, %v3246
      %v3303 = vsel %vm867, %v3191, %v3247
      %v3304 = vsel %vm867, %v3192, %v3248
      %v3305 = vsel %vm867, %v3193, %v3249
      %v3306 = vsel %vm867, %v3194, %v3250
      %v3307 = vsel %vm867, %v3195, %v3251
      %v3308 = vsel %vm867, %v3196, %v3252
      %v3309 = vsel %vm867, %v3197, %v3253
      %v3310 = vsel %vm867, %v3198, %v3254
      %v3311 = vsel %vm867, %v3199, %v3255
      %v3312 = vsel %vm867, %v3200, %v3256
      %v3313 = vsel %vm867, %v3201, %v3257
      %v3314 = vsel %vm867, %v3202, %v3258
      %v3315 = vsel %vm867, %v3203, %v3259
      %v3316 = vsel %vm867, %v3204, %v3260
      %v3317 = vsel %vm867, %v3205, %v3261
      %v3318 = vsel %vm867, %v3206, %v3262
      %v3319 = vsel %vm867, %v3207, %v3263
      %v3320 = vsel %vm867, %v3208, %v3264
      %v3321 = vsel %vm867, %v3209, %v3265
      %v3322 = vsel %vm867, %v3210, %v3266
      %v3323 = vsel %vm867, %v3211, %v3267
      %v3324 = vsel %vm867, %v3212, %v3268
      %v3325 = vsel %vm867, %v3213, %v3269
      %v3326 = vsel %vm867, %v3214, %v3158
      %v3327 = vsel %vm867, %v3215, %v3159
      %v3328 = vsel %vm867, %v3216, %v3160
      %v3329 = vsel %vm867, %v3217, %v3161
      %v3330 = vsel %vm867, %v3218, %v3162
      %v3331 = vsel %vm867, %v3219, %v3163
      %v3332 = vsel %vm867, %v3220, %v3164
      %v3333 = vsel %vm867, %v3221, %v3165
      %v3334 = vsel %vm867, %v3222, %v3166
      %v3335 = vsel %vm867, %v3223, %v3167
      %v3336 = vsel %vm867, %v3224, %v3168
      %v3337 = vsel %vm867, %v3225, %v3169
      %v3338 = vsel %vm867, %v3226, %v3170
      %v3339 = vsel %vm867, %v3227, %v3171
      %v3340 = vsel %vm867, %v3228, %v3172
      %v3341 = vsel %vm867, %v3229, %v3173
      %v3342 = vsel %vm867, %v3230, %v3174
      %v3343 = vsel %vm867, %v3231, %v3175
      %v3344 = vsel %vm867, %v3232, %v3176
      %v3345 = vsel %vm867, %v3233, %v3177
      %v3346 = vsel %vm867, %v3234, %v3178
      %v3347 = vsel %vm867, %v3235, %v3179
      %v3348 = vsel %vm867, %v3236, %v3180
      %v3349 = vsel %vm867, %v3237, %v3181
      %v3350 = vsel %vm867, %v3238, %v3182
      %v3351 = vsel %vm867, %v3239, %v3183
      %v3352 = vsel %vm867, %v3240, %v3184
      %v3353 = vsel %vm867, %v3241, %v3185
      %v3354 = vsel %vm867, %v3242, %v3186
      %v3355 = vsel %vm867, %v3243, %v3187
      %v3356 = vsel %vm867, %v3244, %v3188
      %v3357 = vsel %vm867, %v3245, %v3189
      %v3358 = vsel %vm867, %v3246, %v3190
      %v3359 = vsel %vm867, %v3247, %v3191
      %v3360 = vsel %vm867, %v3248, %v3192
      %v3361 = vsel %vm867, %v3249, %v3193
      %v3362 = vsel %vm867, %v3250, %v3194
      %v3363 = vsel %vm867, %v3251, %v3195
      %v3364 = vsel %vm867, %v3252, %v3196
      %v3365 = vsel %vm867, %v3253, %v3197
      %v3366 = vsel %vm867, %v3254, %v3198
      %v3367 = vsel %vm867, %v3255, %v3199
      %v3368 = vsel %vm867, %v3256, %v3200
      %v3369 = vsel %vm867, %v3257, %v3201
      %v3370 = vsel %vm867, %v3258, %v3202
      %v3371 = vsel %vm867, %v3259, %v3203
      %v3372 = vsel %vm867, %v3260, %v3204
      %v3373 = vsel %vm867, %v3261, %v3205
      %v3374 = vsel %vm867, %v3262, %v3206
      %v3375 = vsel %vm867, %v3263, %v3207
      %v3376 = vsel %vm867, %v3264, %v3208
      %v3377 = vsel %vm867, %v3265, %v3209
      %v3378 = vsel %vm867, %v3266, %v3210
      %v3379 = vsel %vm867, %v3267, %v3211
      %v3380 = vsel %vm867, %v3268, %v3212
      %v3381 = vsel %vm867, %v3269, %v3213
      %v3382 = vperm.slane %v625, 6
      %v3383 = vperm.slane %v626, 6
      %v3384 = vperm.slane %v627, 6
      %v3385 = vperm.slane %v628, 6
      %v3386 = vperm.slane %v629, 6
      %v3387 = vperm.slane %v630, 6
      %v3388 = vperm.slane %v631, 6
      %v3389 = vperm.slane %v632, 6
      %v3390 = vmul.f32 %v3326, %v3382
      %v3391 = vmul.f32 %v3327, %v3383
      %v3392 = vmul.f32 %v3328, %v3384
      %v3393 = vmul.f32 %v3329, %v3385
      %v3394 = vmul.f32 %v3330, %v3386
      %v3395 = vmul.f32 %v3331, %v3387
      %v3396 = vmul.f32 %v3332, %v3388
      %v3397 = vmul.f32 %v3333, %v3389
      %v3398 = vmul.f32 %v3270, %v3382
      %v3399 = vmul.f32 %v3271, %v3383
      %v3400 = vmul.f32 %v3272, %v3384
      %v3401 = vmul.f32 %v3273, %v3385
      %v3402 = vmul.f32 %v3274, %v3386
      %v3403 = vmul.f32 %v3275, %v3387
      %v3404 = vmul.f32 %v3276, %v3388
      %v3405 = vmul.f32 %v3277, %v3389
      %v3406 = vmul.f32 %v3334, %v3382
      %v3407 = vmul.f32 %v3335, %v3383
      %v3408 = vmul.f32 %v3336, %v3384
      %v3409 = vmul.f32 %v3337, %v3385
      %v3410 = vmul.f32 %v3338, %v3386
      %v3411 = vmul.f32 %v3339, %v3387
      %v3412 = vmul.f32 %v3340, %v3388
      %v3413 = vmul.f32 %v3341, %v3389
      %v3414 = vmul.f32 %v3278, %v3382
      %v3415 = vmul.f32 %v3279, %v3383
      %v3416 = vmul.f32 %v3280, %v3384
      %v3417 = vmul.f32 %v3281, %v3385
      %v3418 = vmul.f32 %v3282, %v3386
      %v3419 = vmul.f32 %v3283, %v3387
      %v3420 = vmul.f32 %v3284, %v3388
      %v3421 = vmul.f32 %v3285, %v3389
      %v3422 = vmul.f32 %v3342, %v3382
      %v3423 = vmul.f32 %v3343, %v3383
      %v3424 = vmul.f32 %v3344, %v3384
      %v3425 = vmul.f32 %v3345, %v3385
      %v3426 = vmul.f32 %v3346, %v3386
      %v3427 = vmul.f32 %v3347, %v3387
      %v3428 = vmul.f32 %v3348, %v3388
      %v3429 = vmul.f32 %v3349, %v3389
      %v3430 = vmul.f32 %v3286, %v3382
      %v3431 = vmul.f32 %v3287, %v3383
      %v3432 = vmul.f32 %v3288, %v3384
      %v3433 = vmul.f32 %v3289, %v3385
      %v3434 = vmul.f32 %v3290, %v3386
      %v3435 = vmul.f32 %v3291, %v3387
      %v3436 = vmul.f32 %v3292, %v3388
      %v3437 = vmul.f32 %v3293, %v3389
      %v3438 = vmul.f32 %v3350, %v3382
      %v3439 = vmul.f32 %v3351, %v3383
      %v3440 = vmul.f32 %v3352, %v3384
      %v3441 = vmul.f32 %v3353, %v3385
      %v3442 = vmul.f32 %v3354, %v3386
      %v3443 = vmul.f32 %v3355, %v3387
      %v3444 = vmul.f32 %v3356, %v3388
      %v3445 = vmul.f32 %v3357, %v3389
      %v3446 = vmul.f32 %v3294, %v3382
      %v3447 = vmul.f32 %v3295, %v3383
      %v3448 = vmul.f32 %v3296, %v3384
      %v3449 = vmul.f32 %v3297, %v3385
      %v3450 = vmul.f32 %v3298, %v3386
      %v3451 = vmul.f32 %v3299, %v3387
      %v3452 = vmul.f32 %v3300, %v3388
      %v3453 = vmul.f32 %v3301, %v3389
      %v3454 = vmul.f32 %v3358, %v3382
      %v3455 = vmul.f32 %v3359, %v3383
      %v3456 = vmul.f32 %v3360, %v3384
      %v3457 = vmul.f32 %v3361, %v3385
      %v3458 = vmul.f32 %v3362, %v3386
      %v3459 = vmul.f32 %v3363, %v3387
      %v3460 = vmul.f32 %v3364, %v3388
      %v3461 = vmul.f32 %v3365, %v3389
      %v3462 = vmul.f32 %v3302, %v3382
      %v3463 = vmul.f32 %v3303, %v3383
      %v3464 = vmul.f32 %v3304, %v3384
      %v3465 = vmul.f32 %v3305, %v3385
      %v3466 = vmul.f32 %v3306, %v3386
      %v3467 = vmul.f32 %v3307, %v3387
      %v3468 = vmul.f32 %v3308, %v3388
      %v3469 = vmul.f32 %v3309, %v3389
      %v3470 = vmul.f32 %v3366, %v3382
      %v3471 = vmul.f32 %v3367, %v3383
      %v3472 = vmul.f32 %v3368, %v3384
      %v3473 = vmul.f32 %v3369, %v3385
      %v3474 = vmul.f32 %v3370, %v3386
      %v3475 = vmul.f32 %v3371, %v3387
      %v3476 = vmul.f32 %v3372, %v3388
      %v3477 = vmul.f32 %v3373, %v3389
      %v3478 = vmul.f32 %v3310, %v3382
      %v3479 = vmul.f32 %v3311, %v3383
      %v3480 = vmul.f32 %v3312, %v3384
      %v3481 = vmul.f32 %v3313, %v3385
      %v3482 = vmul.f32 %v3314, %v3386
      %v3483 = vmul.f32 %v3315, %v3387
      %v3484 = vmul.f32 %v3316, %v3388
      %v3485 = vmul.f32 %v3317, %v3389
      %v3486 = vmul.f32 %v3374, %v3382
      %v3487 = vmul.f32 %v3375, %v3383
      %v3488 = vmul.f32 %v3376, %v3384
      %v3489 = vmul.f32 %v3377, %v3385
      %v3490 = vmul.f32 %v3378, %v3386
      %v3491 = vmul.f32 %v3379, %v3387
      %v3492 = vmul.f32 %v3380, %v3388
      %v3493 = vmul.f32 %v3381, %v3389
      %v3494 = vmul.f32 %v3318, %v3382
      %v3495 = vmul.f32 %v3319, %v3383
      %v3496 = vmul.f32 %v3320, %v3384
      %v3497 = vmul.f32 %v3321, %v3385
      %v3498 = vmul.f32 %v3322, %v3386
      %v3499 = vmul.f32 %v3323, %v3387
      %v3500 = vmul.f32 %v3324, %v3388
      %v3501 = vmul.f32 %v3325, %v3389
      %v3502 = vadd.f32 %v2933, %v3390
      %v3503 = vadd.f32 %v2934, %v3391
      %v3504 = vadd.f32 %v2935, %v3392
      %v3505 = vadd.f32 %v2936, %v3393
      %v3506 = vadd.f32 %v2937, %v3394
      %v3507 = vadd.f32 %v2938, %v3395
      %v3508 = vadd.f32 %v2939, %v3396
      %v3509 = vadd.f32 %v2940, %v3397
      %v3510 = vadd.f32 %v2941, %v3398
      %v3511 = vadd.f32 %v2942, %v3399
      %v3512 = vadd.f32 %v2943, %v3400
      %v3513 = vadd.f32 %v2944, %v3401
      %v3514 = vadd.f32 %v2945, %v3402
      %v3515 = vadd.f32 %v2946, %v3403
      %v3516 = vadd.f32 %v2947, %v3404
      %v3517 = vadd.f32 %v2948, %v3405
      %v3518 = vadd.f32 %v2949, %v3406
      %v3519 = vadd.f32 %v2950, %v3407
      %v3520 = vadd.f32 %v2951, %v3408
      %v3521 = vadd.f32 %v2952, %v3409
      %v3522 = vadd.f32 %v2953, %v3410
      %v3523 = vadd.f32 %v2954, %v3411
      %v3524 = vadd.f32 %v2955, %v3412
      %v3525 = vadd.f32 %v2956, %v3413
      %v3526 = vadd.f32 %v2957, %v3414
      %v3527 = vadd.f32 %v2958, %v3415
      %v3528 = vadd.f32 %v2959, %v3416
      %v3529 = vadd.f32 %v2960, %v3417
      %v3530 = vadd.f32 %v2961, %v3418
      %v3531 = vadd.f32 %v2962, %v3419
      %v3532 = vadd.f32 %v2963, %v3420
      %v3533 = vadd.f32 %v2964, %v3421
      %v3534 = vadd.f32 %v2965, %v3422
      %v3535 = vadd.f32 %v2966, %v3423
      %v3536 = vadd.f32 %v2967, %v3424
      %v3537 = vadd.f32 %v2968, %v3425
      %v3538 = vadd.f32 %v2969, %v3426
      %v3539 = vadd.f32 %v2970, %v3427
      %v3540 = vadd.f32 %v2971, %v3428
      %v3541 = vadd.f32 %v2972, %v3429
      %v3542 = vadd.f32 %v2973, %v3430
      %v3543 = vadd.f32 %v2974, %v3431
      %v3544 = vadd.f32 %v2975, %v3432
      %v3545 = vadd.f32 %v2976, %v3433
      %v3546 = vadd.f32 %v2977, %v3434
      %v3547 = vadd.f32 %v2978, %v3435
      %v3548 = vadd.f32 %v2979, %v3436
      %v3549 = vadd.f32 %v2980, %v3437
      %v3550 = vadd.f32 %v2981, %v3438
      %v3551 = vadd.f32 %v2982, %v3439
      %v3552 = vadd.f32 %v2983, %v3440
      %v3553 = vadd.f32 %v2984, %v3441
      %v3554 = vadd.f32 %v2985, %v3442
      %v3555 = vadd.f32 %v2986, %v3443
      %v3556 = vadd.f32 %v2987, %v3444
      %v3557 = vadd.f32 %v2988, %v3445
      %v3558 = vadd.f32 %v2989, %v3446
      %v3559 = vadd.f32 %v2990, %v3447
      %v3560 = vadd.f32 %v2991, %v3448
      %v3561 = vadd.f32 %v2992, %v3449
      %v3562 = vadd.f32 %v2993, %v3450
      %v3563 = vadd.f32 %v2994, %v3451
      %v3564 = vadd.f32 %v2995, %v3452
      %v3565 = vadd.f32 %v2996, %v3453
      %v3566 = vadd.f32 %v2997, %v3454
      %v3567 = vadd.f32 %v2998, %v3455
      %v3568 = vadd.f32 %v2999, %v3456
      %v3569 = vadd.f32 %v3000, %v3457
      %v3570 = vadd.f32 %v3001, %v3458
      %v3571 = vadd.f32 %v3002, %v3459
      %v3572 = vadd.f32 %v3003, %v3460
      %v3573 = vadd.f32 %v3004, %v3461
      %v3574 = vadd.f32 %v3005, %v3462
      %v3575 = vadd.f32 %v3006, %v3463
      %v3576 = vadd.f32 %v3007, %v3464
      %v3577 = vadd.f32 %v3008, %v3465
      %v3578 = vadd.f32 %v3009, %v3466
      %v3579 = vadd.f32 %v3010, %v3467
      %v3580 = vadd.f32 %v3011, %v3468
      %v3581 = vadd.f32 %v3012, %v3469
      %v3582 = vadd.f32 %v3013, %v3470
      %v3583 = vadd.f32 %v3014, %v3471
      %v3584 = vadd.f32 %v3015, %v3472
      %v3585 = vadd.f32 %v3016, %v3473
      %v3586 = vadd.f32 %v3017, %v3474
      %v3587 = vadd.f32 %v3018, %v3475
      %v3588 = vadd.f32 %v3019, %v3476
      %v3589 = vadd.f32 %v3020, %v3477
      %v3590 = vadd.f32 %v3021, %v3478
      %v3591 = vadd.f32 %v3022, %v3479
      %v3592 = vadd.f32 %v3023, %v3480
      %v3593 = vadd.f32 %v3024, %v3481
      %v3594 = vadd.f32 %v3025, %v3482
      %v3595 = vadd.f32 %v3026, %v3483
      %v3596 = vadd.f32 %v3027, %v3484
      %v3597 = vadd.f32 %v3028, %v3485
      %v3598 = vadd.f32 %v3029, %v3486
      %v3599 = vadd.f32 %v3030, %v3487
      %v3600 = vadd.f32 %v3031, %v3488
      %v3601 = vadd.f32 %v3032, %v3489
      %v3602 = vadd.f32 %v3033, %v3490
      %v3603 = vadd.f32 %v3034, %v3491
      %v3604 = vadd.f32 %v3035, %v3492
      %v3605 = vadd.f32 %v3036, %v3493
      %v3606 = vadd.f32 %v3037, %v3494
      %v3607 = vadd.f32 %v3038, %v3495
      %v3608 = vadd.f32 %v3039, %v3496
      %v3609 = vadd.f32 %v3040, %v3497
      %v3610 = vadd.f32 %v3041, %v3498
      %v3611 = vadd.f32 %v3042, %v3499
      %v3612 = vadd.f32 %v3043, %v3500
      %v3613 = vadd.f32 %v3044, %v3501
      %v3614 = vperm.slane %v625, 7
      %v3615 = vperm.slane %v626, 7
      %v3616 = vperm.slane %v627, 7
      %v3617 = vperm.slane %v628, 7
      %v3618 = vperm.slane %v629, 7
      %v3619 = vperm.slane %v630, 7
      %v3620 = vperm.slane %v631, 7
      %v3621 = vperm.slane %v632, 7
      %v3622 = vmul.f32 %v3046, %v3614
      %v3623 = vmul.f32 %v3047, %v3615
      %v3624 = vmul.f32 %v3048, %v3616
      %v3625 = vmul.f32 %v3049, %v3617
      %v3626 = vmul.f32 %v3050, %v3618
      %v3627 = vmul.f32 %v3051, %v3619
      %v3628 = vmul.f32 %v3052, %v3620
      %v3629 = vmul.f32 %v3053, %v3621
      %v3630 = vmul.f32 %v3054, %v3614
      %v3631 = vmul.f32 %v3055, %v3615
      %v3632 = vmul.f32 %v3056, %v3616
      %v3633 = vmul.f32 %v3057, %v3617
      %v3634 = vmul.f32 %v3058, %v3618
      %v3635 = vmul.f32 %v3059, %v3619
      %v3636 = vmul.f32 %v3060, %v3620
      %v3637 = vmul.f32 %v3061, %v3621
      %v3638 = vmul.f32 %v3062, %v3614
      %v3639 = vmul.f32 %v3063, %v3615
      %v3640 = vmul.f32 %v3064, %v3616
      %v3641 = vmul.f32 %v3065, %v3617
      %v3642 = vmul.f32 %v3066, %v3618
      %v3643 = vmul.f32 %v3067, %v3619
      %v3644 = vmul.f32 %v3068, %v3620
      %v3645 = vmul.f32 %v3069, %v3621
      %v3646 = vmul.f32 %v3070, %v3614
      %v3647 = vmul.f32 %v3071, %v3615
      %v3648 = vmul.f32 %v3072, %v3616
      %v3649 = vmul.f32 %v3073, %v3617
      %v3650 = vmul.f32 %v3074, %v3618
      %v3651 = vmul.f32 %v3075, %v3619
      %v3652 = vmul.f32 %v3076, %v3620
      %v3653 = vmul.f32 %v3077, %v3621
      %v3654 = vmul.f32 %v3078, %v3614
      %v3655 = vmul.f32 %v3079, %v3615
      %v3656 = vmul.f32 %v3080, %v3616
      %v3657 = vmul.f32 %v3081, %v3617
      %v3658 = vmul.f32 %v3082, %v3618
      %v3659 = vmul.f32 %v3083, %v3619
      %v3660 = vmul.f32 %v3084, %v3620
      %v3661 = vmul.f32 %v3085, %v3621
      %v3662 = vmul.f32 %v3086, %v3614
      %v3663 = vmul.f32 %v3087, %v3615
      %v3664 = vmul.f32 %v3088, %v3616
      %v3665 = vmul.f32 %v3089, %v3617
      %v3666 = vmul.f32 %v3090, %v3618
      %v3667 = vmul.f32 %v3091, %v3619
      %v3668 = vmul.f32 %v3092, %v3620
      %v3669 = vmul.f32 %v3093, %v3621
      %v3670 = vmul.f32 %v3094, %v3614
      %v3671 = vmul.f32 %v3095, %v3615
      %v3672 = vmul.f32 %v3096, %v3616
      %v3673 = vmul.f32 %v3097, %v3617
      %v3674 = vmul.f32 %v3098, %v3618
      %v3675 = vmul.f32 %v3099, %v3619
      %v3676 = vmul.f32 %v3100, %v3620
      %v3677 = vmul.f32 %v3101, %v3621
      %v3678 = vmul.f32 %v3102, %v3614
      %v3679 = vmul.f32 %v3103, %v3615
      %v3680 = vmul.f32 %v3104, %v3616
      %v3681 = vmul.f32 %v3105, %v3617
      %v3682 = vmul.f32 %v3106, %v3618
      %v3683 = vmul.f32 %v3107, %v3619
      %v3684 = vmul.f32 %v3108, %v3620
      %v3685 = vmul.f32 %v3109, %v3621
      %v3686 = vmul.f32 %v3110, %v3614
      %v3687 = vmul.f32 %v3111, %v3615
      %v3688 = vmul.f32 %v3112, %v3616
      %v3689 = vmul.f32 %v3113, %v3617
      %v3690 = vmul.f32 %v3114, %v3618
      %v3691 = vmul.f32 %v3115, %v3619
      %v3692 = vmul.f32 %v3116, %v3620
      %v3693 = vmul.f32 %v3117, %v3621
      %v3694 = vmul.f32 %v3118, %v3614
      %v3695 = vmul.f32 %v3119, %v3615
      %v3696 = vmul.f32 %v3120, %v3616
      %v3697 = vmul.f32 %v3121, %v3617
      %v3698 = vmul.f32 %v3122, %v3618
      %v3699 = vmul.f32 %v3123, %v3619
      %v3700 = vmul.f32 %v3124, %v3620
      %v3701 = vmul.f32 %v3125, %v3621
      %v3702 = vmul.f32 %v3126, %v3614
      %v3703 = vmul.f32 %v3127, %v3615
      %v3704 = vmul.f32 %v3128, %v3616
      %v3705 = vmul.f32 %v3129, %v3617
      %v3706 = vmul.f32 %v3130, %v3618
      %v3707 = vmul.f32 %v3131, %v3619
      %v3708 = vmul.f32 %v3132, %v3620
      %v3709 = vmul.f32 %v3133, %v3621
      %v3710 = vmul.f32 %v3134, %v3614
      %v3711 = vmul.f32 %v3135, %v3615
      %v3712 = vmul.f32 %v3136, %v3616
      %v3713 = vmul.f32 %v3137, %v3617
      %v3714 = vmul.f32 %v3138, %v3618
      %v3715 = vmul.f32 %v3139, %v3619
      %v3716 = vmul.f32 %v3140, %v3620
      %v3717 = vmul.f32 %v3141, %v3621
      %v3718 = vmul.f32 %v3142, %v3614
      %v3719 = vmul.f32 %v3143, %v3615
      %v3720 = vmul.f32 %v3144, %v3616
      %v3721 = vmul.f32 %v3145, %v3617
      %v3722 = vmul.f32 %v3146, %v3618
      %v3723 = vmul.f32 %v3147, %v3619
      %v3724 = vmul.f32 %v3148, %v3620
      %v3725 = vmul.f32 %v3149, %v3621
      %v3726 = vmul.f32 %v3150, %v3614
      %v3727 = vmul.f32 %v3151, %v3615
      %v3728 = vmul.f32 %v3152, %v3616
      %v3729 = vmul.f32 %v3153, %v3617
      %v3730 = vmul.f32 %v3154, %v3618
      %v3731 = vmul.f32 %v3155, %v3619
      %v3732 = vmul.f32 %v3156, %v3620
      %v3733 = vmul.f32 %v3157, %v3621
      %v3734 = vadd.f32 %v3502, %v3622
      %v3735 = vadd.f32 %v3503, %v3623
      %v3736 = vadd.f32 %v3504, %v3624
      %v3737 = vadd.f32 %v3505, %v3625
      %v3738 = vadd.f32 %v3506, %v3626
      %v3739 = vadd.f32 %v3507, %v3627
      %v3740 = vadd.f32 %v3508, %v3628
      %v3741 = vadd.f32 %v3509, %v3629
      %v3742 = vadd.f32 %v3510, %v3630
      %v3743 = vadd.f32 %v3511, %v3631
      %v3744 = vadd.f32 %v3512, %v3632
      %v3745 = vadd.f32 %v3513, %v3633
      %v3746 = vadd.f32 %v3514, %v3634
      %v3747 = vadd.f32 %v3515, %v3635
      %v3748 = vadd.f32 %v3516, %v3636
      %v3749 = vadd.f32 %v3517, %v3637
      %v3750 = vadd.f32 %v3518, %v3638
      %v3751 = vadd.f32 %v3519, %v3639
      %v3752 = vadd.f32 %v3520, %v3640
      %v3753 = vadd.f32 %v3521, %v3641
      %v3754 = vadd.f32 %v3522, %v3642
      %v3755 = vadd.f32 %v3523, %v3643
      %v3756 = vadd.f32 %v3524, %v3644
      %v3757 = vadd.f32 %v3525, %v3645
      %v3758 = vadd.f32 %v3526, %v3646
      %v3759 = vadd.f32 %v3527, %v3647
      %v3760 = vadd.f32 %v3528, %v3648
      %v3761 = vadd.f32 %v3529, %v3649
      %v3762 = vadd.f32 %v3530, %v3650
      %v3763 = vadd.f32 %v3531, %v3651
      %v3764 = vadd.f32 %v3532, %v3652
      %v3765 = vadd.f32 %v3533, %v3653
      %v3766 = vadd.f32 %v3534, %v3654
      %v3767 = vadd.f32 %v3535, %v3655
      %v3768 = vadd.f32 %v3536, %v3656
      %v3769 = vadd.f32 %v3537, %v3657
      %v3770 = vadd.f32 %v3538, %v3658
      %v3771 = vadd.f32 %v3539, %v3659
      %v3772 = vadd.f32 %v3540, %v3660
      %v3773 = vadd.f32 %v3541, %v3661
      %v3774 = vadd.f32 %v3542, %v3662
      %v3775 = vadd.f32 %v3543, %v3663
      %v3776 = vadd.f32 %v3544, %v3664
      %v3777 = vadd.f32 %v3545, %v3665
      %v3778 = vadd.f32 %v3546, %v3666
      %v3779 = vadd.f32 %v3547, %v3667
      %v3780 = vadd.f32 %v3548, %v3668
      %v3781 = vadd.f32 %v3549, %v3669
      %v3782 = vadd.f32 %v3550, %v3670
      %v3783 = vadd.f32 %v3551, %v3671
      %v3784 = vadd.f32 %v3552, %v3672
      %v3785 = vadd.f32 %v3553, %v3673
      %v3786 = vadd.f32 %v3554, %v3674
      %v3787 = vadd.f32 %v3555, %v3675
      %v3788 = vadd.f32 %v3556, %v3676
      %v3789 = vadd.f32 %v3557, %v3677
      %v3790 = vadd.f32 %v3558, %v3678
      %v3791 = vadd.f32 %v3559, %v3679
      %v3792 = vadd.f32 %v3560, %v3680
      %v3793 = vadd.f32 %v3561, %v3681
      %v3794 = vadd.f32 %v3562, %v3682
      %v3795 = vadd.f32 %v3563, %v3683
      %v3796 = vadd.f32 %v3564, %v3684
      %v3797 = vadd.f32 %v3565, %v3685
      %v3798 = vadd.f32 %v3566, %v3686
      %v3799 = vadd.f32 %v3567, %v3687
      %v3800 = vadd.f32 %v3568, %v3688
      %v3801 = vadd.f32 %v3569, %v3689
      %v3802 = vadd.f32 %v3570, %v3690
      %v3803 = vadd.f32 %v3571, %v3691
      %v3804 = vadd.f32 %v3572, %v3692
      %v3805 = vadd.f32 %v3573, %v3693
      %v3806 = vadd.f32 %v3574, %v3694
      %v3807 = vadd.f32 %v3575, %v3695
      %v3808 = vadd.f32 %v3576, %v3696
      %v3809 = vadd.f32 %v3577, %v3697
      %v3810 = vadd.f32 %v3578, %v3698
      %v3811 = vadd.f32 %v3579, %v3699
      %v3812 = vadd.f32 %v3580, %v3700
      %v3813 = vadd.f32 %v3581, %v3701
      %v3814 = vadd.f32 %v3582, %v3702
      %v3815 = vadd.f32 %v3583, %v3703
      %v3816 = vadd.f32 %v3584, %v3704
      %v3817 = vadd.f32 %v3585, %v3705
      %v3818 = vadd.f32 %v3586, %v3706
      %v3819 = vadd.f32 %v3587, %v3707
      %v3820 = vadd.f32 %v3588, %v3708
      %v3821 = vadd.f32 %v3589, %v3709
      %v3822 = vadd.f32 %v3590, %v3710
      %v3823 = vadd.f32 %v3591, %v3711
      %v3824 = vadd.f32 %v3592, %v3712
      %v3825 = vadd.f32 %v3593, %v3713
      %v3826 = vadd.f32 %v3594, %v3714
      %v3827 = vadd.f32 %v3595, %v3715
      %v3828 = vadd.f32 %v3596, %v3716
      %v3829 = vadd.f32 %v3597, %v3717
      %v3830 = vadd.f32 %v3598, %v3718
      %v3831 = vadd.f32 %v3599, %v3719
      %v3832 = vadd.f32 %v3600, %v3720
      %v3833 = vadd.f32 %v3601, %v3721
      %v3834 = vadd.f32 %v3602, %v3722
      %v3835 = vadd.f32 %v3603, %v3723
      %v3836 = vadd.f32 %v3604, %v3724
      %v3837 = vadd.f32 %v3605, %v3725
      %v3838 = vadd.f32 %v3606, %v3726
      %v3839 = vadd.f32 %v3607, %v3727
      %v3840 = vadd.f32 %v3608, %v3728
      %v3841 = vadd.f32 %v3609, %v3729
      %v3842 = vadd.f32 %v3610, %v3730
      %v3843 = vadd.f32 %v3611, %v3731
      %v3844 = vadd.f32 %v3612, %v3732
      %v3845 = vadd.f32 %v3613, %v3733
      %v3846 = vrot.slane %v3046, 1
      %v3847 = vrot.slane %v3047, 1
      %v3848 = vrot.slane %v3048, 1
      %v3849 = vrot.slane %v3049, 1
      %v3850 = vrot.slane %v3050, 1
      %v3851 = vrot.slane %v3051, 1
      %v3852 = vrot.slane %v3052, 1
      %v3853 = vrot.slane %v3053, 1
      %v3854 = vrot.slane %v3062, 1
      %v3855 = vrot.slane %v3063, 1
      %v3856 = vrot.slane %v3064, 1
      %v3857 = vrot.slane %v3065, 1
      %v3858 = vrot.slane %v3066, 1
      %v3859 = vrot.slane %v3067, 1
      %v3860 = vrot.slane %v3068, 1
      %v3861 = vrot.slane %v3069, 1
      %v3862 = vrot.slane %v3078, 1
      %v3863 = vrot.slane %v3079, 1
      %v3864 = vrot.slane %v3080, 1
      %v3865 = vrot.slane %v3081, 1
      %v3866 = vrot.slane %v3082, 1
      %v3867 = vrot.slane %v3083, 1
      %v3868 = vrot.slane %v3084, 1
      %v3869 = vrot.slane %v3085, 1
      %v3870 = vrot.slane %v3094, 1
      %v3871 = vrot.slane %v3095, 1
      %v3872 = vrot.slane %v3096, 1
      %v3873 = vrot.slane %v3097, 1
      %v3874 = vrot.slane %v3098, 1
      %v3875 = vrot.slane %v3099, 1
      %v3876 = vrot.slane %v3100, 1
      %v3877 = vrot.slane %v3101, 1
      %v3878 = vrot.slane %v3110, 1
      %v3879 = vrot.slane %v3111, 1
      %v3880 = vrot.slane %v3112, 1
      %v3881 = vrot.slane %v3113, 1
      %v3882 = vrot.slane %v3114, 1
      %v3883 = vrot.slane %v3115, 1
      %v3884 = vrot.slane %v3116, 1
      %v3885 = vrot.slane %v3117, 1
      %v3886 = vrot.slane %v3126, 1
      %v3887 = vrot.slane %v3127, 1
      %v3888 = vrot.slane %v3128, 1
      %v3889 = vrot.slane %v3129, 1
      %v3890 = vrot.slane %v3130, 1
      %v3891 = vrot.slane %v3131, 1
      %v3892 = vrot.slane %v3132, 1
      %v3893 = vrot.slane %v3133, 1
      %v3894 = vrot.slane %v3142, 1
      %v3895 = vrot.slane %v3143, 1
      %v3896 = vrot.slane %v3144, 1
      %v3897 = vrot.slane %v3145, 1
      %v3898 = vrot.slane %v3146, 1
      %v3899 = vrot.slane %v3147, 1
      %v3900 = vrot.slane %v3148, 1
      %v3901 = vrot.slane %v3149, 1
      %v3902 = vrot.slane %v3054, 1
      %v3903 = vrot.slane %v3055, 1
      %v3904 = vrot.slane %v3056, 1
      %v3905 = vrot.slane %v3057, 1
      %v3906 = vrot.slane %v3058, 1
      %v3907 = vrot.slane %v3059, 1
      %v3908 = vrot.slane %v3060, 1
      %v3909 = vrot.slane %v3061, 1
      %v3910 = vrot.slane %v3070, 1
      %v3911 = vrot.slane %v3071, 1
      %v3912 = vrot.slane %v3072, 1
      %v3913 = vrot.slane %v3073, 1
      %v3914 = vrot.slane %v3074, 1
      %v3915 = vrot.slane %v3075, 1
      %v3916 = vrot.slane %v3076, 1
      %v3917 = vrot.slane %v3077, 1
      %v3918 = vrot.slane %v3086, 1
      %v3919 = vrot.slane %v3087, 1
      %v3920 = vrot.slane %v3088, 1
      %v3921 = vrot.slane %v3089, 1
      %v3922 = vrot.slane %v3090, 1
      %v3923 = vrot.slane %v3091, 1
      %v3924 = vrot.slane %v3092, 1
      %v3925 = vrot.slane %v3093, 1
      %v3926 = vrot.slane %v3102, 1
      %v3927 = vrot.slane %v3103, 1
      %v3928 = vrot.slane %v3104, 1
      %v3929 = vrot.slane %v3105, 1
      %v3930 = vrot.slane %v3106, 1
      %v3931 = vrot.slane %v3107, 1
      %v3932 = vrot.slane %v3108, 1
      %v3933 = vrot.slane %v3109, 1
      %v3934 = vrot.slane %v3118, 1
      %v3935 = vrot.slane %v3119, 1
      %v3936 = vrot.slane %v3120, 1
      %v3937 = vrot.slane %v3121, 1
      %v3938 = vrot.slane %v3122, 1
      %v3939 = vrot.slane %v3123, 1
      %v3940 = vrot.slane %v3124, 1
      %v3941 = vrot.slane %v3125, 1
      %v3942 = vrot.slane %v3134, 1
      %v3943 = vrot.slane %v3135, 1
      %v3944 = vrot.slane %v3136, 1
      %v3945 = vrot.slane %v3137, 1
      %v3946 = vrot.slane %v3138, 1
      %v3947 = vrot.slane %v3139, 1
      %v3948 = vrot.slane %v3140, 1
      %v3949 = vrot.slane %v3141, 1
      %v3950 = vrot.slane %v3150, 1
      %v3951 = vrot.slane %v3151, 1
      %v3952 = vrot.slane %v3152, 1
      %v3953 = vrot.slane %v3153, 1
      %v3954 = vrot.slane %v3154, 1
      %v3955 = vrot.slane %v3155, 1
      %v3956 = vrot.slane %v3156, 1
      %v3957 = vrot.slane %v3157, 1
      %v3958 = vsel %vm1444, %v3846, %v3902
      %v3959 = vsel %vm1444, %v3847, %v3903
      %v3960 = vsel %vm1444, %v3848, %v3904
      %v3961 = vsel %vm1444, %v3849, %v3905
      %v3962 = vsel %vm1444, %v3850, %v3906
      %v3963 = vsel %vm1444, %v3851, %v3907
      %v3964 = vsel %vm1444, %v3852, %v3908
      %v3965 = vsel %vm1444, %v3853, %v3909
      %v3966 = vsel %vm1444, %v3854, %v3910
      %v3967 = vsel %vm1444, %v3855, %v3911
      %v3968 = vsel %vm1444, %v3856, %v3912
      %v3969 = vsel %vm1444, %v3857, %v3913
      %v3970 = vsel %vm1444, %v3858, %v3914
      %v3971 = vsel %vm1444, %v3859, %v3915
      %v3972 = vsel %vm1444, %v3860, %v3916
      %v3973 = vsel %vm1444, %v3861, %v3917
      %v3974 = vsel %vm1444, %v3862, %v3918
      %v3975 = vsel %vm1444, %v3863, %v3919
      %v3976 = vsel %vm1444, %v3864, %v3920
      %v3977 = vsel %vm1444, %v3865, %v3921
      %v3978 = vsel %vm1444, %v3866, %v3922
      %v3979 = vsel %vm1444, %v3867, %v3923
      %v3980 = vsel %vm1444, %v3868, %v3924
      %v3981 = vsel %vm1444, %v3869, %v3925
      %v3982 = vsel %vm1444, %v3870, %v3926
      %v3983 = vsel %vm1444, %v3871, %v3927
      %v3984 = vsel %vm1444, %v3872, %v3928
      %v3985 = vsel %vm1444, %v3873, %v3929
      %v3986 = vsel %vm1444, %v3874, %v3930
      %v3987 = vsel %vm1444, %v3875, %v3931
      %v3988 = vsel %vm1444, %v3876, %v3932
      %v3989 = vsel %vm1444, %v3877, %v3933
      %v3990 = vsel %vm1444, %v3878, %v3934
      %v3991 = vsel %vm1444, %v3879, %v3935
      %v3992 = vsel %vm1444, %v3880, %v3936
      %v3993 = vsel %vm1444, %v3881, %v3937
      %v3994 = vsel %vm1444, %v3882, %v3938
      %v3995 = vsel %vm1444, %v3883, %v3939
      %v3996 = vsel %vm1444, %v3884, %v3940
      %v3997 = vsel %vm1444, %v3885, %v3941
      %v3998 = vsel %vm1444, %v3886, %v3942
      %v3999 = vsel %vm1444, %v3887, %v3943
      %v4000 = vsel %vm1444, %v3888, %v3944
      %v4001 = vsel %vm1444, %v3889, %v3945
      %v4002 = vsel %vm1444, %v3890, %v3946
      %v4003 = vsel %vm1444, %v3891, %v3947
      %v4004 = vsel %vm1444, %v3892, %v3948
      %v4005 = vsel %vm1444, %v3893, %v3949
      %v4006 = vsel %vm1444, %v3894, %v3950
      %v4007 = vsel %vm1444, %v3895, %v3951
      %v4008 = vsel %vm1444, %v3896, %v3952
      %v4009 = vsel %vm1444, %v3897, %v3953
      %v4010 = vsel %vm1444, %v3898, %v3954
      %v4011 = vsel %vm1444, %v3899, %v3955
      %v4012 = vsel %vm1444, %v3900, %v3956
      %v4013 = vsel %vm1444, %v3901, %v3957
      %v4014 = vsel %vm1444, %v3902, %v3846
      %v4015 = vsel %vm1444, %v3903, %v3847
      %v4016 = vsel %vm1444, %v3904, %v3848
      %v4017 = vsel %vm1444, %v3905, %v3849
      %v4018 = vsel %vm1444, %v3906, %v3850
      %v4019 = vsel %vm1444, %v3907, %v3851
      %v4020 = vsel %vm1444, %v3908, %v3852
      %v4021 = vsel %vm1444, %v3909, %v3853
      %v4022 = vsel %vm1444, %v3910, %v3854
      %v4023 = vsel %vm1444, %v3911, %v3855
      %v4024 = vsel %vm1444, %v3912, %v3856
      %v4025 = vsel %vm1444, %v3913, %v3857
      %v4026 = vsel %vm1444, %v3914, %v3858
      %v4027 = vsel %vm1444, %v3915, %v3859
      %v4028 = vsel %vm1444, %v3916, %v3860
      %v4029 = vsel %vm1444, %v3917, %v3861
      %v4030 = vsel %vm1444, %v3918, %v3862
      %v4031 = vsel %vm1444, %v3919, %v3863
      %v4032 = vsel %vm1444, %v3920, %v3864
      %v4033 = vsel %vm1444, %v3921, %v3865
      %v4034 = vsel %vm1444, %v3922, %v3866
      %v4035 = vsel %vm1444, %v3923, %v3867
      %v4036 = vsel %vm1444, %v3924, %v3868
      %v4037 = vsel %vm1444, %v3925, %v3869
      %v4038 = vsel %vm1444, %v3926, %v3870
      %v4039 = vsel %vm1444, %v3927, %v3871
      %v4040 = vsel %vm1444, %v3928, %v3872
      %v4041 = vsel %vm1444, %v3929, %v3873
      %v4042 = vsel %vm1444, %v3930, %v3874
      %v4043 = vsel %vm1444, %v3931, %v3875
      %v4044 = vsel %vm1444, %v3932, %v3876
      %v4045 = vsel %vm1444, %v3933, %v3877
      %v4046 = vsel %vm1444, %v3934, %v3878
      %v4047 = vsel %vm1444, %v3935, %v3879
      %v4048 = vsel %vm1444, %v3936, %v3880
      %v4049 = vsel %vm1444, %v3937, %v3881
      %v4050 = vsel %vm1444, %v3938, %v3882
      %v4051 = vsel %vm1444, %v3939, %v3883
      %v4052 = vsel %vm1444, %v3940, %v3884
      %v4053 = vsel %vm1444, %v3941, %v3885
      %v4054 = vsel %vm1444, %v3942, %v3886
      %v4055 = vsel %vm1444, %v3943, %v3887
      %v4056 = vsel %vm1444, %v3944, %v3888
      %v4057 = vsel %vm1444, %v3945, %v3889
      %v4058 = vsel %vm1444, %v3946, %v3890
      %v4059 = vsel %vm1444, %v3947, %v3891
      %v4060 = vsel %vm1444, %v3948, %v3892
      %v4061 = vsel %vm1444, %v3949, %v3893
      %v4062 = vsel %vm1444, %v3950, %v3894
      %v4063 = vsel %vm1444, %v3951, %v3895
      %v4064 = vsel %vm1444, %v3952, %v3896
      %v4065 = vsel %vm1444, %v3953, %v3897
      %v4066 = vsel %vm1444, %v3954, %v3898
      %v4067 = vsel %vm1444, %v3955, %v3899
      %v4068 = vsel %vm1444, %v3956, %v3900
      %v4069 = vsel %vm1444, %v3957, %v3901
      %v4070 = vperm.slane %v633, 0
      %v4071 = vperm.slane %v634, 0
      %v4072 = vperm.slane %v635, 0
      %v4073 = vperm.slane %v636, 0
      %v4074 = vperm.slane %v637, 0
      %v4075 = vperm.slane %v638, 0
      %v4076 = vperm.slane %v639, 0
      %v4077 = vperm.slane %v640, 0
      %v4078 = vmul.f32 %v3958, %v4070
      %v4079 = vmul.f32 %v3959, %v4071
      %v4080 = vmul.f32 %v3960, %v4072
      %v4081 = vmul.f32 %v3961, %v4073
      %v4082 = vmul.f32 %v3962, %v4074
      %v4083 = vmul.f32 %v3963, %v4075
      %v4084 = vmul.f32 %v3964, %v4076
      %v4085 = vmul.f32 %v3965, %v4077
      %v4086 = vmul.f32 %v4014, %v4070
      %v4087 = vmul.f32 %v4015, %v4071
      %v4088 = vmul.f32 %v4016, %v4072
      %v4089 = vmul.f32 %v4017, %v4073
      %v4090 = vmul.f32 %v4018, %v4074
      %v4091 = vmul.f32 %v4019, %v4075
      %v4092 = vmul.f32 %v4020, %v4076
      %v4093 = vmul.f32 %v4021, %v4077
      %v4094 = vmul.f32 %v3966, %v4070
      %v4095 = vmul.f32 %v3967, %v4071
      %v4096 = vmul.f32 %v3968, %v4072
      %v4097 = vmul.f32 %v3969, %v4073
      %v4098 = vmul.f32 %v3970, %v4074
      %v4099 = vmul.f32 %v3971, %v4075
      %v4100 = vmul.f32 %v3972, %v4076
      %v4101 = vmul.f32 %v3973, %v4077
      %v4102 = vmul.f32 %v4022, %v4070
      %v4103 = vmul.f32 %v4023, %v4071
      %v4104 = vmul.f32 %v4024, %v4072
      %v4105 = vmul.f32 %v4025, %v4073
      %v4106 = vmul.f32 %v4026, %v4074
      %v4107 = vmul.f32 %v4027, %v4075
      %v4108 = vmul.f32 %v4028, %v4076
      %v4109 = vmul.f32 %v4029, %v4077
      %v4110 = vmul.f32 %v3974, %v4070
      %v4111 = vmul.f32 %v3975, %v4071
      %v4112 = vmul.f32 %v3976, %v4072
      %v4113 = vmul.f32 %v3977, %v4073
      %v4114 = vmul.f32 %v3978, %v4074
      %v4115 = vmul.f32 %v3979, %v4075
      %v4116 = vmul.f32 %v3980, %v4076
      %v4117 = vmul.f32 %v3981, %v4077
      %v4118 = vmul.f32 %v4030, %v4070
      %v4119 = vmul.f32 %v4031, %v4071
      %v4120 = vmul.f32 %v4032, %v4072
      %v4121 = vmul.f32 %v4033, %v4073
      %v4122 = vmul.f32 %v4034, %v4074
      %v4123 = vmul.f32 %v4035, %v4075
      %v4124 = vmul.f32 %v4036, %v4076
      %v4125 = vmul.f32 %v4037, %v4077
      %v4126 = vmul.f32 %v3982, %v4070
      %v4127 = vmul.f32 %v3983, %v4071
      %v4128 = vmul.f32 %v3984, %v4072
      %v4129 = vmul.f32 %v3985, %v4073
      %v4130 = vmul.f32 %v3986, %v4074
      %v4131 = vmul.f32 %v3987, %v4075
      %v4132 = vmul.f32 %v3988, %v4076
      %v4133 = vmul.f32 %v3989, %v4077
      %v4134 = vmul.f32 %v4038, %v4070
      %v4135 = vmul.f32 %v4039, %v4071
      %v4136 = vmul.f32 %v4040, %v4072
      %v4137 = vmul.f32 %v4041, %v4073
      %v4138 = vmul.f32 %v4042, %v4074
      %v4139 = vmul.f32 %v4043, %v4075
      %v4140 = vmul.f32 %v4044, %v4076
      %v4141 = vmul.f32 %v4045, %v4077
      %v4142 = vmul.f32 %v3990, %v4070
      %v4143 = vmul.f32 %v3991, %v4071
      %v4144 = vmul.f32 %v3992, %v4072
      %v4145 = vmul.f32 %v3993, %v4073
      %v4146 = vmul.f32 %v3994, %v4074
      %v4147 = vmul.f32 %v3995, %v4075
      %v4148 = vmul.f32 %v3996, %v4076
      %v4149 = vmul.f32 %v3997, %v4077
      %v4150 = vmul.f32 %v4046, %v4070
      %v4151 = vmul.f32 %v4047, %v4071
      %v4152 = vmul.f32 %v4048, %v4072
      %v4153 = vmul.f32 %v4049, %v4073
      %v4154 = vmul.f32 %v4050, %v4074
      %v4155 = vmul.f32 %v4051, %v4075
      %v4156 = vmul.f32 %v4052, %v4076
      %v4157 = vmul.f32 %v4053, %v4077
      %v4158 = vmul.f32 %v3998, %v4070
      %v4159 = vmul.f32 %v3999, %v4071
      %v4160 = vmul.f32 %v4000, %v4072
      %v4161 = vmul.f32 %v4001, %v4073
      %v4162 = vmul.f32 %v4002, %v4074
      %v4163 = vmul.f32 %v4003, %v4075
      %v4164 = vmul.f32 %v4004, %v4076
      %v4165 = vmul.f32 %v4005, %v4077
      %v4166 = vmul.f32 %v4054, %v4070
      %v4167 = vmul.f32 %v4055, %v4071
      %v4168 = vmul.f32 %v4056, %v4072
      %v4169 = vmul.f32 %v4057, %v4073
      %v4170 = vmul.f32 %v4058, %v4074
      %v4171 = vmul.f32 %v4059, %v4075
      %v4172 = vmul.f32 %v4060, %v4076
      %v4173 = vmul.f32 %v4061, %v4077
      %v4174 = vmul.f32 %v4006, %v4070
      %v4175 = vmul.f32 %v4007, %v4071
      %v4176 = vmul.f32 %v4008, %v4072
      %v4177 = vmul.f32 %v4009, %v4073
      %v4178 = vmul.f32 %v4010, %v4074
      %v4179 = vmul.f32 %v4011, %v4075
      %v4180 = vmul.f32 %v4012, %v4076
      %v4181 = vmul.f32 %v4013, %v4077
      %v4182 = vmul.f32 %v4062, %v4070
      %v4183 = vmul.f32 %v4063, %v4071
      %v4184 = vmul.f32 %v4064, %v4072
      %v4185 = vmul.f32 %v4065, %v4073
      %v4186 = vmul.f32 %v4066, %v4074
      %v4187 = vmul.f32 %v4067, %v4075
      %v4188 = vmul.f32 %v4068, %v4076
      %v4189 = vmul.f32 %v4069, %v4077
      %v4190 = vadd.f32 %v3734, %v4078
      %v4191 = vadd.f32 %v3735, %v4079
      %v4192 = vadd.f32 %v3736, %v4080
      %v4193 = vadd.f32 %v3737, %v4081
      %v4194 = vadd.f32 %v3738, %v4082
      %v4195 = vadd.f32 %v3739, %v4083
      %v4196 = vadd.f32 %v3740, %v4084
      %v4197 = vadd.f32 %v3741, %v4085
      %v4198 = vadd.f32 %v3742, %v4086
      %v4199 = vadd.f32 %v3743, %v4087
      %v4200 = vadd.f32 %v3744, %v4088
      %v4201 = vadd.f32 %v3745, %v4089
      %v4202 = vadd.f32 %v3746, %v4090
      %v4203 = vadd.f32 %v3747, %v4091
      %v4204 = vadd.f32 %v3748, %v4092
      %v4205 = vadd.f32 %v3749, %v4093
      %v4206 = vadd.f32 %v3750, %v4094
      %v4207 = vadd.f32 %v3751, %v4095
      %v4208 = vadd.f32 %v3752, %v4096
      %v4209 = vadd.f32 %v3753, %v4097
      %v4210 = vadd.f32 %v3754, %v4098
      %v4211 = vadd.f32 %v3755, %v4099
      %v4212 = vadd.f32 %v3756, %v4100
      %v4213 = vadd.f32 %v3757, %v4101
      %v4214 = vadd.f32 %v3758, %v4102
      %v4215 = vadd.f32 %v3759, %v4103
      %v4216 = vadd.f32 %v3760, %v4104
      %v4217 = vadd.f32 %v3761, %v4105
      %v4218 = vadd.f32 %v3762, %v4106
      %v4219 = vadd.f32 %v3763, %v4107
      %v4220 = vadd.f32 %v3764, %v4108
      %v4221 = vadd.f32 %v3765, %v4109
      %v4222 = vadd.f32 %v3766, %v4110
      %v4223 = vadd.f32 %v3767, %v4111
      %v4224 = vadd.f32 %v3768, %v4112
      %v4225 = vadd.f32 %v3769, %v4113
      %v4226 = vadd.f32 %v3770, %v4114
      %v4227 = vadd.f32 %v3771, %v4115
      %v4228 = vadd.f32 %v3772, %v4116
      %v4229 = vadd.f32 %v3773, %v4117
      %v4230 = vadd.f32 %v3774, %v4118
      %v4231 = vadd.f32 %v3775, %v4119
      %v4232 = vadd.f32 %v3776, %v4120
      %v4233 = vadd.f32 %v3777, %v4121
      %v4234 = vadd.f32 %v3778, %v4122
      %v4235 = vadd.f32 %v3779, %v4123
      %v4236 = vadd.f32 %v3780, %v4124
      %v4237 = vadd.f32 %v3781, %v4125
      %v4238 = vadd.f32 %v3782, %v4126
      %v4239 = vadd.f32 %v3783, %v4127
      %v4240 = vadd.f32 %v3784, %v4128
      %v4241 = vadd.f32 %v3785, %v4129
      %v4242 = vadd.f32 %v3786, %v4130
      %v4243 = vadd.f32 %v3787, %v4131
      %v4244 = vadd.f32 %v3788, %v4132
      %v4245 = vadd.f32 %v3789, %v4133
      %v4246 = vadd.f32 %v3790, %v4134
      %v4247 = vadd.f32 %v3791, %v4135
      %v4248 = vadd.f32 %v3792, %v4136
      %v4249 = vadd.f32 %v3793, %v4137
      %v4250 = vadd.f32 %v3794, %v4138
      %v4251 = vadd.f32 %v3795, %v4139
      %v4252 = vadd.f32 %v3796, %v4140
      %v4253 = vadd.f32 %v3797, %v4141
      %v4254 = vadd.f32 %v3798, %v4142
      %v4255 = vadd.f32 %v3799, %v4143
      %v4256 = vadd.f32 %v3800, %v4144
      %v4257 = vadd.f32 %v3801, %v4145
      %v4258 = vadd.f32 %v3802, %v4146
      %v4259 = vadd.f32 %v3803, %v4147
      %v4260 = vadd.f32 %v3804, %v4148
      %v4261 = vadd.f32 %v3805, %v4149
      %v4262 = vadd.f32 %v3806, %v4150
      %v4263 = vadd.f32 %v3807, %v4151
      %v4264 = vadd.f32 %v3808, %v4152
      %v4265 = vadd.f32 %v3809, %v4153
      %v4266 = vadd.f32 %v3810, %v4154
      %v4267 = vadd.f32 %v3811, %v4155
      %v4268 = vadd.f32 %v3812, %v4156
      %v4269 = vadd.f32 %v3813, %v4157
      %v4270 = vadd.f32 %v3814, %v4158
      %v4271 = vadd.f32 %v3815, %v4159
      %v4272 = vadd.f32 %v3816, %v4160
      %v4273 = vadd.f32 %v3817, %v4161
      %v4274 = vadd.f32 %v3818, %v4162
      %v4275 = vadd.f32 %v3819, %v4163
      %v4276 = vadd.f32 %v3820, %v4164
      %v4277 = vadd.f32 %v3821, %v4165
      %v4278 = vadd.f32 %v3822, %v4166
      %v4279 = vadd.f32 %v3823, %v4167
      %v4280 = vadd.f32 %v3824, %v4168
      %v4281 = vadd.f32 %v3825, %v4169
      %v4282 = vadd.f32 %v3826, %v4170
      %v4283 = vadd.f32 %v3827, %v4171
      %v4284 = vadd.f32 %v3828, %v4172
      %v4285 = vadd.f32 %v3829, %v4173
      %v4286 = vadd.f32 %v3830, %v4174
      %v4287 = vadd.f32 %v3831, %v4175
      %v4288 = vadd.f32 %v3832, %v4176
      %v4289 = vadd.f32 %v3833, %v4177
      %v4290 = vadd.f32 %v3834, %v4178
      %v4291 = vadd.f32 %v3835, %v4179
      %v4292 = vadd.f32 %v3836, %v4180
      %v4293 = vadd.f32 %v3837, %v4181
      %v4294 = vadd.f32 %v3838, %v4182
      %v4295 = vadd.f32 %v3839, %v4183
      %v4296 = vadd.f32 %v3840, %v4184
      %v4297 = vadd.f32 %v3841, %v4185
      %v4298 = vadd.f32 %v3842, %v4186
      %v4299 = vadd.f32 %v3843, %v4187
      %v4300 = vadd.f32 %v3844, %v4188
      %v4301 = vadd.f32 %v3845, %v4189
      %4302 = vst [vmem:[%s167] sm:$0xff] %v4190
      %4303 = vst [vmem:[%s167 + $0x8] sm:$0xff] %v4191
      %4304 = vst [vmem:[%s167 + $0x10] sm:$0xff] %v4192
      %4305 = vst [vmem:[%s167 + $0x18] sm:$0xff] %v4193
      %4306 = vst [vmem:[%s167 + $0x20] sm:$0xff] %v4194
      %4307 = vst [vmem:[%s167 + $0x28] sm:$0xff] %v4195
      %4308 = vst [vmem:[%s167 + $0x30] sm:$0xff] %v4196
      %4309 = vst.msk [vmem:[%s167 + $0x38] sm:$0xff] %vm177, %v4197
      %4310 = vst [vmem:[%s167 + $0x40] sm:$0x3f] %v4198
      %4311 = vst [vmem:[%s167 + $0x48] sm:$0x3f] %v4199
      %4312 = vst [vmem:[%s167 + $0x50] sm:$0x3f] %v4200
      %4313 = vst [vmem:[%s167 + $0x58] sm:$0x3f] %v4201
      %4314 = vst [vmem:[%s167 + $0x60] sm:$0x3f] %v4202
      %4315 = vst [vmem:[%s167 + $0x68] sm:$0x3f] %v4203
      %4316 = vst [vmem:[%s167 + $0x70] sm:$0x3f] %v4204
      %4317 = vst.msk [vmem:[%s167 + $0x78] sm:$0x3f] %vm446, %v4205
      %4318 = vst [vmem:[%s167 + $0x80] sm:$0xff] %v4206
      %4319 = vst [vmem:[%s167 + $0x88] sm:$0xff] %v4207
      %4320 = vst [vmem:[%s167 + $0x90] sm:$0xff] %v4208
      %4321 = vst [vmem:[%s167 + $0x98] sm:$0xff] %v4209
      %4322 = vst [vmem:[%s167 + $0xa0] sm:$0xff] %v4210
      %4323 = vst [vmem:[%s167 + $0xa8] sm:$0xff] %v4211
      %4324 = vst [vmem:[%s167 + $0xb0] sm:$0xff] %v4212
      %4325 = vst.msk [vmem:[%s167 + $0xb8] sm:$0xff] %vm177, %v4213
      %4326 = vst [vmem:[%s167 + $0xc0] sm:$0x3f] %v4214
      %4327 = vst [vmem:[%s167 + $0xc8] sm:$0x3f] %v4215
      %4328 = vst [vmem:[%s167 + $0xd0] sm:$0x3f] %v4216
      %4329 = vst [vmem:[%s167 + $0xd8] sm:$0x3f] %v4217
      %4330 = vst [vmem:[%s167 + $0xe0] sm:$0x3f] %v4218
      %4331 = vst [vmem:[%s167 + $0xe8] sm:$0x3f] %v4219
      %4332 = vst [vmem:[%s167 + $0xf0] sm:$0x3f] %v4220
      %4333 = vst.msk [vmem:[%s167 + $0xf8] sm:$0x3f] %vm446, %v4221
      %4334 = vst [vmem:[%s167 + $0x100] sm:$0xff] %v4222
      %4335 = vst [vmem:[%s167 + $0x108] sm:$0xff] %v4223
      %4336 = vst [vmem:[%s167 + $0x110] sm:$0xff] %v4224
      %4337 = vst [vmem:[%s167 + $0x118] sm:$0xff] %v4225
      %4338 = vst [vmem:[%s167 + $0x120] sm:$0xff] %v4226
      %4339 = vst [vmem:[%s167 + $0x128] sm:$0xff] %v4227
      %4340 = vst [vmem:[%s167 + $0x130] sm:$0xff] %v4228
      %4341 = vst.msk [vmem:[%s167 + $0x138] sm:$0xff] %vm177, %v4229
      %4342 = vst [vmem:[%s167 + $0x140] sm:$0x3f] %v4230
      %4343 = vst [vmem:[%s167 + $0x148] sm:$0x3f] %v4231
      %4344 = vst [vmem:[%s167 + $0x150] sm:$0x3f] %v4232
      %4345 = vst [vmem:[%s167 + $0x158] sm:$0x3f] %v4233
      %4346 = vst [vmem:[%s167 + $0x160] sm:$0x3f] %v4234
      %4347 = vst [vmem:[%s167 + $0x168] sm:$0x3f] %v4235
      %4348 = vst [vmem:[%s167 + $0x170] sm:$0x3f] %v4236
      %4349 = vst.msk [vmem:[%s167 + $0x178] sm:$0x3f] %vm446, %v4237
      %4350 = vst [vmem:[%s167 + $0x180] sm:$0xff] %v4238
      %4351 = vst [vmem:[%s167 + $0x188] sm:$0xff] %v4239
      %4352 = vst [vmem:[%s167 + $0x190] sm:$0xff] %v4240
      %4353 = vst [vmem:[%s167 + $0x198] sm:$0xff] %v4241
      %4354 = vst [vmem:[%s167 + $0x1a0] sm:$0xff] %v4242
      %4355 = vst [vmem:[%s167 + $0x1a8] sm:$0xff] %v4243
      %4356 = vst [vmem:[%s167 + $0x1b0] sm:$0xff] %v4244
      %4357 = vst.msk [vmem:[%s167 + $0x1b8] sm:$0xff] %vm177, %v4245
      %4358 = vst [vmem:[%s167 + $0x1c0] sm:$0x3f] %v4246
      %4359 = vst [vmem:[%s167 + $0x1c8] sm:$0x3f] %v4247
      %4360 = vst [vmem:[%s167 + $0x1d0] sm:$0x3f] %v4248
      %4361 = vst [vmem:[%s167 + $0x1d8] sm:$0x3f] %v4249
      %4362 = vst [vmem:[%s167 + $0x1e0] sm:$0x3f] %v4250
      %4363 = vst [vmem:[%s167 + $0x1e8] sm:$0x3f] %v4251
      %4364 = vst [vmem:[%s167 + $0x1f0] sm:$0x3f] %v4252
      %4365 = vst.msk [vmem:[%s167 + $0x1f8] sm:$0x3f] %vm446, %v4253
      %4366 = vst [vmem:[%s167 + $0x200] sm:$0xff] %v4254
      %4367 = vst [vmem:[%s167 + $0x208] sm:$0xff] %v4255
      %4368 = vst [vmem:[%s167 + $0x210] sm:$0xff] %v4256
      %4369 = vst [vmem:[%s167 + $0x218] sm:$0xff] %v4257
      %4370 = vst [vmem:[%s167 + $0x220] sm:$0xff] %v4258
      %4371 = vst [vmem:[%s167 + $0x228] sm:$0xff] %v4259
      %4372 = vst [vmem:[%s167 + $0x230] sm:$0xff] %v4260
      %4373 = vst.msk [vmem:[%s167 + $0x238] sm:$0xff] %vm177, %v4261
      %4374 = vst [vmem:[%s167 + $0x240] sm:$0x3f] %v4262
      %4375 = vst [vmem:[%s167 + $0x248] sm:$0x3f] %v4263
      %4376 = vst [vmem:[%s167 + $0x250] sm:$0x3f] %v4264
      %4377 = vst [vmem:[%s167 + $0x258] sm:$0x3f] %v4265
      %4378 = vst [vmem:[%s167 + $0x260] sm:$0x3f] %v4266
      %4379 = vst [vmem:[%s167 + $0x268] sm:$0x3f] %v4267
      %4380 = vst [vmem:[%s167 + $0x270] sm:$0x3f] %v4268
      %4381 = vst.msk [vmem:[%s167 + $0x278] sm:$0x3f] %vm446, %v4269
      %4382 = vst [vmem:[%s167 + $0x280] sm:$0xff] %v4270
      %4383 = vst [vmem:[%s167 + $0x288] sm:$0xff] %v4271
      %4384 = vst [vmem:[%s167 + $0x290] sm:$0xff] %v4272
      %4385 = vst [vmem:[%s167 + $0x298] sm:$0xff] %v4273
      %4386 = vst [vmem:[%s167 + $0x2a0] sm:$0xff] %v4274
      %4387 = vst [vmem:[%s167 + $0x2a8] sm:$0xff] %v4275
      %4388 = vst [vmem:[%s167 + $0x2b0] sm:$0xff] %v4276
      %4389 = vst.msk [vmem:[%s167 + $0x2b8] sm:$0xff] %vm177, %v4277
      %4390 = vst [vmem:[%s167 + $0x2c0] sm:$0x3f] %v4278
      %4391 = vst [vmem:[%s167 + $0x2c8] sm:$0x3f] %v4279
      %4392 = vst [vmem:[%s167 + $0x2d0] sm:$0x3f] %v4280
      %4393 = vst [vmem:[%s167 + $0x2d8] sm:$0x3f] %v4281
      %4394 = vst [vmem:[%s167 + $0x2e0] sm:$0x3f] %v4282
      %4395 = vst [vmem:[%s167 + $0x2e8] sm:$0x3f] %v4283
      %4396 = vst [vmem:[%s167 + $0x2f0] sm:$0x3f] %v4284
      %4397 = vst.msk [vmem:[%s167 + $0x2f8] sm:$0x3f] %vm446, %v4285
      %4398 = vst [vmem:[%s167 + $0x300] sm:$0xff] %v4286
      %4399 = vst [vmem:[%s167 + $0x308] sm:$0xff] %v4287
      %4400 = vst [vmem:[%s167 + $0x310] sm:$0xff] %v4288
      %4401 = vst [vmem:[%s167 + $0x318] sm:$0xff] %v4289
      %4402 = vst [vmem:[%s167 + $0x320] sm:$0xff] %v4290
      %4403 = vst [vmem:[%s167 + $0x328] sm:$0xff] %v4291
      %4404 = vst [vmem:[%s167 + $0x330] sm:$0xff] %v4292
      %4405 = vst.msk [vmem:[%s167 + $0x338] sm:$0xff] %vm177, %v4293
      %4406 = vst [vmem:[%s167 + $0x340] sm:$0x3f] %v4294
      %4407 = vst [vmem:[%s167 + $0x348] sm:$0x3f] %v4295
      %4408 = vst [vmem:[%s167 + $0x350] sm:$0x3f] %v4296
      %4409 = vst [vmem:[%s167 + $0x358] sm:$0x3f] %v4297
      %4410 = vst [vmem:[%s167 + $0x360] sm:$0x3f] %v4298
      %4411 = vst [vmem:[%s167 + $0x368] sm:$0x3f] %v4299
      %4412 = vst [vmem:[%s167 + $0x370] sm:$0x3f] %v4300
      %4413 = vst.msk [vmem:[%s167 + $0x378] sm:$0x3f] %vm446, %v4301
      %s4414 = smul.u32 7, %s18
      %p4415 = scmp.lt.s32.totalorder %s17, 0
      %s4416 = scalar_select %p4415, %s17, 0
      %p4417 = scmp.lt.s32.totalorder %s4414, 13
      %s4418 = scalar_select %p4417, %s4414, 13
      %s4419 = smul.addr %s4418, 16
      %s4420 = smul.addr %s4416, 224
      %s4421 = sadd.s32 %s4419, %s4420
      %s4422 = smul.addr %s4421, 8
      %s4423 = scalar_lea.vmem %s2, %s4422
      // Predicated region
      $region37: #{tpu_custom_call.1} parent=27 // pred_check
        %p4424 = pneg %p92
      $region38: #{tpu_custom_call.1} parent=27 // pred_check_branch
        %4426 = sbr.rel (%p4424) target = $region40
      $region39: #{tpu_custom_call.1} parent=27 // pred_region
        %s4427 = smul.u32 7, %s18
      $region40: #{tpu_custom_call.1} parent=27 // pred_fallthru
        _
    $region28: #{tpu_custom_call.1} parent=5 // pred_fallthru
      _
    %p4428 = scmp.le.s32.totalorder 2, %s8
    // Predicated region
    $region41: #{tpu_custom_call.1} parent=5 // pred_check
      %p4429 = pneg %p4428
    $region42: #{tpu_custom_call.1} parent=5 // pred_check_branch
      %4431 = sbr.rel (%p4429) target = $region44
    $region43: #{tpu_custom_call.1} parent=5 // pred_region
      %s4432 = ssub.s32 %s8, 2
      // Predicated region
      $region45: #{tpu_custom_call.1} parent=43 // pred_check
        %p4433 = pneg %p98
      $region46: #{tpu_custom_call.1} parent=43 // pred_check_branch
        %4435 = sbr.rel (%p4433) target = $region48
      $region47: #{tpu_custom_call.1} parent=43 // pred_region
        %s4436 = smul.u32 7, %s20
        %p4437 = scmp.lt.s32.totalorder %s19, 0
        %s4438 = scalar_select %p4437, %s19, 0
        %p4439 = scmp.lt.s32.totalorder %s4436, 13
        %s4440 = scalar_select %p4439, %s4436, 13
        %s4441 = smul.addr %s4440, 16
        %s4442 = smul.addr %s4438, 224
        %s4443 = sadd.s32 %s4441, %s4442
        %s4444 = smul.addr %s4443, 8
        %s4445 = scalar_lea.vmem %s2, %s4444
      $region48: #{tpu_custom_call.1} parent=43 // pred_fallthru
        _
    $region44: #{tpu_custom_call.1} parent=5 // pred_fallthru
      _
  $region6: #{tpu_custom_call.1} parent=0 // loop_footer
    %s12 = sadd.s32 1, %s8
  $region7: #{tpu_custom_call.1} parent=0 // loop_footer_branch
    %7 = sbr.rel target = $region3
  $region8: #{tpu_custom_call.1} parent=0 // loop_exit
    _

</llo_original>
